<compile_context>
chip_gen: v7x
topology: tpu7x:2x2x1
jax: 0.10.0
libtpu: 0.0.40
codegen_flags: <defaults>
</compile_context>

<pallas_src>
import math
import functools

import jax
import jax.numpy as jnp
from jax.experimental import pallas as pl
from jax.experimental.pallas import tpu as pltpu


# ----------------------------- helpers ------------------------------------


def _gelu_new(x):
    # GPT-2 "new" gelu: 0.5 * x * (1 + tanh(sqrt(2/pi) * (x + 0.044715 x^3)))
    c = math.sqrt(2.0 / math.pi)
    return 0.5 * x * (1.0 + jnp.tanh(c * (x + 0.044715 * x * x * x)))


# ----------------------------- Pallas kernel ------------------------------


def transformer_block_kernel(
    x_ref,                       # (1, S, D) f32
    mask_ref,                    # (S, S)    f32 additive causal bias (0 / IGNORE)
    ln1w_ref, ln1b_ref,          # (1, D)    f32
    wq_ref, bq_ref,              # (H, D, dh) cd, (H, 1, dh) f32
    wk_ref, bk_ref,
    wv_ref, bv_ref,
    wo_ref, bo_ref,              # (H, dh, D) cd, (1, D) f32
    ln2w_ref, ln2b_ref,          # (1, D)    f32
    win_ref, bin_ref,            # (D, M) cd, (1, M) f32
    wout_ref, bout_ref,          # (M, D) cd, (1, D) f32
    out_ref,                     # (1, S, D)
    *, n_heads, d_head, eps, compute_dtype,
):
    f32 = jnp.float32
    cd = compute_dtype

    x = x_ref[0].astype(f32)                    # (S, D)
    S, D = x.shape
    H, dh = n_heads, d_head

    def layer_norm(r, w, b):
        mean = jnp.mean(r, axis=-1, keepdims=True)
        var = jnp.mean((r - mean) ** 2, axis=-1, keepdims=True)     # unbiased=False
        return (r - mean) * jax.lax.rsqrt(var + eps) * w + b        # rsqrt -> EUP

    # ---- LN1 ----
    ln1 = layer_norm(x, ln1w_ref[0], ln1b_ref[0])

    # ---- Attention: head-batched, single dot_general per stage ----
    ln1_h = jnp.broadcast_to(ln1.astype(cd)[None], (H, S, D))       # (H, S, D)
    q = jnp.einsum("hsd,hde->hse", ln1_h, wq_ref[...],
                   preferred_element_type=f32) + bq_ref[...]        # (H, S, dh) f32
    k = jnp.einsum("hsd,hde->hse", ln1_h, wk_ref[...],
                   preferred_element_type=f32) + bk_ref[...]
    v = jnp.einsum("hsd,hde->hse", ln1_h, wv_ref[...],
                   preferred_element_type=f32) + bv_ref[...]

    scale = 1.0 / math.sqrt(d_head)
    scores = jnp.einsum("hqd,hkd->hqk", q.astype(cd), k.astype(cd),
                        preferred_element_type=f32)                 # (H, S, S) f32
    scores = scores * scale + mask_ref[...][None]                   # additive causal bias

    m = jnp.max(scores, axis=-1, keepdims=True)
    e = jnp.exp(scores - m)
    l = jnp.sum(e, axis=-1, keepdims=True)
    pattern = e * pl.reciprocal(l, approx=True)                     # softmax(-1), EUP recip

    z = jnp.einsum("hqk,hkd->hqd", pattern.astype(cd), v.astype(cd),
                   preferred_element_type=f32)                      # (H, S, dh)

    attn_h = jnp.einsum("hsd,hdm->hsm", z.astype(cd), wo_ref[...],
                        preferred_element_type=f32)                 # (H, S, D)
    attn_out = jnp.sum(attn_h, axis=0) + bo_ref[0]                  # (S, D)
    resid_mid = x + attn_out

    # ---- LN2 + MLP ----
    ln2 = layer_norm(resid_mid, ln2w_ref[0], ln2b_ref[0])
    pre = jnp.dot(ln2.astype(cd), win_ref[...],
                  preferred_element_type=f32) + bin_ref[0]          # (S, M)
    post = _gelu_new(pre)
    mlp_out = jnp.dot(post.astype(cd), wout_ref[...],
                      preferred_element_type=f32) + bout_ref[0]     # (S, D)

    out_ref[0] = (resid_mid + mlp_out).astype(out_ref.dtype)


# ------------------------------ Wrapper -----------------------------------


def transformer_block(x, p, *, n_heads, d_head, eps=1e-5, ignore_value=-1e5,
                      compute_dtype=jnp.bfloat16):
    """x: (batch, posn, d_model) f32. p: PyTorch-shaped params (W_Q: (H, D, dh), ...)."""
    B, S, D = x.shape
    H, dh = n_heads, d_head
    M = p["W_in"].shape[1]
    cd = compute_dtype
    f32 = jnp.float32
    isize = jnp.dtype(cd).itemsize

    # Additive causal bias (0 on/below diagonal, IGNORE strictly above), built once outside.
    mask_bias = jnp.where(jnp.triu(jnp.ones((S, S), bool), k=1),
                          jnp.float32(ignore_value), jnp.float32(0.0))

    kernel = functools.partial(
        transformer_block_kernel,
        n_heads=H, d_head=dh, eps=eps, compute_dtype=cd,
    )

    def full(shape):
        n = len(shape)
        return pl.BlockSpec(shape, lambda b, _n=n: (0,) * _n)

    # ---- rough resource / cost accounting ----
    w_bytes = (3 * H * D * dh + H * dh * D + 2 * D * M) * isize
    small_bytes = (3 * H * dh + 6 * D + M + S * S) * 4
    act_bytes = (4 * S * D + 3 * H * S * D + 3 * H * S * dh + 2 * H * S * S + 2 * S * M) * 4
    vmem_limit = int(min(64 * 2**20, max(32 * 2**20, 2 * (w_bytes + small_bytes + act_bytes))))

    flops = (6 * B * S * D * H * dh          # QKV projections
             + 4 * B * H * S * S * dh        # scores + pattern@V
             + 2 * B * S * H * dh * D        # output projection
             + 4 * B * S * D * M)            # MLP in + out
    transcendentals = B * H * S * S + B * S * M + 2 * B * S + B * H * S
    bytes_accessed = 2 * B * S * D * 4 + w_bytes + small_bytes
    cost = pl.CostEstimate(flops=int(flops), transcendentals=int(transcendentals),
                           bytes_accessed=int(bytes_accessed))

    args = (
        x,
        mask_bias,
        p["ln1_w"].reshape(1, D).astype(f32), p["ln1_b"].reshape(1, D).astype(f32),
        p["W_Q"].astype(cd), p["b_Q"].reshape(H, 1, dh).astype(f32),
        p["W_K"].astype(cd), p["b_K"].reshape(H, 1, dh).astype(f32),
        p["W_V"].astype(cd), p["b_V"].reshape(H, 1, dh).astype(f32),
        p["W_O"].astype(cd), p["b_O"].reshape(1, D).astype(f32),
        p["ln2_w"].reshape(1, D).astype(f32), p["ln2_b"].reshape(1, D).astype(f32),
        p["W_in"].astype(cd), p["b_in"].reshape(1, M).astype(f32),
        p["W_out"].astype(cd), p["b_out"].reshape(1, D).astype(f32),
    )

    return pl.pallas_call(
        kernel,
        out_shape=jax.ShapeDtypeStruct((B, S, D), x.dtype),
        grid_spec=pltpu.PrefetchScalarGridSpec(
            num_scalar_prefetch=0,
            grid=(B,),
            in_specs=[
                pl.BlockSpec((1, S, D), lambda b: (b, 0, 0)),   # x
                full((S, S)),                                   # causal bias
                full((1, D)), full((1, D)),                     # ln1 w, b
                full((H, D, dh)), full((H, 1, dh)),             # W_Q, b_Q
                full((H, D, dh)), full((H, 1, dh)),             # W_K, b_K
                full((H, D, dh)), full((H, 1, dh)),             # W_V, b_V
                full((H, dh, D)), full((1, D)),                 # W_O, b_O
                full((1, D)), full((1, D)),                     # ln2 w, b
                full((D, M)), full((1, M)),                     # W_in, b_in
                full((M, D)), full((1, D)),                     # W_out, b_out
            ],
            out_specs=pl.BlockSpec((1, S, D), lambda b: (b, 0, 0)),
        ),
        compiler_params=pltpu.CompilerParams(
            dimension_semantics=("parallel",),
            vmem_limit_bytes=vmem_limit,
        ),
        cost_estimate=cost,
    )(*args)


# --------------------------- Pure-JAX reference ----------------------------


def reference_block(x, p3, *, n_heads, d_head, eps=1e-5):
    """p3 holds the PyTorch-shaped params."""
    def ln(r, w, b):
        mean = r.mean(-1, keepdims=True)
        var = ((r - mean) ** 2).mean(-1, keepdims=True)
        return (r - mean) / jnp.sqrt(var + eps) * w + b

    ln1 = ln(x, p3["ln1_w"], p3["ln1_b"])
    q = jnp.einsum("bpd,hde->bphe", ln1, p3["W_Q"]) + p3["b_Q"]
    k = jnp.einsum("bpd,hde->bphe", ln1, p3["W_K"]) + p3["b_K"]
    v = jnp.einsum("bpd,hde->bphe", ln1, p3["W_V"]) + p3["b_V"]
    scores = jnp.einsum("bqhe,bkhe->bhqk", q, k) / math.sqrt(d_head)
    S = x.shape[1]
    mask = jnp.triu(jnp.ones((S, S), bool), k=1)
    scores = jnp.where(mask, -1e5, scores)
    pattern = jax.nn.softmax(scores, axis=-1)
    z = jnp.einsum("bkhe,bhqk->bqhe", v, pattern)
    attn_out = jnp.einsum("bqhe,hed->bqd", z, p3["W_O"]) + p3["b_O"]
    resid_mid = x + attn_out
    ln2 = ln(resid_mid, p3["ln2_w"], p3["ln2_b"])
    pre = jnp.einsum("bpd,dm->bpm", ln2, p3["W_in"]) + p3["b_in"]
    post = _gelu_new(pre)
    mlp_out = jnp.einsum("bpm,md->bpd", post, p3["W_out"]) + p3["b_out"]
    return resid_mid + mlp_out


# --------------------------------- Main ------------------------------------


if __name__ == "__main__":
    # Small config consistent with the module (d_model = n_heads * d_head, d_mlp = 4*d_model).
    # d_model / d_mlp are multiples of 128 so every kernel output is lane-dense.
    B, S = 2, 8
    d_model, n_heads, d_head, d_mlp = 128, 4, 32, 512
    init_range = 0.02
    eps = 1e-5

    key = jax.random.PRNGKey(0)
    ks = jax.random.split(key, 8)

    # PyTorch-shaped parameters (deterministic init mimicking nn.init.normal_(std=0.02))
    p3 = {
        "ln1_w": jnp.ones((d_model,), jnp.float32),
        "ln1_b": jnp.zeros((d_model,), jnp.float32),
        "W_Q": init_range * jax.random.normal(ks[0], (n_heads, d_model, d_head), jnp.float32),
        "W_K": init_range * jax.random.normal(ks[1], (n_heads, d_model, d_head), jnp.float32),
        "W_V": init_range * jax.random.normal(ks[2], (n_heads, d_model, d_head), jnp.float32),
        "W_O": init_range * jax.random.normal(ks[3], (n_heads, d_head, d_model), jnp.float32),
        "b_Q": jnp.zeros((n_heads, d_head), jnp.float32),
        "b_K": jnp.zeros((n_heads, d_head), jnp.float32),
        "b_V": jnp.zeros((n_heads, d_head), jnp.float32),
        "b_O": jnp.zeros((d_model,), jnp.float32),
        "ln2_w": jnp.ones((d_model,), jnp.float32),
        "ln2_b": jnp.zeros((d_model,), jnp.float32),
        "W_in": init_range * jax.random.normal(ks[4], (d_model, d_mlp), jnp.float32),
        "W_out": init_range * jax.random.normal(ks[5], (d_mlp, d_model), jnp.float32),
        "b_in": jnp.zeros((d_mlp,), jnp.float32),
        "b_out": jnp.zeros((d_model,), jnp.float32),
    }

    x = jax.random.normal(ks[6], (B, S, d_model), jnp.float32)

    ref = reference_block(x, p3, n_heads=n_heads, d_head=d_head, eps=eps)

    # Full-precision compute path (tight check of semantics).
    out_f32 = transformer_block(x, p3, n_heads=n_heads, d_head=d_head, eps=eps,
                                compute_dtype=jnp.float32)
    out_f32 = jax.block_until_ready(out_f32)
    assert out_f32.shape == (B, S, d_model)
    assert jnp.allclose(out_f32, ref, rtol=2e-3, atol=2e-3), "f32 kernel mismatch vs reference"

    # bf16 MXU-input path (default, faster; looser tolerance).
    out_bf16 = transformer_block(x, p3, n_heads=n_heads, d_head=d_head, eps=eps,
                                 compute_dtype=jnp.bfloat16)
    out_bf16 = jax.block_until_ready(out_bf16)
    assert out_bf16.shape == (B, S, d_model)
    assert jnp.allclose(out_bf16, ref, rtol=3e-2, atol=3e-2), "bf16 kernel mismatch vs reference"

    print("KERNEL_OK")
</pallas_src>

<mosaic_0001>
module attributes {stable_mosaic.version = 11 : i64} {
  func.func @transformer_block_kernel(%arg0: i32, %arg1: memref<1x8x128xf32, #tpu.memory_space<vmem>>, %arg2: memref<8x8xf32, #tpu.memory_space<vmem>>, %arg3: memref<1x128xf32, #tpu.memory_space<vmem>>, %arg4: memref<1x128xf32, #tpu.memory_space<vmem>>, %arg5: memref<4x128x32xf32, #tpu.memory_space<vmem>>, %arg6: memref<4x1x32xf32, #tpu.memory_space<vmem>>, %arg7: memref<4x128x32xf32, #tpu.memory_space<vmem>>, %arg8: memref<4x1x32xf32, #tpu.memory_space<vmem>>, %arg9: memref<4x128x32xf32, #tpu.memory_space<vmem>>, %arg10: memref<4x1x32xf32, #tpu.memory_space<vmem>>, %arg11: memref<4x32x128xf32, #tpu.memory_space<vmem>>, %arg12: memref<1x128xf32, #tpu.memory_space<vmem>>, %arg13: memref<1x128xf32, #tpu.memory_space<vmem>>, %arg14: memref<1x128xf32, #tpu.memory_space<vmem>>, %arg15: memref<128x512xf32, #tpu.memory_space<vmem>>, %arg16: memref<1x512xf32, #tpu.memory_space<vmem>>, %arg17: memref<512x128xf32, #tpu.memory_space<vmem>>, %arg18: memref<1x128xf32, #tpu.memory_space<vmem>>, %arg19: memref<1x8x128xf32, #tpu.memory_space<vmem>>) attributes {dimension_semantics = [#tpu.dimension_semantics<parallel>], iteration_bounds = array<i64: 2>, scalar_prefetch = 0 : i64, scratch_operands = 0 : i64, tpu.core_type = #tpu.core_type<tc>, window_params = [{transform_indices = @transform_0, window_bounds = array<i64: 1, 8, 128>}, {pipeline_mode = #tpu.pipeline_mode<synchronous>, transform_indices = @transform_1, window_bounds = array<i64: 8, 8>}, {pipeline_mode = #tpu.pipeline_mode<synchronous>, transform_indices = @transform_2, window_bounds = array<i64: 1, 128>}, {pipeline_mode = #tpu.pipeline_mode<synchronous>, transform_indices = @transform_3, window_bounds = array<i64: 1, 128>}, {pipeline_mode = #tpu.pipeline_mode<synchronous>, transform_indices = @transform_4, window_bounds = array<i64: 4, 128, 32>}, {pipeline_mode = #tpu.pipeline_mode<synchronous>, transform_indices = @transform_5, window_bounds = array<i64: 4, 1, 32>}, {pipeline_mode = #tpu.pipeline_mode<synchronous>, transform_indices = @transform_6, window_bounds = array<i64: 4, 128, 32>}, {pipeline_mode = #tpu.pipeline_mode<synchronous>, transform_indices = @transform_7, window_bounds = array<i64: 4, 1, 32>}, {pipeline_mode = #tpu.pipeline_mode<synchronous>, transform_indices = @transform_8, window_bounds = array<i64: 4, 128, 32>}, {pipeline_mode = #tpu.pipeline_mode<synchronous>, transform_indices = @transform_9, window_bounds = array<i64: 4, 1, 32>}, {pipeline_mode = #tpu.pipeline_mode<synchronous>, transform_indices = @transform_10, window_bounds = array<i64: 4, 32, 128>}, {pipeline_mode = #tpu.pipeline_mode<synchronous>, transform_indices = @transform_11, window_bounds = array<i64: 1, 128>}, {pipeline_mode = #tpu.pipeline_mode<synchronous>, transform_indices = @transform_12, window_bounds = array<i64: 1, 128>}, {pipeline_mode = #tpu.pipeline_mode<synchronous>, transform_indices = @transform_13, window_bounds = array<i64: 1, 128>}, {pipeline_mode = #tpu.pipeline_mode<synchronous>, transform_indices = @transform_14, window_bounds = array<i64: 128, 512>}, {pipeline_mode = #tpu.pipeline_mode<synchronous>, transform_indices = @transform_15, window_bounds = array<i64: 1, 512>}, {pipeline_mode = #tpu.pipeline_mode<synchronous>, transform_indices = @transform_16, window_bounds = array<i64: 512, 128>}, {pipeline_mode = #tpu.pipeline_mode<synchronous>, transform_indices = @transform_17, window_bounds = array<i64: 1, 128>}, {transform_indices = @transform_18, window_bounds = array<i64: 1, 8, 128>}]} {
    %c0 = arith.constant 0 : index
    %c0_0 = arith.constant 0 : index
    %c0_1 = arith.constant 0 : index
    %0 = vector.load %arg1[%c0, %c0_0, %c0_1] : memref<1x8x128xf32, #tpu.memory_space<vmem>>, vector<1x8x128xf32>
    %1 = vector.shape_cast %0 : vector<1x8x128xf32> to vector<8x128xf32>
    %c0_2 = arith.constant 0 : index
    %c0_3 = arith.constant 0 : index
    %2 = vector.load %arg3[%c0_2, %c0_3] : memref<1x128xf32, #tpu.memory_space<vmem>>, vector<1x128xf32>
    %3 = vector.shape_cast %2 : vector<1x128xf32> to vector<128xf32>
    %c0_4 = arith.constant 0 : index
    %c0_5 = arith.constant 0 : index
    %4 = vector.load %arg4[%c0_4, %c0_5] : memref<1x128xf32, #tpu.memory_space<vmem>>, vector<1x128xf32>
    %5 = vector.shape_cast %4 : vector<1x128xf32> to vector<128xf32>
    %cst = arith.constant dense<0.000000e+00> : vector<8xf32>
    %6 = vector.multi_reduction <add>, %1, %cst [1] : vector<8x128xf32> to vector<8xf32>
    %7 = vector.shape_cast %6 : vector<8xf32> to vector<8x1xf32>
    %cst_6 = arith.constant 1.280000e+02 : f32
    %8 = vector.broadcast %cst_6 : f32 to vector<8x1xf32>
    %9 = arith.divf %7, %8 : vector<8x1xf32>
    %10 = vector.broadcast %9 : vector<8x1xf32> to vector<8x128xf32>
    %11 = arith.subf %1, %10 : vector<8x128xf32>
    %12 = arith.mulf %11, %11 : vector<8x128xf32>
    %cst_7 = arith.constant dense<0.000000e+00> : vector<8xf32>
    %13 = vector.multi_reduction <add>, %12, %cst_7 [1] : vector<8x128xf32> to vector<8xf32>
    %14 = vector.shape_cast %13 : vector<8xf32> to vector<8x1xf32>
    %cst_8 = arith.constant 1.280000e+02 : f32
    %15 = vector.broadcast %cst_8 : f32 to vector<8x1xf32>
    %16 = arith.divf %14, %15 : vector<8x1xf32>
    %17 = vector.broadcast %9 : vector<8x1xf32> to vector<8x128xf32>
    %18 = arith.subf %1, %17 : vector<8x128xf32>
    %cst_9 = arith.constant 9.99999974E-6 : f32
    %19 = vector.broadcast %cst_9 : f32 to vector<8x1xf32>
    %20 = arith.addf %16, %19 : vector<8x1xf32>
    %21 = math.rsqrt %20 : vector<8x1xf32>
    %22 = vector.broadcast %21 : vector<8x1xf32> to vector<8x128xf32>
    %23 = arith.mulf %18, %22 : vector<8x128xf32>
    %24 = vector.shape_cast %3 : vector<128xf32> to vector<1x128xf32>
    %25 = vector.broadcast %24 : vector<1x128xf32> to vector<8x128xf32>
    %26 = arith.mulf %23, %25 : vector<8x128xf32>
    %27 = vector.shape_cast %5 : vector<128xf32> to vector<1x128xf32>
    %28 = vector.broadcast %27 : vector<1x128xf32> to vector<8x128xf32>
    %29 = arith.addf %26, %28 : vector<8x128xf32>
    %30 = vector.shape_cast %29 : vector<8x128xf32> to vector<1x8x128xf32>
    %31 = vector.shape_cast %30 : vector<1x8x128xf32> to vector<1x8x128xf32>
    %32 = vector.broadcast %31 : vector<1x8x128xf32> to vector<4x8x128xf32>
    %c0_10 = arith.constant 0 : index
    %c0_11 = arith.constant 0 : index
    %c0_12 = arith.constant 0 : index
    %33 = vector.load %arg5[%c0_10, %c0_11, %c0_12] : memref<4x128x32xf32, #tpu.memory_space<vmem>>, vector<4x128x32xf32>
    "tpu.trace_start"() <{level = 10 : i32, message = "hsd,hde->hse"}> : () -> ()
    %cst_13 = arith.constant dense<0.000000e+00> : vector<4x8x32xf32>
    %34 = tpu.matmul %32, %33, %cst_13 {dimension_numbers = #tpu.dot_dimension_numbers<[2], [1], [1], [2], [0, 0, 0, 1, 1, 2], [0], [0]>} : vector<4x8x128xf32>, vector<4x128x32xf32>, vector<4x8x32xf32> -> vector<4x8x32xf32>
    "tpu.trace_stop"() : () -> ()
    %c0_14 = arith.constant 0 : index
    %c0_15 = arith.constant 0 : index
    %c0_16 = arith.constant 0 : index
    %35 = vector.load %arg6[%c0_14, %c0_15, %c0_16] : memref<4x1x32xf32, #tpu.memory_space<vmem>>, vector<4x1x32xf32>
    %36 = vector.broadcast %35 : vector<4x1x32xf32> to vector<4x8x32xf32>
    %37 = arith.addf %34, %36 : vector<4x8x32xf32>
    %c0_17 = arith.constant 0 : index
    %c0_18 = arith.constant 0 : index
    %c0_19 = arith.constant 0 : index
    %38 = vector.load %arg7[%c0_17, %c0_18, %c0_19] : memref<4x128x32xf32, #tpu.memory_space<vmem>>, vector<4x128x32xf32>
    "tpu.trace_start"() <{level = 10 : i32, message = "hsd,hde->hse"}> : () -> ()
    %cst_20 = arith.constant dense<0.000000e+00> : vector<4x8x32xf32>
    %39 = tpu.matmul %32, %38, %cst_20 {dimension_numbers = #tpu.dot_dimension_numbers<[2], [1], [1], [2], [0, 0, 0, 1, 1, 2], [0], [0]>} : vector<4x8x128xf32>, vector<4x128x32xf32>, vector<4x8x32xf32> -> vector<4x8x32xf32>
    "tpu.trace_stop"() : () -> ()
    %c0_21 = arith.constant 0 : index
    %c0_22 = arith.constant 0 : index
    %c0_23 = arith.constant 0 : index
    %40 = vector.load %arg8[%c0_21, %c0_22, %c0_23] : memref<4x1x32xf32, #tpu.memory_space<vmem>>, vector<4x1x32xf32>
    %41 = vector.broadcast %40 : vector<4x1x32xf32> to vector<4x8x32xf32>
    %42 = arith.addf %39, %41 : vector<4x8x32xf32>
    %c0_24 = arith.constant 0 : index
    %c0_25 = arith.constant 0 : index
    %c0_26 = arith.constant 0 : index
    %43 = vector.load %arg9[%c0_24, %c0_25, %c0_26] : memref<4x128x32xf32, #tpu.memory_space<vmem>>, vector<4x128x32xf32>
    "tpu.trace_start"() <{level = 10 : i32, message = "hsd,hde->hse"}> : () -> ()
    %cst_27 = arith.constant dense<0.000000e+00> : vector<4x8x32xf32>
    %44 = tpu.matmul %32, %43, %cst_27 {dimension_numbers = #tpu.dot_dimension_numbers<[2], [1], [1], [2], [0, 0, 0, 1, 1, 2], [0], [0]>} : vector<4x8x128xf32>, vector<4x128x32xf32>, vector<4x8x32xf32> -> vector<4x8x32xf32>
    "tpu.trace_stop"() : () -> ()
    %c0_28 = arith.constant 0 : index
    %c0_29 = arith.constant 0 : index
    %c0_30 = arith.constant 0 : index
    %45 = vector.load %arg10[%c0_28, %c0_29, %c0_30] : memref<4x1x32xf32, #tpu.memory_space<vmem>>, vector<4x1x32xf32>
    %46 = vector.broadcast %45 : vector<4x1x32xf32> to vector<4x8x32xf32>
    %47 = arith.addf %44, %46 : vector<4x8x32xf32>
    "tpu.trace_start"() <{level = 10 : i32, message = "hqd,hkd->hqk"}> : () -> ()
    %cst_31 = arith.constant dense<0.000000e+00> : vector<4x8x8xf32>
    %48 = tpu.matmul %37, %42, %cst_31 {dimension_numbers = #tpu.dot_dimension_numbers<[2], [2], [1], [1], [0, 0, 0, 1, 1, 1], [0], [0]>} : vector<4x8x32xf32>, vector<4x8x32xf32>, vector<4x8x8xf32> -> vector<4x8x8xf32>
    "tpu.trace_stop"() : () -> ()
    %cst_32 = arith.constant 0.176776692 : f32
    %49 = vector.broadcast %cst_32 : f32 to vector<4x8x8xf32>
    %50 = arith.mulf %48, %49 : vector<4x8x8xf32>
    %c0_33 = arith.constant 0 : index
    %c0_34 = arith.constant 0 : index
    %51 = vector.load %arg2[%c0_33, %c0_34] : memref<8x8xf32, #tpu.memory_space<vmem>>, vector<8x8xf32>
    %52 = vector.shape_cast %51 : vector<8x8xf32> to vector<1x8x8xf32>
    %53 = vector.broadcast %52 : vector<1x8x8xf32> to vector<4x8x8xf32>
    %54 = arith.addf %50, %53 : vector<4x8x8xf32>
    %cst_35 = arith.constant dense<0xFF800000> : vector<4x8xf32>
    %55 = vector.multi_reduction <maximumf>, %54, %cst_35 [2] : vector<4x8x8xf32> to vector<4x8xf32>
    %56 = vector.shape_cast %55 : vector<4x8xf32> to vector<4x8x1xf32>
    %57 = vector.broadcast %56 : vector<4x8x1xf32> to vector<4x8x8xf32>
    %58 = arith.subf %54, %57 : vector<4x8x8xf32>
    %59 = math.exp %58 : vector<4x8x8xf32>
    %cst_36 = arith.constant dense<0.000000e+00> : vector<4x8xf32>
    %60 = vector.multi_reduction <add>, %59, %cst_36 [2] : vector<4x8x8xf32> to vector<4x8xf32>
    %61 = vector.shape_cast %60 : vector<4x8xf32> to vector<4x8x1xf32>
    %62 = tpu.reciprocal %61 {approx = true} : vector<4x8x1xf32> -> vector<4x8x1xf32>
    %63 = vector.broadcast %62 : vector<4x8x1xf32> to vector<4x8x8xf32>
    %64 = arith.mulf %59, %63 : vector<4x8x8xf32>
    "tpu.trace_start"() <{level = 10 : i32, message = "hqk,hkd->hqd"}> : () -> ()
    %cst_37 = arith.constant dense<0.000000e+00> : vector<4x8x32xf32>
    %65 = tpu.matmul %64, %47, %cst_37 {dimension_numbers = #tpu.dot_dimension_numbers<[2], [1], [1], [2], [0, 0, 0, 1, 1, 2], [0], [0]>} : vector<4x8x8xf32>, vector<4x8x32xf32>, vector<4x8x32xf32> -> vector<4x8x32xf32>
    "tpu.trace_stop"() : () -> ()
    %c0_38 = arith.constant 0 : index
    %c0_39 = arith.constant 0 : index
    %c0_40 = arith.constant 0 : index
    %66 = vector.load %arg11[%c0_38, %c0_39, %c0_40] : memref<4x32x128xf32, #tpu.memory_space<vmem>>, vector<4x32x128xf32>
    "tpu.trace_start"() <{level = 10 : i32, message = "hsd,hdm->hsm"}> : () -> ()
    %cst_41 = arith.constant dense<0.000000e+00> : vector<4x8x128xf32>
    %67 = tpu.matmul %65, %66, %cst_41 {dimension_numbers = #tpu.dot_dimension_numbers<[2], [1], [1], [2], [0, 0, 0, 1, 1, 2], [0], [0]>} : vector<4x8x32xf32>, vector<4x32x128xf32>, vector<4x8x128xf32> -> vector<4x8x128xf32>
    "tpu.trace_stop"() : () -> ()
    %cst_42 = arith.constant dense<0.000000e+00> : vector<8x128xf32>
    %68 = vector.multi_reduction <add>, %67, %cst_42 [0] : vector<4x8x128xf32> to vector<8x128xf32>
    %c0_43 = arith.constant 0 : index
    %c0_44 = arith.constant 0 : index
    %69 = vector.load %arg12[%c0_43, %c0_44] : memref<1x128xf32, #tpu.memory_space<vmem>>, vector<1x128xf32>
    %70 = vector.shape_cast %69 : vector<1x128xf32> to vector<128xf32>
    %71 = vector.shape_cast %70 : vector<128xf32> to vector<1x128xf32>
    %72 = vector.broadcast %71 : vector<1x128xf32> to vector<8x128xf32>
    %73 = arith.addf %68, %72 : vector<8x128xf32>
    %74 = arith.addf %1, %73 : vector<8x128xf32>
    %c0_45 = arith.constant 0 : index
    %c0_46 = arith.constant 0 : index
    %75 = vector.load %arg13[%c0_45, %c0_46] : memref<1x128xf32, #tpu.memory_space<vmem>>, vector<1x128xf32>
    %76 = vector.shape_cast %75 : vector<1x128xf32> to vector<128xf32>
    %c0_47 = arith.constant 0 : index
    %c0_48 = arith.constant 0 : index
    %77 = vector.load %arg14[%c0_47, %c0_48] : memref<1x128xf32, #tpu.memory_space<vmem>>, vector<1x128xf32>
    %78 = vector.shape_cast %77 : vector<1x128xf32> to vector<128xf32>
    %cst_49 = arith.constant dense<0.000000e+00> : vector<8xf32>
    %79 = vector.multi_reduction <add>, %74, %cst_49 [1] : vector<8x128xf32> to vector<8xf32>
    %80 = vector.shape_cast %79 : vector<8xf32> to vector<8x1xf32>
    %cst_50 = arith.constant 1.280000e+02 : f32
    %81 = vector.broadcast %cst_50 : f32 to vector<8x1xf32>
    %82 = arith.divf %80, %81 : vector<8x1xf32>
    %83 = vector.broadcast %82 : vector<8x1xf32> to vector<8x128xf32>
    %84 = arith.subf %74, %83 : vector<8x128xf32>
    %85 = arith.mulf %84, %84 : vector<8x128xf32>
    %cst_51 = arith.constant dense<0.000000e+00> : vector<8xf32>
    %86 = vector.multi_reduction <add>, %85, %cst_51 [1] : vector<8x128xf32> to vector<8xf32>
    %87 = vector.shape_cast %86 : vector<8xf32> to vector<8x1xf32>
    %cst_52 = arith.constant 1.280000e+02 : f32
    %88 = vector.broadcast %cst_52 : f32 to vector<8x1xf32>
    %89 = arith.divf %87, %88 : vector<8x1xf32>
    %90 = vector.broadcast %82 : vector<8x1xf32> to vector<8x128xf32>
    %91 = arith.subf %74, %90 : vector<8x128xf32>
    %cst_53 = arith.constant 9.99999974E-6 : f32
    %92 = vector.broadcast %cst_53 : f32 to vector<8x1xf32>
    %93 = arith.addf %89, %92 : vector<8x1xf32>
    %94 = math.rsqrt %93 : vector<8x1xf32>
    %95 = vector.broadcast %94 : vector<8x1xf32> to vector<8x128xf32>
    %96 = arith.mulf %91, %95 : vector<8x128xf32>
    %97 = vector.shape_cast %76 : vector<128xf32> to vector<1x128xf32>
    %98 = vector.broadcast %97 : vector<1x128xf32> to vector<8x128xf32>
    %99 = arith.mulf %96, %98 : vector<8x128xf32>
    %100 = vector.shape_cast %78 : vector<128xf32> to vector<1x128xf32>
    %101 = vector.broadcast %100 : vector<1x128xf32> to vector<8x128xf32>
    %102 = arith.addf %99, %101 : vector<8x128xf32>
    %c0_54 = arith.constant 0 : index
    %c0_55 = arith.constant 0 : index
    %103 = vector.load %arg15[%c0_54, %c0_55] : memref<128x512xf32, #tpu.memory_space<vmem>>, vector<128x512xf32>
    %cst_56 = arith.constant dense<0.000000e+00> : vector<8x512xf32>
    %104 = tpu.matmul %102, %103, %cst_56 {dimension_numbers = #tpu.dot_dimension_numbers<[1], [0], [0], [1], [0, 0, 1, 1], [], []>} : vector<8x128xf32>, vector<128x512xf32>, vector<8x512xf32> -> vector<8x512xf32>
    %c0_57 = arith.constant 0 : index
    %c0_58 = arith.constant 0 : index
    %105 = vector.load %arg16[%c0_57, %c0_58] : memref<1x512xf32, #tpu.memory_space<vmem>>, vector<1x512xf32>
    %106 = vector.shape_cast %105 : vector<1x512xf32> to vector<512xf32>
    %107 = vector.shape_cast %106 : vector<512xf32> to vector<1x512xf32>
    %108 = vector.broadcast %107 : vector<1x512xf32> to vector<8x512xf32>
    %109 = arith.addf %104, %108 : vector<8x512xf32>
    %cst_59 = arith.constant 5.000000e-01 : f32
    %110 = vector.broadcast %cst_59 : f32 to vector<8x512xf32>
    %111 = arith.mulf %110, %109 : vector<8x512xf32>
    %cst_60 = arith.constant 4.471500e-02 : f32
    %112 = vector.broadcast %cst_60 : f32 to vector<8x512xf32>
    %113 = arith.mulf %112, %109 : vector<8x512xf32>
    %114 = arith.mulf %113, %109 : vector<8x512xf32>
    %115 = arith.mulf %114, %109 : vector<8x512xf32>
    %116 = arith.addf %109, %115 : vector<8x512xf32>
    %cst_61 = arith.constant 0.797884583 : f32
    %117 = vector.broadcast %cst_61 : f32 to vector<8x512xf32>
    %118 = arith.mulf %117, %116 : vector<8x512xf32>
    %119 = math.tanh %118 : vector<8x512xf32>
    %cst_62 = arith.constant 1.000000e+00 : f32
    %120 = vector.broadcast %cst_62 : f32 to vector<8x512xf32>
    %121 = arith.addf %120, %119 : vector<8x512xf32>
    %122 = arith.mulf %111, %121 : vector<8x512xf32>
    %c0_63 = arith.constant 0 : index
    %c0_64 = arith.constant 0 : index
    %123 = vector.load %arg17[%c0_63, %c0_64] : memref<512x128xf32, #tpu.memory_space<vmem>>, vector<512x128xf32>
    %cst_65 = arith.constant dense<0.000000e+00> : vector<8x128xf32>
    %124 = tpu.matmul %122, %123, %cst_65 {dimension_numbers = #tpu.dot_dimension_numbers<[1], [0], [0], [1], [0, 0, 1, 1], [], []>} : vector<8x512xf32>, vector<512x128xf32>, vector<8x128xf32> -> vector<8x128xf32>
    %c0_66 = arith.constant 0 : index
    %c0_67 = arith.constant 0 : index
    %125 = vector.load %arg18[%c0_66, %c0_67] : memref<1x128xf32, #tpu.memory_space<vmem>>, vector<1x128xf32>
    %126 = vector.shape_cast %125 : vector<1x128xf32> to vector<128xf32>
    %127 = vector.shape_cast %126 : vector<128xf32> to vector<1x128xf32>
    %128 = vector.broadcast %127 : vector<1x128xf32> to vector<8x128xf32>
    %129 = arith.addf %124, %128 : vector<8x128xf32>
    %130 = arith.addf %74, %129 : vector<8x128xf32>
    %c0_68 = arith.constant 0 : index
    %c0_69 = arith.constant 0 : index
    %c0_70 = arith.constant 0 : index
    %131 = vector.load %arg19[%c0_68, %c0_69, %c0_70] : memref<1x8x128xf32, #tpu.memory_space<vmem>>, vector<1x8x128xf32>
    %132 = vector.shape_cast %131 : vector<1x8x128xf32> to vector<8x128xf32>
    %133 = vector.shape_cast %130 : vector<8x128xf32> to vector<1x8x128xf32>
    tpu.vector_store %arg19[%c0_68, %c0_69, %c0_70], %133 {strides = array<i32>} : memref<1x8x128xf32, #tpu.memory_space<vmem>>, vector<1x8x128xf32>,
    return
  }
  func.func @transform_0(%arg0: i32) -> (i32, i32, i32) {
    %c0_i32 = arith.constant 0 : i32
    %c0_i32_0 = arith.constant 0 : i32
    %c0_i32_1 = arith.constant 0 : i32
    return %arg0, %c0_i32, %c0_i32_0 : i32, i32, i32
  }
  func.func @transform_1(%arg0: i32) -> (i32, i32) {
    %c0_i32 = arith.constant 0 : i32
    %c0_i32_0 = arith.constant 0 : i32
    %c0_i32_1 = arith.constant 0 : i32
    return %c0_i32, %c0_i32_0 : i32, i32
  }
  func.func @transform_2(%arg0: i32) -> (i32, i32) {
    %c0_i32 = arith.constant 0 : i32
    %c0_i32_0 = arith.constant 0 : i32
    %c0_i32_1 = arith.constant 0 : i32
    return %c0_i32, %c0_i32_0 : i32, i32
  }
  func.func @transform_3(%arg0: i32) -> (i32, i32) {
    %c0_i32 = arith.constant 0 : i32
    %c0_i32_0 = arith.constant 0 : i32
    %c0_i32_1 = arith.constant 0 : i32
    return %c0_i32, %c0_i32_0 : i32, i32
  }
  func.func @transform_4(%arg0: i32) -> (i32, i32, i32) {
    %c0_i32 = arith.constant 0 : i32
    %c0_i32_0 = arith.constant 0 : i32
    %c0_i32_1 = arith.constant 0 : i32
    %c0_i32_2 = arith.constant 0 : i32
    return %c0_i32, %c0_i32_0, %c0_i32_1 : i32, i32, i32
  }
  func.func @transform_5(%arg0: i32) -> (i32, i32, i32) {
    %c0_i32 = arith.constant 0 : i32
    %c0_i32_0 = arith.constant 0 : i32
    %c0_i32_1 = arith.constant 0 : i32
    %c0_i32_2 = arith.constant 0 : i32
    return %c0_i32, %c0_i32_0, %c0_i32_1 : i32, i32, i32
  }
  func.func @transform_6(%arg0: i32) -> (i32, i32, i32) {
    %c0_i32 = arith.constant 0 : i32
    %c0_i32_0 = arith.constant 0 : i32
    %c0_i32_1 = arith.constant 0 : i32
    %c0_i32_2 = arith.constant 0 : i32
    return %c0_i32, %c0_i32_0, %c0_i32_1 : i32, i32, i32
  }
  func.func @transform_7(%arg0: i32) -> (i32, i32, i32) {
    %c0_i32 = arith.constant 0 : i32
    %c0_i32_0 = arith.constant 0 : i32
    %c0_i32_1 = arith.constant 0 : i32
    %c0_i32_2 = arith.constant 0 : i32
    return %c0_i32, %c0_i32_0, %c0_i32_1 : i32, i32, i32
  }
  func.func @transform_8(%arg0: i32) -> (i32, i32, i32) {
    %c0_i32 = arith.constant 0 : i32
    %c0_i32_0 = arith.constant 0 : i32
    %c0_i32_1 = arith.constant 0 : i32
    %c0_i32_2 = arith.constant 0 : i32
    return %c0_i32, %c0_i32_0, %c0_i32_1 : i32, i32, i32
  }
  func.func @transform_9(%arg0: i32) -> (i32, i32, i32) {
    %c0_i32 = arith.constant 0 : i32
    %c0_i32_0 = arith.constant 0 : i32
    %c0_i32_1 = arith.constant 0 : i32
    %c0_i32_2 = arith.constant 0 : i32
    return %c0_i32, %c0_i32_0, %c0_i32_1 : i32, i32, i32
  }
  func.func @transform_10(%arg0: i32) -> (i32, i32, i32) {
    %c0_i32 = arith.constant 0 : i32
    %c0_i32_0 = arith.constant 0 : i32
    %c0_i32_1 = arith.constant 0 : i32
    %c0_i32_2 = arith.constant 0 : i32
    return %c0_i32, %c0_i32_0, %c0_i32_1 : i32, i32, i32
  }
  func.func @transform_11(%arg0: i32) -> (i32, i32) {
    %c0_i32 = arith.constant 0 : i32
    %c0_i32_0 = arith.constant 0 : i32
    %c0_i32_1 = arith.constant 0 : i32
    return %c0_i32, %c0_i32_0 : i32, i32
  }
  func.func @transform_12(%arg0: i32) -> (i32, i32) {
    %c0_i32 = arith.constant 0 : i32
    %c0_i32_0 = arith.constant 0 : i32
    %c0_i32_1 = arith.constant 0 : i32
    return %c0_i32, %c0_i32_0 : i32, i32
  }
  func.func @transform_13(%arg0: i32) -> (i32, i32) {
    %c0_i32 = arith.constant 0 : i32
    %c0_i32_0 = arith.constant 0 : i32
    %c0_i32_1 = arith.constant 0 : i32
    return %c0_i32, %c0_i32_0 : i32, i32
  }
  func.func @transform_14(%arg0: i32) -> (i32, i32) {
    %c0_i32 = arith.constant 0 : i32
    %c0_i32_0 = arith.constant 0 : i32
    %c0_i32_1 = arith.constant 0 : i32
    return %c0_i32, %c0_i32_0 : i32, i32
  }
  func.func @transform_15(%arg0: i32) -> (i32, i32) {
    %c0_i32 = arith.constant 0 : i32
    %c0_i32_0 = arith.constant 0 : i32
    %c0_i32_1 = arith.constant 0 : i32
    return %c0_i32, %c0_i32_0 : i32, i32
  }
  func.func @transform_16(%arg0: i32) -> (i32, i32) {
    %c0_i32 = arith.constant 0 : i32
    %c0_i32_0 = arith.constant 0 : i32
    %c0_i32_1 = arith.constant 0 : i32
    return %c0_i32, %c0_i32_0 : i32, i32
  }
  func.func @transform_17(%arg0: i32) -> (i32, i32) {
    %c0_i32 = arith.constant 0 : i32
    %c0_i32_0 = arith.constant 0 : i32
    %c0_i32_1 = arith.constant 0 : i32
    return %c0_i32, %c0_i32_0 : i32, i32
  }
  func.func @transform_18(%arg0: i32) -> (i32, i32, i32) {
    %c0_i32 = arith.constant 0 : i32
    %c0_i32_0 = arith.constant 0 : i32
    %c0_i32_1 = arith.constant 0 : i32
    return %arg0, %c0_i32, %c0_i32_0 : i32, i32, i32
  }
}

</mosaic_0001>

<llo_original>
// kernel: tpu_custom_call.1
$region0: #{tpu_custom_call.1}
  #allocation0 [shape = 'u32[]', space=smem, size = 0x4, offset = 0x4, fixed_abs, tag = 'smem constant byte address 0x4 - core index']
  #allocation1 [shape = 'u32[144,128]{1,0:T(1,128)}', space=vmem, size = 0x12000, scoped, tag = 'internal scratch']
  %s0 = inlined_call_operand.vmem [shape: f32[2,8,128], index: 0, kind: input, shape index: {}]
  %s1 = inlined_call_operand.vmem [shape: f32[8,8], index: 1, kind: input, shape index: {}]
  %s2 = inlined_call_operand.vmem [shape: f32[1,128], index: 2, kind: input, shape index: {}]
  %s3 = inlined_call_operand.vmem [shape: f32[1,128], index: 3, kind: input, shape index: {}]
  %s4 = inlined_call_operand.vmem [shape: f32[4,128,32], index: 4, kind: input, shape index: {}]
  %s5 = inlined_call_operand.vmem [shape: f32[4,1,32], index: 5, kind: input, shape index: {}]
  %s6 = inlined_call_operand.vmem [shape: f32[4,128,32], index: 6, kind: input, shape index: {}]
  %s7 = inlined_call_operand.vmem [shape: f32[4,1,32], index: 7, kind: input, shape index: {}]
  %s8 = inlined_call_operand.vmem [shape: f32[4,128,32], index: 8, kind: input, shape index: {}]
  %s9 = inlined_call_operand.vmem [shape: f32[4,1,32], index: 9, kind: input, shape index: {}]
  %s10 = inlined_call_operand.vmem [shape: f32[4,32,128], index: 10, kind: input, shape index: {}]
  %s11 = inlined_call_operand.vmem [shape: f32[1,128], index: 11, kind: input, shape index: {}]
  %s12 = inlined_call_operand.vmem [shape: f32[1,128], index: 12, kind: input, shape index: {}]
  %s13 = inlined_call_operand.vmem [shape: f32[1,128], index: 13, kind: input, shape index: {}]
  %s14 = inlined_call_operand.vmem [shape: f32[128,512], index: 14, kind: input, shape index: {}]
  %s15 = inlined_call_operand.vmem [shape: f32[1,512], index: 15, kind: input, shape index: {}]
  %s16 = inlined_call_operand.vmem [shape: f32[512,128], index: 16, kind: input, shape index: {}]
  %s17 = inlined_call_operand.vmem [shape: f32[1,128], index: 17, kind: input, shape index: {}]
  %s18 = inlined_call_operand.hbm [shape: f32[2,8,128], index: 18, kind: output, shape index: {}]
  %s19 = sld [smem:[#allocation0]]
  $region105: #{tpu_custom_call.1} parent=0
    _
  %s21 = ssub.s32 1, %s19
  %s22 = scalar_select 0, %s21, %s19
  $region1: #{tpu_custom_call.1} parent=0
    #allocation2 [shape = 'u8[8192]{0}', space=vmem, size = 0x2000, scoped, tag = 'output window, operand 0']
    #allocation3 [shape = 's32[2]{0}', space=sflag, size = 0x8, scoped, tag = 'scoped memory for tpu_custom_call.1']
    %23 = vsyncpa [#allocation3], 0
    %s24 = scalar_lea.sflag [#allocation3], 1
    %25 = vsyncpa %s24, 0
    loop: start=0, step=1, limit=4
    $region2: #{tpu_custom_call.1} parent=1 // loop_pre_header
      _
    $region3: #{tpu_custom_call.1} parent=1 // loop_header
      %s27 = sphi 0, %s31
      %p28 = scmp.ge.s32.totalorder %s27, 4
      %s37 = sphi 0, %s39
      %s40 = sphi 0, %s37
      %s41 = sphi 0, %s40
      %s57 = sphi 0, %s41
      %s61 = sphi 0, %s61
      %s63 = sphi 0, %s61
      %s64 = sphi 0, %s63
      %s78 = sphi 0, %s64
      %s82 = sphi 0, %s82
      %s84 = sphi 0, %s82
      %s85 = sphi 0, %s84
      %s99 = sphi 0, %s85
      %s103 = sphi 0, %s103
      %s105 = sphi 0, %s103
      %s106 = sphi 0, %s105
      %s120 = sphi 0, %s106
      %s124 = sphi 0, %s124
      %s126 = sphi 0, %s124
      %s127 = sphi 0, %s126
      %s141 = sphi 0, %s127
      %s145 = sphi 0, %s145
      %s147 = sphi 0, %s145
      %s148 = sphi 0, %s147
      %s162 = sphi 0, %s148
      %s166 = sphi 0, %s166
      %s168 = sphi 0, %s166
      %s169 = sphi 0, %s168
      %s183 = sphi 0, %s169
      %s187 = sphi 0, %s187
      %s189 = sphi 0, %s187
      %s190 = sphi 0, %s189
      %s204 = sphi 0, %s190
      %s208 = sphi 0, %s208
      %s210 = sphi 0, %s208
      %s211 = sphi 0, %s210
      %s225 = sphi 0, %s211
      %s229 = sphi 0, %s229
      %s231 = sphi 0, %s229
      %s232 = sphi 0, %s231
      %s246 = sphi 0, %s232
      %s250 = sphi 0, %s250
      %s252 = sphi 0, %s250
      %s253 = sphi 0, %s252
      %s267 = sphi 0, %s253
      %s271 = sphi 0, %s271
      %s273 = sphi 0, %s271
      %s274 = sphi 0, %s273
      %s288 = sphi 0, %s274
      %s292 = sphi 0, %s292
      %s294 = sphi 0, %s292
      %s295 = sphi 0, %s294
      %s309 = sphi 0, %s295
      %s313 = sphi 0, %s313
      %s315 = sphi 0, %s313
      %s316 = sphi 0, %s315
      %s330 = sphi 0, %s316
      %s334 = sphi 0, %s334
      %s336 = sphi 0, %s334
      %s337 = sphi 0, %s336
      %s351 = sphi 0, %s337
      %s355 = sphi 0, %s355
      %s357 = sphi 0, %s355
      %s358 = sphi 0, %s357
      %s372 = sphi 0, %s358
      %s376 = sphi 0, %s376
      %s378 = sphi 0, %s376
      %s379 = sphi 0, %s378
      %s393 = sphi 0, %s379
      %s397 = sphi 0, %s397
      %s399 = sphi 0, %s397
      %s400 = sphi 0, %s399
      %s414 = sphi 0, %s400
      %s420 = sphi 0, %s422
      %s423 = sphi 0, %s420
      %s424 = sphi 0, %s423
      %s440 = sphi 0, %s424
    $region4: #{tpu_custom_call.1} parent=1 // loop_header_branch
      %30 = sbr.rel (%p28) target = $region8
    $region5: #{tpu_custom_call.1} parent=1 // loop_body
      %s32 = ssub.s32 %s27, 1
      %s33 = ssub.s32 %s27, 2
      %s34 = sadd.s32 %s27, 1
      %s35 = ssub.s32 %s27, %s34
      %p36 = scmp.eq.s32.totalorder %s35, 0
      %s38 = sadd.s32 %s37, 1
      %s39 = scalar_select %p36, %s37, %s38
      %p42 = pneg %p36
      %p43 = scmp.eq.s32.totalorder %s27, 1
      %p44 = por %p42, %p43
      %p45 = scmp.ne.s32.totalorder %s37, %s40
      %p46 = scmp.eq.s32.totalorder %s27, 0
      %p47 = por %p45, %p46
      %p48 = scmp.ne.s32.totalorder %s37, %s40
      %p49 = scmp.eq.s32.totalorder %s32, 1
      %p50 = por %p48, %p49
      %p51 = scmp.ne.s32.totalorder %s40, %s41
      %p52 = scmp.eq.s32.totalorder %s32, 0
      %p53 = por %p51, %p52
      %p54 = scmp.ne.s32.totalorder %s40, %s41
      %p55 = scmp.eq.s32.totalorder %s33, 1
      %p56 = por %p54, %p55
      %p58 = scmp.ne.s32.totalorder %s41, %s57
      %p59 = scmp.eq.s32.totalorder %s33, 0
      %p60 = por %p58, %p59
      %s62 = sadd.s32 %s61, 1
      %p65 = scmp.eq.s32.totalorder %s27, 1
      %p66 = scmp.ne.s32.totalorder %s61, %s63
      %p67 = scmp.eq.s32.totalorder %s27, 0
      %p68 = por %p66, %p67
      %p69 = scmp.ne.s32.totalorder %s61, %s63
      %p70 = scmp.eq.s32.totalorder %s32, 1
      %p71 = por %p69, %p70
      %p72 = scmp.ne.s32.totalorder %s63, %s64
      %p73 = scmp.eq.s32.totalorder %s32, 0
      %p74 = por %p72, %p73
      %p75 = scmp.ne.s32.totalorder %s63, %s64
      %p76 = scmp.eq.s32.totalorder %s33, 1
      %p77 = por %p75, %p76
      %p79 = scmp.ne.s32.totalorder %s64, %s78
      %p80 = scmp.eq.s32.totalorder %s33, 0
      %p81 = por %p79, %p80
      %s83 = sadd.s32 %s82, 1
      %p86 = scmp.eq.s32.totalorder %s27, 1
      %p87 = scmp.ne.s32.totalorder %s82, %s84
      %p88 = scmp.eq.s32.totalorder %s27, 0
      %p89 = por %p87, %p88
      %p90 = scmp.ne.s32.totalorder %s82, %s84
      %p91 = scmp.eq.s32.totalorder %s32, 1
      %p92 = por %p90, %p91
      %p93 = scmp.ne.s32.totalorder %s84, %s85
      %p94 = scmp.eq.s32.totalorder %s32, 0
      %p95 = por %p93, %p94
      %p96 = scmp.ne.s32.totalorder %s84, %s85
      %p97 = scmp.eq.s32.totalorder %s33, 1
      %p98 = por %p96, %p97
      %p100 = scmp.ne.s32.totalorder %s85, %s99
      %p101 = scmp.eq.s32.totalorder %s33, 0
      %p102 = por %p100, %p101
      %s104 = sadd.s32 %s103, 1
      %p107 = scmp.eq.s32.totalorder %s27, 1
      %p108 = scmp.ne.s32.totalorder %s103, %s105
      %p109 = scmp.eq.s32.totalorder %s27, 0
      %p110 = por %p108, %p109
      %p111 = scmp.ne.s32.totalorder %s103, %s105
      %p112 = scmp.eq.s32.totalorder %s32, 1
      %p113 = por %p111, %p112
      %p114 = scmp.ne.s32.totalorder %s105, %s106
      %p115 = scmp.eq.s32.totalorder %s32, 0
      %p116 = por %p114, %p115
      %p117 = scmp.ne.s32.totalorder %s105, %s106
      %p118 = scmp.eq.s32.totalorder %s33, 1
      %p119 = por %p117, %p118
      %p121 = scmp.ne.s32.totalorder %s106, %s120
      %p122 = scmp.eq.s32.totalorder %s33, 0
      %p123 = por %p121, %p122
      %s125 = sadd.s32 %s124, 1
      %p128 = scmp.eq.s32.totalorder %s27, 1
      %p129 = scmp.ne.s32.totalorder %s124, %s126
      %p130 = scmp.eq.s32.totalorder %s27, 0
      %p131 = por %p129, %p130
      %p132 = scmp.ne.s32.totalorder %s124, %s126
      %p133 = scmp.eq.s32.totalorder %s32, 1
      %p134 = por %p132, %p133
      %p135 = scmp.ne.s32.totalorder %s126, %s127
      %p136 = scmp.eq.s32.totalorder %s32, 0
      %p137 = por %p135, %p136
      %p138 = scmp.ne.s32.totalorder %s126, %s127
      %p139 = scmp.eq.s32.totalorder %s33, 1
      %p140 = por %p138, %p139
      %p142 = scmp.ne.s32.totalorder %s127, %s141
      %p143 = scmp.eq.s32.totalorder %s33, 0
      %p144 = por %p142, %p143
      %s146 = sadd.s32 %s145, 1
      %p149 = scmp.eq.s32.totalorder %s27, 1
      %p150 = scmp.ne.s32.totalorder %s145, %s147
      %p151 = scmp.eq.s32.totalorder %s27, 0
      %p152 = por %p150, %p151
      %p153 = scmp.ne.s32.totalorder %s145, %s147
      %p154 = scmp.eq.s32.totalorder %s32, 1
      %p155 = por %p153, %p154
      %p156 = scmp.ne.s32.totalorder %s147, %s148
      %p157 = scmp.eq.s32.totalorder %s32, 0
      %p158 = por %p156, %p157
      %p159 = scmp.ne.s32.totalorder %s147, %s148
      %p160 = scmp.eq.s32.totalorder %s33, 1
      %p161 = por %p159, %p160
      %p163 = scmp.ne.s32.totalorder %s148, %s162
      %p164 = scmp.eq.s32.totalorder %s33, 0
      %p165 = por %p163, %p164
      %s167 = sadd.s32 %s166, 1
      %p170 = scmp.eq.s32.totalorder %s27, 1
      %p171 = scmp.ne.s32.totalorder %s166, %s168
      %p172 = scmp.eq.s32.totalorder %s27, 0
      %p173 = por %p171, %p172
      %p174 = scmp.ne.s32.totalorder %s166, %s168
      %p175 = scmp.eq.s32.totalorder %s32, 1
      %p176 = por %p174, %p175
      %p177 = scmp.ne.s32.totalorder %s168, %s169
      %p178 = scmp.eq.s32.totalorder %s32, 0
      %p179 = por %p177, %p178
      %p180 = scmp.ne.s32.totalorder %s168, %s169
      %p181 = scmp.eq.s32.totalorder %s33, 1
      %p182 = por %p180, %p181
      %p184 = scmp.ne.s32.totalorder %s169, %s183
      %p185 = scmp.eq.s32.totalorder %s33, 0
      %p186 = por %p184, %p185
      %s188 = sadd.s32 %s187, 1
      %p191 = scmp.eq.s32.totalorder %s27, 1
      %p192 = scmp.ne.s32.totalorder %s187, %s189
      %p193 = scmp.eq.s32.totalorder %s27, 0
      %p194 = por %p192, %p193
      %p195 = scmp.ne.s32.totalorder %s187, %s189
      %p196 = scmp.eq.s32.totalorder %s32, 1
      %p197 = por %p195, %p196
      %p198 = scmp.ne.s32.totalorder %s189, %s190
      %p199 = scmp.eq.s32.totalorder %s32, 0
      %p200 = por %p198, %p199
      %p201 = scmp.ne.s32.totalorder %s189, %s190
      %p202 = scmp.eq.s32.totalorder %s33, 1
      %p203 = por %p201, %p202
      %p205 = scmp.ne.s32.totalorder %s190, %s204
      %p206 = scmp.eq.s32.totalorder %s33, 0
      %p207 = por %p205, %p206
      %s209 = sadd.s32 %s208, 1
      %p212 = scmp.eq.s32.totalorder %s27, 1
      %p213 = scmp.ne.s32.totalorder %s208, %s210
      %p214 = scmp.eq.s32.totalorder %s27, 0
      %p215 = por %p213, %p214
      %p216 = scmp.ne.s32.totalorder %s208, %s210
      %p217 = scmp.eq.s32.totalorder %s32, 1
      %p218 = por %p216, %p217
      %p219 = scmp.ne.s32.totalorder %s210, %s211
      %p220 = scmp.eq.s32.totalorder %s32, 0
      %p221 = por %p219, %p220
      %p222 = scmp.ne.s32.totalorder %s210, %s211
      %p223 = scmp.eq.s32.totalorder %s33, 1
      %p224 = por %p222, %p223
      %p226 = scmp.ne.s32.totalorder %s211, %s225
      %p227 = scmp.eq.s32.totalorder %s33, 0
      %p228 = por %p226, %p227
      %s230 = sadd.s32 %s229, 1
      %p233 = scmp.eq.s32.totalorder %s27, 1
      %p234 = scmp.ne.s32.totalorder %s229, %s231
      %p235 = scmp.eq.s32.totalorder %s27, 0
      %p236 = por %p234, %p235
      %p237 = scmp.ne.s32.totalorder %s229, %s231
      %p238 = scmp.eq.s32.totalorder %s32, 1
      %p239 = por %p237, %p238
      %p240 = scmp.ne.s32.totalorder %s231, %s232
      %p241 = scmp.eq.s32.totalorder %s32, 0
      %p242 = por %p240, %p241
      %p243 = scmp.ne.s32.totalorder %s231, %s232
      %p244 = scmp.eq.s32.totalorder %s33, 1
      %p245 = por %p243, %p244
      %p247 = scmp.ne.s32.totalorder %s232, %s246
      %p248 = scmp.eq.s32.totalorder %s33, 0
      %p249 = por %p247, %p248
      %s251 = sadd.s32 %s250, 1
      %p254 = scmp.eq.s32.totalorder %s27, 1
      %p255 = scmp.ne.s32.totalorder %s250, %s252
      %p256 = scmp.eq.s32.totalorder %s27, 0
      %p257 = por %p255, %p256
      %p258 = scmp.ne.s32.totalorder %s250, %s252
      %p259 = scmp.eq.s32.totalorder %s32, 1
      %p260 = por %p258, %p259
      %p261 = scmp.ne.s32.totalorder %s252, %s253
      %p262 = scmp.eq.s32.totalorder %s32, 0
      %p263 = por %p261, %p262
      %p264 = scmp.ne.s32.totalorder %s252, %s253
      %p265 = scmp.eq.s32.totalorder %s33, 1
      %p266 = por %p264, %p265
      %p268 = scmp.ne.s32.totalorder %s253, %s267
      %p269 = scmp.eq.s32.totalorder %s33, 0
      %p270 = por %p268, %p269
      %s272 = sadd.s32 %s271, 1
      %p275 = scmp.eq.s32.totalorder %s27, 1
      %p276 = scmp.ne.s32.totalorder %s271, %s273
      %p277 = scmp.eq.s32.totalorder %s27, 0
      %p278 = por %p276, %p277
      %p279 = scmp.ne.s32.totalorder %s271, %s273
      %p280 = scmp.eq.s32.totalorder %s32, 1
      %p281 = por %p279, %p280
      %p282 = scmp.ne.s32.totalorder %s273, %s274
      %p283 = scmp.eq.s32.totalorder %s32, 0
      %p284 = por %p282, %p283
      %p285 = scmp.ne.s32.totalorder %s273, %s274
      %p286 = scmp.eq.s32.totalorder %s33, 1
      %p287 = por %p285, %p286
      %p289 = scmp.ne.s32.totalorder %s274, %s288
      %p290 = scmp.eq.s32.totalorder %s33, 0
      %p291 = por %p289, %p290
      %s293 = sadd.s32 %s292, 1
      %p296 = scmp.eq.s32.totalorder %s27, 1
      %p297 = scmp.ne.s32.totalorder %s292, %s294
      %p298 = scmp.eq.s32.totalorder %s27, 0
      %p299 = por %p297, %p298
      %p300 = scmp.ne.s32.totalorder %s292, %s294
      %p301 = scmp.eq.s32.totalorder %s32, 1
      %p302 = por %p300, %p301
      %p303 = scmp.ne.s32.totalorder %s294, %s295
      %p304 = scmp.eq.s32.totalorder %s32, 0
      %p305 = por %p303, %p304
      %p306 = scmp.ne.s32.totalorder %s294, %s295
      %p307 = scmp.eq.s32.totalorder %s33, 1
      %p308 = por %p306, %p307
      %p310 = scmp.ne.s32.totalorder %s295, %s309
      %p311 = scmp.eq.s32.totalorder %s33, 0
      %p312 = por %p310, %p311
      %s314 = sadd.s32 %s313, 1
      %p317 = scmp.eq.s32.totalorder %s27, 1
      %p318 = scmp.ne.s32.totalorder %s313, %s315
      %p319 = scmp.eq.s32.totalorder %s27, 0
      %p320 = por %p318, %p319
      %p321 = scmp.ne.s32.totalorder %s313, %s315
      %p322 = scmp.eq.s32.totalorder %s32, 1
      %p323 = por %p321, %p322
      %p324 = scmp.ne.s32.totalorder %s315, %s316
      %p325 = scmp.eq.s32.totalorder %s32, 0
      %p326 = por %p324, %p325
      %p327 = scmp.ne.s32.totalorder %s315, %s316
      %p328 = scmp.eq.s32.totalorder %s33, 1
      %p329 = por %p327, %p328
      %p331 = scmp.ne.s32.totalorder %s316, %s330
      %p332 = scmp.eq.s32.totalorder %s33, 0
      %p333 = por %p331, %p332
      %s335 = sadd.s32 %s334, 1
      %p338 = scmp.eq.s32.totalorder %s27, 1
      %p339 = scmp.ne.s32.totalorder %s334, %s336
      %p340 = scmp.eq.s32.totalorder %s27, 0
      %p341 = por %p339, %p340
      %p342 = scmp.ne.s32.totalorder %s334, %s336
      %p343 = scmp.eq.s32.totalorder %s32, 1
      %p344 = por %p342, %p343
      %p345 = scmp.ne.s32.totalorder %s336, %s337
      %p346 = scmp.eq.s32.totalorder %s32, 0
      %p347 = por %p345, %p346
      %p348 = scmp.ne.s32.totalorder %s336, %s337
      %p349 = scmp.eq.s32.totalorder %s33, 1
      %p350 = por %p348, %p349
      %p352 = scmp.ne.s32.totalorder %s337, %s351
      %p353 = scmp.eq.s32.totalorder %s33, 0
      %p354 = por %p352, %p353
      %s356 = sadd.s32 %s355, 1
      %p359 = scmp.eq.s32.totalorder %s27, 1
      %p360 = scmp.ne.s32.totalorder %s355, %s357
      %p361 = scmp.eq.s32.totalorder %s27, 0
      %p362 = por %p360, %p361
      %p363 = scmp.ne.s32.totalorder %s355, %s357
      %p364 = scmp.eq.s32.totalorder %s32, 1
      %p365 = por %p363, %p364
      %p366 = scmp.ne.s32.totalorder %s357, %s358
      %p367 = scmp.eq.s32.totalorder %s32, 0
      %p368 = por %p366, %p367
      %p369 = scmp.ne.s32.totalorder %s357, %s358
      %p370 = scmp.eq.s32.totalorder %s33, 1
      %p371 = por %p369, %p370
      %p373 = scmp.ne.s32.totalorder %s358, %s372
      %p374 = scmp.eq.s32.totalorder %s33, 0
      %p375 = por %p373, %p374
      %s377 = sadd.s32 %s376, 1
      %p380 = scmp.eq.s32.totalorder %s27, 1
      %p381 = scmp.ne.s32.totalorder %s376, %s378
      %p382 = scmp.eq.s32.totalorder %s27, 0
      %p383 = por %p381, %p382
      %p384 = scmp.ne.s32.totalorder %s376, %s378
      %p385 = scmp.eq.s32.totalorder %s32, 1
      %p386 = por %p384, %p385
      %p387 = scmp.ne.s32.totalorder %s378, %s379
      %p388 = scmp.eq.s32.totalorder %s32, 0
      %p389 = por %p387, %p388
      %p390 = scmp.ne.s32.totalorder %s378, %s379
      %p391 = scmp.eq.s32.totalorder %s33, 1
      %p392 = por %p390, %p391
      %p394 = scmp.ne.s32.totalorder %s379, %s393
      %p395 = scmp.eq.s32.totalorder %s33, 0
      %p396 = por %p394, %p395
      %s398 = sadd.s32 %s397, 1
      %p401 = scmp.eq.s32.totalorder %s27, 1
      %p402 = scmp.ne.s32.totalorder %s397, %s399
      %p403 = scmp.eq.s32.totalorder %s27, 0
      %p404 = por %p402, %p403
      %p405 = scmp.ne.s32.totalorder %s397, %s399
      %p406 = scmp.eq.s32.totalorder %s32, 1
      %p407 = por %p405, %p406
      %p408 = scmp.ne.s32.totalorder %s399, %s400
      %p409 = scmp.eq.s32.totalorder %s32, 0
      %p410 = por %p408, %p409
      %p411 = scmp.ne.s32.totalorder %s399, %s400
      %p412 = scmp.eq.s32.totalorder %s33, 1
      %p413 = por %p411, %p412
      %p415 = scmp.ne.s32.totalorder %s400, %s414
      %p416 = scmp.eq.s32.totalorder %s33, 0
      %p417 = por %p415, %p416
      %s418 = ssub.s32 %s27, %s34
      %p419 = scmp.eq.s32.totalorder %s418, 0
      %s421 = sadd.s32 %s420, 1
      %s422 = scalar_select %p419, %s420, %s421
      %p425 = pneg %p419
      %p426 = scmp.eq.s32.totalorder %s27, 1
      %p427 = por %p425, %p426
      %p428 = scmp.ne.s32.totalorder %s420, %s423
      %p429 = scmp.eq.s32.totalorder %s27, 0
      %p430 = por %p428, %p429
      %p431 = scmp.ne.s32.totalorder %s420, %s423
      %p432 = scmp.eq.s32.totalorder %s32, 1
      %p433 = por %p431, %p432
      %p434 = scmp.ne.s32.totalorder %s423, %s424
      %p435 = scmp.eq.s32.totalorder %s32, 0
      %p436 = por %p434, %p435
      %p437 = scmp.ne.s32.totalorder %s423, %s424
      %p438 = scmp.eq.s32.totalorder %s33, 1
      %p439 = por %p437, %p438
      %p441 = scmp.ne.s32.totalorder %s424, %s440
      %p442 = scmp.eq.s32.totalorder %s33, 0
      %p443 = por %p441, %p442
      %p444 = scmp.le.s32.totalorder 1, %s27
      %p445 = scmp.lt.s32.totalorder %s27, 3
      %p446 = pnand %p444, %p445
      %p447 = pneg %p446
      // Predicated region
      $region9: #{tpu_custom_call.1} parent=5 // pred_check
        _
      $region10: #{tpu_custom_call.1} parent=5 // pred_check_branch
        %449 = sbr.rel (%p446) target = $region12
      $region11: #{tpu_custom_call.1} parent=5 // pred_region
        %s450 = ssub.s32 %s27, 1
        // Predicated region
        $region13: #{tpu_custom_call.1} parent=11 // pred_check
          %p451 = pneg %p74
        $region14: #{tpu_custom_call.1} parent=11 // pred_check_branch
          %453 = sbr.rel (%p451) target = $region16
        $region15: #{tpu_custom_call.1} parent=11 // pred_region
          _
        $region16: #{tpu_custom_call.1} parent=11 // pred_fallthru
          _
        // Predicated region
        $region17: #{tpu_custom_call.1} parent=11 // pred_check
          %p454 = pneg %p95
        $region18: #{tpu_custom_call.1} parent=11 // pred_check_branch
          %456 = sbr.rel (%p454) target = $region20
        $region19: #{tpu_custom_call.1} parent=11 // pred_region
          _
        $region20: #{tpu_custom_call.1} parent=11 // pred_fallthru
          _
        // Predicated region
        $region21: #{tpu_custom_call.1} parent=11 // pred_check
          %p457 = pneg %p116
        $region22: #{tpu_custom_call.1} parent=11 // pred_check_branch
          %459 = sbr.rel (%p457) target = $region24
        $region23: #{tpu_custom_call.1} parent=11 // pred_region
          _
        $region24: #{tpu_custom_call.1} parent=11 // pred_fallthru
          _
        // Predicated region
        $region25: #{tpu_custom_call.1} parent=11 // pred_check
          %p460 = pneg %p137
        $region26: #{tpu_custom_call.1} parent=11 // pred_check_branch
          %462 = sbr.rel (%p460) target = $region28
        $region27: #{tpu_custom_call.1} parent=11 // pred_region
          _
        $region28: #{tpu_custom_call.1} parent=11 // pred_fallthru
          _
        // Predicated region
        $region29: #{tpu_custom_call.1} parent=11 // pred_check
          %p463 = pneg %p158
        $region30: #{tpu_custom_call.1} parent=11 // pred_check_branch
          %465 = sbr.rel (%p463) target = $region32
        $region31: #{tpu_custom_call.1} parent=11 // pred_region
          _
        $region32: #{tpu_custom_call.1} parent=11 // pred_fallthru
          _
        // Predicated region
        $region33: #{tpu_custom_call.1} parent=11 // pred_check
          %p466 = pneg %p179
        $region34: #{tpu_custom_call.1} parent=11 // pred_check_branch
          %468 = sbr.rel (%p466) target = $region36
        $region35: #{tpu_custom_call.1} parent=11 // pred_region
          _
        $region36: #{tpu_custom_call.1} parent=11 // pred_fallthru
          _
        // Predicated region
        $region37: #{tpu_custom_call.1} parent=11 // pred_check
          %p469 = pneg %p200
        $region38: #{tpu_custom_call.1} parent=11 // pred_check_branch
          %471 = sbr.rel (%p469) target = $region40
        $region39: #{tpu_custom_call.1} parent=11 // pred_region
          _
        $region40: #{tpu_custom_call.1} parent=11 // pred_fallthru
          _
        // Predicated region
        $region41: #{tpu_custom_call.1} parent=11 // pred_check
          %p472 = pneg %p221
        $region42: #{tpu_custom_call.1} parent=11 // pred_check_branch
          %474 = sbr.rel (%p472) target = $region44
        $region43: #{tpu_custom_call.1} parent=11 // pred_region
          _
        $region44: #{tpu_custom_call.1} parent=11 // pred_fallthru
          _
        // Predicated region
        $region45: #{tpu_custom_call.1} parent=11 // pred_check
          %p475 = pneg %p242
        $region46: #{tpu_custom_call.1} parent=11 // pred_check_branch
          %477 = sbr.rel (%p475) target = $region48
        $region47: #{tpu_custom_call.1} parent=11 // pred_region
          _
        $region48: #{tpu_custom_call.1} parent=11 // pred_fallthru
          _
        // Predicated region
        $region49: #{tpu_custom_call.1} parent=11 // pred_check
          %p478 = pneg %p263
        $region50: #{tpu_custom_call.1} parent=11 // pred_check_branch
          %480 = sbr.rel (%p478) target = $region52
        $region51: #{tpu_custom_call.1} parent=11 // pred_region
          _
        $region52: #{tpu_custom_call.1} parent=11 // pred_fallthru
          _
        // Predicated region
        $region53: #{tpu_custom_call.1} parent=11 // pred_check
          %p481 = pneg %p284
        $region54: #{tpu_custom_call.1} parent=11 // pred_check_branch
          %483 = sbr.rel (%p481) target = $region56
        $region55: #{tpu_custom_call.1} parent=11 // pred_region
          _
        $region56: #{tpu_custom_call.1} parent=11 // pred_fallthru
          _
        // Predicated region
        $region57: #{tpu_custom_call.1} parent=11 // pred_check
          %p484 = pneg %p305
        $region58: #{tpu_custom_call.1} parent=11 // pred_check_branch
          %486 = sbr.rel (%p484) target = $region60
        $region59: #{tpu_custom_call.1} parent=11 // pred_region
          _
        $region60: #{tpu_custom_call.1} parent=11 // pred_fallthru
          _
        // Predicated region
        $region61: #{tpu_custom_call.1} parent=11 // pred_check
          %p487 = pneg %p326
        $region62: #{tpu_custom_call.1} parent=11 // pred_check_branch
          %489 = sbr.rel (%p487) target = $region64
        $region63: #{tpu_custom_call.1} parent=11 // pred_region
          _
        $region64: #{tpu_custom_call.1} parent=11 // pred_fallthru
          _
        // Predicated region
        $region65: #{tpu_custom_call.1} parent=11 // pred_check
          %p490 = pneg %p347
        $region66: #{tpu_custom_call.1} parent=11 // pred_check_branch
          %492 = sbr.rel (%p490) target = $region68
        $region67: #{tpu_custom_call.1} parent=11 // pred_region
          _
        $region68: #{tpu_custom_call.1} parent=11 // pred_fallthru
          _
        // Predicated region
        $region69: #{tpu_custom_call.1} parent=11 // pred_check
          %p493 = pneg %p368
        $region70: #{tpu_custom_call.1} parent=11 // pred_check_branch
          %495 = sbr.rel (%p493) target = $region72
        $region71: #{tpu_custom_call.1} parent=11 // pred_region
          _
        $region72: #{tpu_custom_call.1} parent=11 // pred_fallthru
          _
        // Predicated region
        $region73: #{tpu_custom_call.1} parent=11 // pred_check
          %p496 = pneg %p389
        $region74: #{tpu_custom_call.1} parent=11 // pred_check_branch
          %498 = sbr.rel (%p496) target = $region76
        $region75: #{tpu_custom_call.1} parent=11 // pred_region
          _
        $region76: #{tpu_custom_call.1} parent=11 // pred_fallthru
          _
        // Predicated region
        $region77: #{tpu_custom_call.1} parent=11 // pred_check
          %p499 = pneg %p410
        $region78: #{tpu_custom_call.1} parent=11 // pred_check_branch
          %501 = sbr.rel (%p499) target = $region80
        $region79: #{tpu_custom_call.1} parent=11 // pred_region
          _
        $region80: #{tpu_custom_call.1} parent=11 // pred_fallthru
          _
      $region12: #{tpu_custom_call.1} parent=5 // pred_fallthru
        _
      %p502 = scmp.lt.s32.totalorder %s27, 2
      // Predicated region
      $region81: #{tpu_custom_call.1} parent=5 // pred_check
        %p503 = pneg %p502
      $region82: #{tpu_custom_call.1} parent=5 // pred_check_branch
        %505 = sbr.rel (%p503) target = $region84
      $region83: #{tpu_custom_call.1} parent=5 // pred_region
        // Predicated region
        $region85: #{tpu_custom_call.1} parent=83 // pred_check
          %p506 = pneg %p47
        $region86: #{tpu_custom_call.1} parent=83 // pred_check_branch
          %508 = sbr.rel (%p506) target = $region88
        $region87: #{tpu_custom_call.1} parent=83 // pred_region
          %p509 = scmp.lt.s32.totalorder %s27, 1
          %s510 = scalar_select %p509, %s27, 1
          %s511 = smul.addr %s510, 8
          %s512 = scalar_lea.vmem %s0, %s511
        $region88: #{tpu_custom_call.1} parent=83 // pred_fallthru
          _
      $region84: #{tpu_custom_call.1} parent=5 // pred_fallthru
        _
      %p513 = scmp.le.s32.totalorder 1, %s27
      %p514 = scmp.lt.s32.totalorder %s27, 3
      %p515 = pnand %p513, %p514
      %p516 = pneg %p515
      // Predicated region
      $region89: #{tpu_custom_call.1} parent=5 // pred_check
        _
      $region90: #{tpu_custom_call.1} parent=5 // pred_check_branch
        %518 = sbr.rel (%p515) target = $region92
      $region91: #{tpu_custom_call.1} parent=5 // pred_region
        %s519 = ssub.s32 %s27, 1
        %p520 = scmp.lt.s32.totalorder %s32, 1
        %s521 = scalar_select %p520, %s32, 1
        %s522 = smul.addr %s521, 8
        %s523 = scalar_lea.vmem %s0, %s522
        %p524 = pneg %p53
        %p525 = pneg %p50
        %p526 = pneg %p74
        %p527 = pneg %p71
        %p528 = pneg %p95
        %p529 = pneg %p92
        %p530 = pneg %p116
        %p531 = pneg %p113
        %p532 = pneg %p137
        %p533 = pneg %p134
        %p534 = pneg %p158
        %p535 = pneg %p155
        %p536 = pneg %p179
        %p537 = pneg %p176
        %p538 = pneg %p200
        %p539 = pneg %p197
        %p540 = pneg %p221
        %p541 = pneg %p218
        %p542 = pneg %p242
        %p543 = pneg %p239
        %p544 = pneg %p263
        %p545 = pneg %p260
        %p546 = pneg %p284
        %p547 = pneg %p281
        %p548 = pneg %p305
        %p549 = pneg %p302
        %p550 = pneg %p326
        %p551 = pneg %p323
        %p552 = pneg %p347
        %p553 = pneg %p344
        %p554 = pneg %p368
        %p555 = pneg %p365
        %p556 = pneg %p389
        %p557 = pneg %p386
        %p558 = pneg %p410
        %p559 = pneg %p407
        %p560 = pneg %p436
        %p561 = pneg %p433
        %s562 = sand.u32 %s423, 1
        %s563 = scalar_lea.sflag [#allocation3], %s562
        %s564 = sand.u32 %s423, 1
        %s565 = smul.addr %s564, 8
        %s566 = scalar_lea.vmem [#allocation2], %s565
        %p567 = scmp.lt.s32.totalorder %s32, 1
        %s568 = scalar_select %p567, %s32, 1
        %s569 = smul.addr %s568, 8
        %s570 = scalar_lea.vmem %s0, %s569
        %v571 = vld [vmem:[%s570] sm:$0xff]
        %v572 = vld [vmem:[%s2] sm:$0x1]
        %v573 = vld [vmem:[%s3] sm:$0x1]
        %574 = vadd.xlane.f32.xlu0 %v571
        %v575 = vpop.xlane.xlu0 %574
        %v576 = vrcp.pop 128.0
        %v577 = vmul.f32 %v575, %v576
        %v578 = vsub.f32 %v571, %v577
        %v579 = vmul.f32 %v578, %v578
        %580 = vadd.xlane.f32.xlu0 %v579
        %v581 = vpop.xlane.xlu0 %580
        %v582 = vmul.f32 %v581, %v576
        %v583 = vadd.f32 %v582, 1e-05
        %v584 = vrsqrt.pop %v583
        %v585 = vmul.f32 %v578, %v584
        %v587 = vlaneseq
        %v588 = vshrl.u32 %v587, 7
        %v589 = vsub.s32 0, %v588
        %v590 = vrot.slane %v572, %v589
        %v592 = vmul.f32 %v585, %v590
        %v594 = vlaneseq
        %v595 = vshrl.u32 %v594, 7
        %v596 = vsub.s32 0, %v595
        %v597 = vrot.slane %v573, %v596
        %v599 = vadd.f32 %v592, %v597
        %v600 = vld [vmem:[%s4] sm:$0xff]
        %v601 = vld [vmem:[%s4 + $0x8] sm:$0xff]
        %v602 = vld [vmem:[%s4 + $0x10] sm:$0xff]
        %v603 = vld [vmem:[%s4 + $0x18] sm:$0xff]
        %v604 = vld [vmem:[%s4 + $0x20] sm:$0xff]
        %v605 = vld [vmem:[%s4 + $0x28] sm:$0xff]
        %v606 = vld [vmem:[%s4 + $0x30] sm:$0xff]
        %v607 = vld [vmem:[%s4 + $0x38] sm:$0xff]
        %v608 = vld [vmem:[%s4 + $0x40] sm:$0xff]
        %v609 = vld [vmem:[%s4 + $0x48] sm:$0xff]
        %v610 = vld [vmem:[%s4 + $0x50] sm:$0xff]
        %v611 = vld [vmem:[%s4 + $0x58] sm:$0xff]
        %v612 = vld [vmem:[%s4 + $0x60] sm:$0xff]
        %v613 = vld [vmem:[%s4 + $0x68] sm:$0xff]
        %v614 = vld [vmem:[%s4 + $0x70] sm:$0xff]
        %v615 = vld [vmem:[%s4 + $0x78] sm:$0xff]
        %v616 = vld [vmem:[%s4 + $0x80] sm:$0xff]
        %v617 = vld [vmem:[%s4 + $0x88] sm:$0xff]
        %v618 = vld [vmem:[%s4 + $0x90] sm:$0xff]
        %v619 = vld [vmem:[%s4 + $0x98] sm:$0xff]
        %v620 = vld [vmem:[%s4 + $0xa0] sm:$0xff]
        %v621 = vld [vmem:[%s4 + $0xa8] sm:$0xff]
        %v622 = vld [vmem:[%s4 + $0xb0] sm:$0xff]
        %v623 = vld [vmem:[%s4 + $0xb8] sm:$0xff]
        %v624 = vld [vmem:[%s4 + $0xc0] sm:$0xff]
        %v625 = vld [vmem:[%s4 + $0xc8] sm:$0xff]
        %v626 = vld [vmem:[%s4 + $0xd0] sm:$0xff]
        %v627 = vld [vmem:[%s4 + $0xd8] sm:$0xff]
        %v628 = vld [vmem:[%s4 + $0xe0] sm:$0xff]
        %v629 = vld [vmem:[%s4 + $0xe8] sm:$0xff]
        %v630 = vld [vmem:[%s4 + $0xf0] sm:$0xff]
        %v631 = vld [vmem:[%s4 + $0xf8] sm:$0xff]
        %v632 = vld [vmem:[%s4 + $0x100] sm:$0xff]
        %v633 = vld [vmem:[%s4 + $0x108] sm:$0xff]
        %v634 = vld [vmem:[%s4 + $0x110] sm:$0xff]
        %v635 = vld [vmem:[%s4 + $0x118] sm:$0xff]
        %v636 = vld [vmem:[%s4 + $0x120] sm:$0xff]
        %v637 = vld [vmem:[%s4 + $0x128] sm:$0xff]
        %v638 = vld [vmem:[%s4 + $0x130] sm:$0xff]
        %v639 = vld [vmem:[%s4 + $0x138] sm:$0xff]
        %v640 = vld [vmem:[%s4 + $0x140] sm:$0xff]
        %v641 = vld [vmem:[%s4 + $0x148] sm:$0xff]
        %v642 = vld [vmem:[%s4 + $0x150] sm:$0xff]
        %v643 = vld [vmem:[%s4 + $0x158] sm:$0xff]
        %v644 = vld [vmem:[%s4 + $0x160] sm:$0xff]
        %v645 = vld [vmem:[%s4 + $0x168] sm:$0xff]
        %v646 = vld [vmem:[%s4 + $0x170] sm:$0xff]
        %v647 = vld [vmem:[%s4 + $0x178] sm:$0xff]
        %v648 = vld [vmem:[%s4 + $0x180] sm:$0xff]
        %v649 = vld [vmem:[%s4 + $0x188] sm:$0xff]
        %v650 = vld [vmem:[%s4 + $0x190] sm:$0xff]
        %v651 = vld [vmem:[%s4 + $0x198] sm:$0xff]
        %v652 = vld [vmem:[%s4 + $0x1a0] sm:$0xff]
        %v653 = vld [vmem:[%s4 + $0x1a8] sm:$0xff]
        %v654 = vld [vmem:[%s4 + $0x1b0] sm:$0xff]
        %v655 = vld [vmem:[%s4 + $0x1b8] sm:$0xff]
        %v656 = vld [vmem:[%s4 + $0x1c0] sm:$0xff]
        %v657 = vld [vmem:[%s4 + $0x1c8] sm:$0xff]
        %v658 = vld [vmem:[%s4 + $0x1d0] sm:$0xff]
        %v659 = vld [vmem:[%s4 + $0x1d8] sm:$0xff]
        %v660 = vld [vmem:[%s4 + $0x1e0] sm:$0xff]
        %v661 = vld [vmem:[%s4 + $0x1e8] sm:$0xff]
        %v662 = vld [vmem:[%s4 + $0x1f0] sm:$0xff]
        %v663 = vld [vmem:[%s4 + $0x1f8] sm:$0xff]
        %v664 = vld [vmem:[%s5] sm:$0x1]
        %v665 = vld [vmem:[%s5 + $0x1] sm:$0x1]
        %v666 = vld [vmem:[%s5 + $0x2] sm:$0x1]
        %v667 = vld [vmem:[%s5 + $0x3] sm:$0x1]
        %v672 = vlaneseq
        %v673 = vshrl.u32 %v672, 7
        %v674 = vsub.s32 0, %v673
        %v675 = vrot.slane %v664, %v674
        %v676 = vlaneseq
        %v677 = vshrl.u32 %v676, 7
        %v678 = vsub.s32 0, %v677
        %v679 = vrot.slane %v665, %v678
        %v680 = vlaneseq
        %v681 = vshrl.u32 %v680, 7
        %v682 = vsub.s32 0, %v681
        %v683 = vrot.slane %v666, %v682
        %v684 = vlaneseq
        %v685 = vshrl.u32 %v684, 7
        %v686 = vsub.s32 0, %v685
        %v687 = vrot.slane %v667, %v686
        %692 = vmatprep.subr.mxu0 0.0
        %693 = vmatpush1.msra.mxu0 %v600
        %694 = vmatprep.subr.mxu0 0.0
        %695 = vmatpush1.msra.mxu0 %v601
        %696 = vmatprep.subr.mxu0 0.0
        %697 = vmatpush1.msra.mxu0 %v602
        %698 = vmatprep.subr.mxu0 0.0
        %699 = vmatpush1.msra.mxu0 %v603
        %700 = vmatprep.subr.mxu0 0.0
        %701 = vmatpush1.msra.mxu0 %v604
        %702 = vmatprep.subr.mxu0 0.0
        %703 = vmatpush1.msra.mxu0 %v605
        %704 = vmatprep.subr.mxu0 0.0
        %705 = vmatpush1.msra.mxu0 %v606
        %706 = vmatprep.subr.mxu0 0.0
        %707 = vmatpush1.msra.mxu0 %v607
        %708 = vmatprep.subr.mxu0 0.0
        %709 = vmatpush1.msra.mxu0 %v608
        %710 = vmatprep.subr.mxu0 0.0
        %711 = vmatpush1.msra.mxu0 %v609
        %712 = vmatprep.subr.mxu0 0.0
        %713 = vmatpush1.msra.mxu0 %v610
        %714 = vmatprep.subr.mxu0 0.0
        %715 = vmatpush1.msra.mxu0 %v611
        %716 = vmatprep.subr.mxu0 0.0
        %717 = vmatpush1.msra.mxu0 %v612
        %718 = vmatprep.subr.mxu0 0.0
        %719 = vmatpush1.msra.mxu0 %v613
        %720 = vmatprep.subr.mxu0 0.0
        %721 = vmatpush1.msra.mxu0 %v614
        %722 = vmatprep.subr.mxu0 0.0
        %723 = vmatpush1.msra.mxu0 %v615
        %724 = vmatprep.subr.mxu0 0.0
        %725 = vmatpush1.msra.mxu0 0.0
        %726 = vmatprep.subr.mxu0 0.0
        %727 = vmatpush1.msra.mxu0 0.0
        %728 = vmatprep.subr.mxu0 0.0
        %729 = vmatpush1.msra.mxu0 0.0
        %730 = vmatprep.subr.mxu0 0.0
        %731 = vmatpush1.msra.mxu0 0.0
        %732 = vmatprep.subr.mxu0 0.0
        %733 = vmatpush1.msra.mxu0 0.0
        %734 = vmatprep.subr.mxu0 0.0
        %735 = vmatpush1.msra.mxu0 0.0
        %736 = vmatprep.subr.mxu0 0.0
        %737 = vmatpush1.msra.mxu0 0.0
        %738 = vmatprep.subr.mxu0 0.0
        %739 = vmatpush1.msra.mxu0 0.0
        %740 = vmatprep.subr.mxu0 0.0
        %741 = vmatpush1.msra.mxu0 0.0
        %742 = vmatprep.subr.mxu0 0.0
        %743 = vmatpush1.msra.mxu0 0.0
        %744 = vmatprep.subr.mxu0 0.0
        %745 = vmatpush1.msra.mxu0 0.0
        %746 = vmatprep.subr.mxu0 0.0
        %747 = vmatpush1.msra.mxu0 0.0
        %748 = vmatprep.subr.mxu0 0.0
        %749 = vmatpush1.msra.mxu0 0.0
        %750 = vmatprep.subr.mxu0 0.0
        %751 = vmatpush1.msra.mxu0 0.0
        %752 = vmatprep.subr.mxu0 0.0
        %753 = vmatpush1.msra.mxu0 0.0
        %754 = vmatprep.subr.mxu0 0.0
        %755 = vmatpush1.msra.mxu0 0.0
        %756 = vmatprep.mubr.f32.mxu0 0.0
        %757 = vmatmul.mubr.f32.gmra.mrb[0].mxu0 %v599
        %v758 = vpop.f32.mrb[0].mxu0
        %v759 = vadd.f32 %v675, %v758
        %v760 = vpop.f32.mrb[0].mxu0
        %761 = vdwg.mxu0
        %762 = vmatprep.subr.mxu0 0.0
        %763 = vmatpush1.msra.mxu0 %v616
        %764 = vmatprep.subr.mxu0 0.0
        %765 = vmatpush1.msra.mxu0 %v617
        %766 = vmatprep.subr.mxu0 0.0
        %767 = vmatpush1.msra.mxu0 %v618
        %768 = vmatprep.subr.mxu0 0.0
        %769 = vmatpush1.msra.mxu0 %v619
        %770 = vmatprep.subr.mxu0 0.0
        %771 = vmatpush1.msra.mxu0 %v620
        %772 = vmatprep.subr.mxu0 0.0
        %773 = vmatpush1.msra.mxu0 %v621
        %774 = vmatprep.subr.mxu0 0.0
        %775 = vmatpush1.msra.mxu0 %v622
        %776 = vmatprep.subr.mxu0 0.0
        %777 = vmatpush1.msra.mxu0 %v623
        %778 = vmatprep.subr.mxu0 0.0
        %779 = vmatpush1.msra.mxu0 %v624
        %780 = vmatprep.subr.mxu0 0.0
        %781 = vmatpush1.msra.mxu0 %v625
        %782 = vmatprep.subr.mxu0 0.0
        %783 = vmatpush1.msra.mxu0 %v626
        %784 = vmatprep.subr.mxu0 0.0
        %785 = vmatpush1.msra.mxu0 %v627
        %786 = vmatprep.subr.mxu0 0.0
        %787 = vmatpush1.msra.mxu0 %v628
        %788 = vmatprep.subr.mxu0 0.0
        %789 = vmatpush1.msra.mxu0 %v629
        %790 = vmatprep.subr.mxu0 0.0
        %791 = vmatpush1.msra.mxu0 %v630
        %792 = vmatprep.subr.mxu0 0.0
        %793 = vmatpush1.msra.mxu0 %v631
        %794 = vmatprep.subr.mxu0 0.0
        %795 = vmatpush1.msra.mxu0 0.0
        %796 = vmatprep.subr.mxu0 0.0
        %797 = vmatpush1.msra.mxu0 0.0
        %798 = vmatprep.subr.mxu0 0.0
        %799 = vmatpush1.msra.mxu0 0.0
        %800 = vmatprep.subr.mxu0 0.0
        %801 = vmatpush1.msra.mxu0 0.0
        %802 = vmatprep.subr.mxu0 0.0
        %803 = vmatpush1.msra.mxu0 0.0
        %804 = vmatprep.subr.mxu0 0.0
        %805 = vmatpush1.msra.mxu0 0.0
        %806 = vmatprep.subr.mxu0 0.0
        %807 = vmatpush1.msra.mxu0 0.0
        %808 = vmatprep.subr.mxu0 0.0
        %809 = vmatpush1.msra.mxu0 0.0
        %810 = vmatprep.subr.mxu0 0.0
        %811 = vmatpush1.msra.mxu0 0.0
        %812 = vmatprep.subr.mxu0 0.0
        %813 = vmatpush1.msra.mxu0 0.0
        %814 = vmatprep.subr.mxu0 0.0
        %815 = vmatpush1.msra.mxu0 0.0
        %816 = vmatprep.subr.mxu0 0.0
        %817 = vmatpush1.msra.mxu0 0.0
        %818 = vmatprep.subr.mxu0 0.0
        %819 = vmatpush1.msra.mxu0 0.0
        %820 = vmatprep.subr.mxu0 0.0
        %821 = vmatpush1.msra.mxu0 0.0
        %822 = vmatprep.subr.mxu0 0.0
        %823 = vmatpush1.msra.mxu0 0.0
        %824 = vmatprep.subr.mxu0 0.0
        %825 = vmatpush1.msra.mxu0 0.0
        %826 = vmatprep.mubr.f32.mxu0 0.0
        %827 = vmatmul.mubr.f32.gmra.mrb[0].mxu0 %v599
        %v828 = vpop.f32.mrb[0].mxu0
        %v829 = vadd.f32 %v679, %v828
        %v830 = vpop.f32.mrb[0].mxu0
        %831 = vdwg.mxu0
        %832 = vmatprep.subr.mxu0 0.0
        %833 = vmatpush1.msra.mxu0 %v632
        %834 = vmatprep.subr.mxu0 0.0
        %835 = vmatpush1.msra.mxu0 %v633
        %836 = vmatprep.subr.mxu0 0.0
        %837 = vmatpush1.msra.mxu0 %v634
        %838 = vmatprep.subr.mxu0 0.0
        %839 = vmatpush1.msra.mxu0 %v635
        %840 = vmatprep.subr.mxu0 0.0
        %841 = vmatpush1.msra.mxu0 %v636
        %842 = vmatprep.subr.mxu0 0.0
        %843 = vmatpush1.msra.mxu0 %v637
        %844 = vmatprep.subr.mxu0 0.0
        %845 = vmatpush1.msra.mxu0 %v638
        %846 = vmatprep.subr.mxu0 0.0
        %847 = vmatpush1.msra.mxu0 %v639
        %848 = vmatprep.subr.mxu0 0.0
        %849 = vmatpush1.msra.mxu0 %v640
        %850 = vmatprep.subr.mxu0 0.0
        %851 = vmatpush1.msra.mxu0 %v641
        %852 = vmatprep.subr.mxu0 0.0
        %853 = vmatpush1.msra.mxu0 %v642
        %854 = vmatprep.subr.mxu0 0.0
        %855 = vmatpush1.msra.mxu0 %v643
        %856 = vmatprep.subr.mxu0 0.0
        %857 = vmatpush1.msra.mxu0 %v644
        %858 = vmatprep.subr.mxu0 0.0
        %859 = vmatpush1.msra.mxu0 %v645
        %860 = vmatprep.subr.mxu0 0.0
        %861 = vmatpush1.msra.mxu0 %v646
        %862 = vmatprep.subr.mxu0 0.0
        %863 = vmatpush1.msra.mxu0 %v647
        %864 = vmatprep.subr.mxu0 0.0
        %865 = vmatpush1.msra.mxu0 0.0
        %866 = vmatprep.subr.mxu0 0.0
        %867 = vmatpush1.msra.mxu0 0.0
        %868 = vmatprep.subr.mxu0 0.0
        %869 = vmatpush1.msra.mxu0 0.0
        %870 = vmatprep.subr.mxu0 0.0
        %871 = vmatpush1.msra.mxu0 0.0
        %872 = vmatprep.subr.mxu0 0.0
        %873 = vmatpush1.msra.mxu0 0.0
        %874 = vmatprep.subr.mxu0 0.0
        %875 = vmatpush1.msra.mxu0 0.0
        %876 = vmatprep.subr.mxu0 0.0
        %877 = vmatpush1.msra.mxu0 0.0
        %878 = vmatprep.subr.mxu0 0.0
        %879 = vmatpush1.msra.mxu0 0.0
        %880 = vmatprep.subr.mxu0 0.0
        %881 = vmatpush1.msra.mxu0 0.0
        %882 = vmatprep.subr.mxu0 0.0
        %883 = vmatpush1.msra.mxu0 0.0
        %884 = vmatprep.subr.mxu0 0.0
        %885 = vmatpush1.msra.mxu0 0.0
        %886 = vmatprep.subr.mxu0 0.0
        %887 = vmatpush1.msra.mxu0 0.0
        %888 = vmatprep.subr.mxu0 0.0
        %889 = vmatpush1.msra.mxu0 0.0
        %890 = vmatprep.subr.mxu0 0.0
        %891 = vmatpush1.msra.mxu0 0.0
        %892 = vmatprep.subr.mxu0 0.0
        %893 = vmatpush1.msra.mxu0 0.0
        %894 = vmatprep.subr.mxu0 0.0
        %895 = vmatpush1.msra.mxu0 0.0
        %896 = vmatprep.mubr.f32.mxu0 0.0
        %897 = vmatmul.mubr.f32.gmra.mrb[0].mxu0 %v599
        %v898 = vpop.f32.mrb[0].mxu0
        %v899 = vadd.f32 %v683, %v898
        %v900 = vpop.f32.mrb[0].mxu0
        %901 = vdwg.mxu0
        %902 = vmatprep.subr.mxu0 0.0
        %903 = vmatpush1.msra.mxu0 %v648
        %904 = vmatprep.subr.mxu0 0.0
        %905 = vmatpush1.msra.mxu0 %v649
        %906 = vmatprep.subr.mxu0 0.0
        %907 = vmatpush1.msra.mxu0 %v650
        %908 = vmatprep.subr.mxu0 0.0
        %909 = vmatpush1.msra.mxu0 %v651
        %910 = vmatprep.subr.mxu0 0.0
        %911 = vmatpush1.msra.mxu0 %v652
        %912 = vmatprep.subr.mxu0 0.0
        %913 = vmatpush1.msra.mxu0 %v653
        %914 = vmatprep.subr.mxu0 0.0
        %915 = vmatpush1.msra.mxu0 %v654
        %916 = vmatprep.subr.mxu0 0.0
        %917 = vmatpush1.msra.mxu0 %v655
        %918 = vmatprep.subr.mxu0 0.0
        %919 = vmatpush1.msra.mxu0 %v656
        %920 = vmatprep.subr.mxu0 0.0
        %921 = vmatpush1.msra.mxu0 %v657
        %922 = vmatprep.subr.mxu0 0.0
        %923 = vmatpush1.msra.mxu0 %v658
        %924 = vmatprep.subr.mxu0 0.0
        %925 = vmatpush1.msra.mxu0 %v659
        %926 = vmatprep.subr.mxu0 0.0
        %927 = vmatpush1.msra.mxu0 %v660
        %928 = vmatprep.subr.mxu0 0.0
        %929 = vmatpush1.msra.mxu0 %v661
        %930 = vmatprep.subr.mxu0 0.0
        %931 = vmatpush1.msra.mxu0 %v662
        %932 = vmatprep.subr.mxu0 0.0
        %933 = vmatpush1.msra.mxu0 %v663
        %934 = vmatprep.subr.mxu0 0.0
        %935 = vmatpush1.msra.mxu0 0.0
        %936 = vmatprep.subr.mxu0 0.0
        %937 = vmatpush1.msra.mxu0 0.0
        %938 = vmatprep.subr.mxu0 0.0
        %939 = vmatpush1.msra.mxu0 0.0
        %940 = vmatprep.subr.mxu0 0.0
        %941 = vmatpush1.msra.mxu0 0.0
        %942 = vmatprep.subr.mxu0 0.0
        %943 = vmatpush1.msra.mxu0 0.0
        %944 = vmatprep.subr.mxu0 0.0
        %945 = vmatpush1.msra.mxu0 0.0
        %946 = vmatprep.subr.mxu0 0.0
        %947 = vmatpush1.msra.mxu0 0.0
        %948 = vmatprep.subr.mxu0 0.0
        %949 = vmatpush1.msra.mxu0 0.0
        %950 = vmatprep.subr.mxu0 0.0
        %951 = vmatpush1.msra.mxu0 0.0
        %952 = vmatprep.subr.mxu0 0.0
        %953 = vmatpush1.msra.mxu0 0.0
        %954 = vmatprep.subr.mxu0 0.0
        %955 = vmatpush1.msra.mxu0 0.0
        %956 = vmatprep.subr.mxu0 0.0
        %957 = vmatpush1.msra.mxu0 0.0
        %958 = vmatprep.subr.mxu0 0.0
        %959 = vmatpush1.msra.mxu0 0.0
        %960 = vmatprep.subr.mxu0 0.0
        %961 = vmatpush1.msra.mxu0 0.0
        %962 = vmatprep.subr.mxu0 0.0
        %963 = vmatpush1.msra.mxu0 0.0
        %964 = vmatprep.subr.mxu0 0.0
        %965 = vmatpush1.msra.mxu0 0.0
        %966 = vmatprep.mubr.f32.mxu0 0.0
        %967 = vmatmul.mubr.f32.gmra.mrb[0].mxu0 %v599
        %v968 = vpop.f32.mrb[0].mxu0
        %v969 = vadd.f32 %v687, %v968
        %v970 = vpop.f32.mrb[0].mxu0
        %971 = vdwg.mxu0
        %v972 = vld [vmem:[%s6] sm:$0xff]
        %v973 = vld [vmem:[%s6 + $0x8] sm:$0xff]
        %v974 = vld [vmem:[%s6 + $0x10] sm:$0xff]
        %v975 = vld [vmem:[%s6 + $0x18] sm:$0xff]
        %v976 = vld [vmem:[%s6 + $0x20] sm:$0xff]
        %v977 = vld [vmem:[%s6 + $0x28] sm:$0xff]
        %v978 = vld [vmem:[%s6 + $0x30] sm:$0xff]
        %v979 = vld [vmem:[%s6 + $0x38] sm:$0xff]
        %v980 = vld [vmem:[%s6 + $0x40] sm:$0xff]
        %v981 = vld [vmem:[%s6 + $0x48] sm:$0xff]
        %v982 = vld [vmem:[%s6 + $0x50] sm:$0xff]
        %v983 = vld [vmem:[%s6 + $0x58] sm:$0xff]
        %v984 = vld [vmem:[%s6 + $0x60] sm:$0xff]
        %v985 = vld [vmem:[%s6 + $0x68] sm:$0xff]
        %v986 = vld [vmem:[%s6 + $0x70] sm:$0xff]
        %v987 = vld [vmem:[%s6 + $0x78] sm:$0xff]
        %v988 = vld [vmem:[%s6 + $0x80] sm:$0xff]
        %v989 = vld [vmem:[%s6 + $0x88] sm:$0xff]
        %v990 = vld [vmem:[%s6 + $0x90] sm:$0xff]
        %v991 = vld [vmem:[%s6 + $0x98] sm:$0xff]
        %v992 = vld [vmem:[%s6 + $0xa0] sm:$0xff]
        %v993 = vld [vmem:[%s6 + $0xa8] sm:$0xff]
        %v994 = vld [vmem:[%s6 + $0xb0] sm:$0xff]
        %v995 = vld [vmem:[%s6 + $0xb8] sm:$0xff]
        %v996 = vld [vmem:[%s6 + $0xc0] sm:$0xff]
        %v997 = vld [vmem:[%s6 + $0xc8] sm:$0xff]
        %v998 = vld [vmem:[%s6 + $0xd0] sm:$0xff]
        %v999 = vld [vmem:[%s6 + $0xd8] sm:$0xff]
        %v1000 = vld [vmem:[%s6 + $0xe0] sm:$0xff]
        %v1001 = vld [vmem:[%s6 + $0xe8] sm:$0xff]
        %v1002 = vld [vmem:[%s6 + $0xf0] sm:$0xff]
        %v1003 = vld [vmem:[%s6 + $0xf8] sm:$0xff]
        %v1004 = vld [vmem:[%s6 + $0x100] sm:$0xff]
        %v1005 = vld [vmem:[%s6 + $0x108] sm:$0xff]
        %v1006 = vld [vmem:[%s6 + $0x110] sm:$0xff]
        %v1007 = vld [vmem:[%s6 + $0x118] sm:$0xff]
        %v1008 = vld [vmem:[%s6 + $0x120] sm:$0xff]
        %v1009 = vld [vmem:[%s6 + $0x128] sm:$0xff]
        %v1010 = vld [vmem:[%s6 + $0x130] sm:$0xff]
        %v1011 = vld [vmem:[%s6 + $0x138] sm:$0xff]
        %v1012 = vld [vmem:[%s6 + $0x140] sm:$0xff]
        %v1013 = vld [vmem:[%s6 + $0x148] sm:$0xff]
        %v1014 = vld [vmem:[%s6 + $0x150] sm:$0xff]
        %v1015 = vld [vmem:[%s6 + $0x158] sm:$0xff]
        %v1016 = vld [vmem:[%s6 + $0x160] sm:$0xff]
        %v1017 = vld [vmem:[%s6 + $0x168] sm:$0xff]
        %v1018 = vld [vmem:[%s6 + $0x170] sm:$0xff]
        %v1019 = vld [vmem:[%s6 + $0x178] sm:$0xff]
        %v1020 = vld [vmem:[%s6 + $0x180] sm:$0xff]
        %v1021 = vld [vmem:[%s6 + $0x188] sm:$0xff]
        %v1022 = vld [vmem:[%s6 + $0x190] sm:$0xff]
        %v1023 = vld [vmem:[%s6 + $0x198] sm:$0xff]
        %v1024 = vld [vmem:[%s6 + $0x1a0] sm:$0xff]
        %v1025 = vld [vmem:[%s6 + $0x1a8] sm:$0xff]
        %v1026 = vld [vmem:[%s6 + $0x1b0] sm:$0xff]
        %v1027 = vld [vmem:[%s6 + $0x1b8] sm:$0xff]
        %v1028 = vld [vmem:[%s6 + $0x1c0] sm:$0xff]
        %v1029 = vld [vmem:[%s6 + $0x1c8] sm:$0xff]
        %v1030 = vld [vmem:[%s6 + $0x1d0] sm:$0xff]
        %v1031 = vld [vmem:[%s6 + $0x1d8] sm:$0xff]
        %v1032 = vld [vmem:[%s6 + $0x1e0] sm:$0xff]
        %v1033 = vld [vmem:[%s6 + $0x1e8] sm:$0xff]
        %v1034 = vld [vmem:[%s6 + $0x1f0] sm:$0xff]
        %v1035 = vld [vmem:[%s6 + $0x1f8] sm:$0xff]
        %v1036 = vld [vmem:[%s7] sm:$0x1]
        %v1037 = vld [vmem:[%s7 + $0x1] sm:$0x1]
        %v1038 = vld [vmem:[%s7 + $0x2] sm:$0x1]
        %v1039 = vld [vmem:[%s7 + $0x3] sm:$0x1]
        %v1044 = vlaneseq
        %v1045 = vshrl.u32 %v1044, 7
        %v1046 = vsub.s32 0, %v1045
        %v1047 = vrot.slane %v1036, %v1046
        %v1048 = vlaneseq
        %v1049 = vshrl.u32 %v1048, 7
        %v1050 = vsub.s32 0, %v1049
        %v1051 = vrot.slane %v1037, %v1050
        %v1052 = vlaneseq
        %v1053 = vshrl.u32 %v1052, 7
        %v1054 = vsub.s32 0, %v1053
        %v1055 = vrot.slane %v1038, %v1054
        %v1056 = vlaneseq
        %v1057 = vshrl.u32 %v1056, 7
        %v1058 = vsub.s32 0, %v1057
        %v1059 = vrot.slane %v1039, %v1058
        %1064 = vmatprep.subr.mxu0 0.0
        %1065 = vmatpush1.msra.mxu0 %v972
        %1066 = vmatprep.subr.mxu0 0.0
        %1067 = vmatpush1.msra.mxu0 %v973
        %1068 = vmatprep.subr.mxu0 0.0
        %1069 = vmatpush1.msra.mxu0 %v974
        %1070 = vmatprep.subr.mxu0 0.0
        %1071 = vmatpush1.msra.mxu0 %v975
        %1072 = vmatprep.subr.mxu0 0.0
        %1073 = vmatpush1.msra.mxu0 %v976
        %1074 = vmatprep.subr.mxu0 0.0
        %1075 = vmatpush1.msra.mxu0 %v977
        %1076 = vmatprep.subr.mxu0 0.0
        %1077 = vmatpush1.msra.mxu0 %v978
        %1078 = vmatprep.subr.mxu0 0.0
        %1079 = vmatpush1.msra.mxu0 %v979
        %1080 = vmatprep.subr.mxu0 0.0
        %1081 = vmatpush1.msra.mxu0 %v980
        %1082 = vmatprep.subr.mxu0 0.0
        %1083 = vmatpush1.msra.mxu0 %v981
        %1084 = vmatprep.subr.mxu0 0.0
        %1085 = vmatpush1.msra.mxu0 %v982
        %1086 = vmatprep.subr.mxu0 0.0
        %1087 = vmatpush1.msra.mxu0 %v983
        %1088 = vmatprep.subr.mxu0 0.0
        %1089 = vmatpush1.msra.mxu0 %v984
        %1090 = vmatprep.subr.mxu0 0.0
        %1091 = vmatpush1.msra.mxu0 %v985
        %1092 = vmatprep.subr.mxu0 0.0
        %1093 = vmatpush1.msra.mxu0 %v986
        %1094 = vmatprep.subr.mxu0 0.0
        %1095 = vmatpush1.msra.mxu0 %v987
        %1096 = vmatprep.subr.mxu0 0.0
        %1097 = vmatpush1.msra.mxu0 0.0
        %1098 = vmatprep.subr.mxu0 0.0
        %1099 = vmatpush1.msra.mxu0 0.0
        %1100 = vmatprep.subr.mxu0 0.0
        %1101 = vmatpush1.msra.mxu0 0.0
        %1102 = vmatprep.subr.mxu0 0.0
        %1103 = vmatpush1.msra.mxu0 0.0
        %1104 = vmatprep.subr.mxu0 0.0
        %1105 = vmatpush1.msra.mxu0 0.0
        %1106 = vmatprep.subr.mxu0 0.0
        %1107 = vmatpush1.msra.mxu0 0.0
        %1108 = vmatprep.subr.mxu0 0.0
        %1109 = vmatpush1.msra.mxu0 0.0
        %1110 = vmatprep.subr.mxu0 0.0
        %1111 = vmatpush1.msra.mxu0 0.0
        %1112 = vmatprep.subr.mxu0 0.0
        %1113 = vmatpush1.msra.mxu0 0.0
        %1114 = vmatprep.subr.mxu0 0.0
        %1115 = vmatpush1.msra.mxu0 0.0
        %1116 = vmatprep.subr.mxu0 0.0
        %1117 = vmatpush1.msra.mxu0 0.0
        %1118 = vmatprep.subr.mxu0 0.0
        %1119 = vmatpush1.msra.mxu0 0.0
        %1120 = vmatprep.subr.mxu0 0.0
        %1121 = vmatpush1.msra.mxu0 0.0
        %1122 = vmatprep.subr.mxu0 0.0
        %1123 = vmatpush1.msra.mxu0 0.0
        %1124 = vmatprep.subr.mxu0 0.0
        %1125 = vmatpush1.msra.mxu0 0.0
        %1126 = vmatprep.subr.mxu0 0.0
        %1127 = vmatpush1.msra.mxu0 0.0
        %1128 = vmatprep.mubr.f32.mxu0 0.0
        %1129 = vmatmul.mubr.f32.gmra.mrb[0].mxu0 %v599
        %v1130 = vpop.f32.mrb[0].mxu0
        %v1131 = vadd.f32 %v1047, %v1130
        %v1132 = vpop.f32.mrb[0].mxu0
        %1133 = vdwg.mxu0
        %1134 = vmatprep.subr.mxu0 0.0
        %1135 = vmatpush1.msra.mxu0 %v988
        %1136 = vmatprep.subr.mxu0 0.0
        %1137 = vmatpush1.msra.mxu0 %v989
        %1138 = vmatprep.subr.mxu0 0.0
        %1139 = vmatpush1.msra.mxu0 %v990
        %1140 = vmatprep.subr.mxu0 0.0
        %1141 = vmatpush1.msra.mxu0 %v991
        %1142 = vmatprep.subr.mxu0 0.0
        %1143 = vmatpush1.msra.mxu0 %v992
        %1144 = vmatprep.subr.mxu0 0.0
        %1145 = vmatpush1.msra.mxu0 %v993
        %1146 = vmatprep.subr.mxu0 0.0
        %1147 = vmatpush1.msra.mxu0 %v994
        %1148 = vmatprep.subr.mxu0 0.0
        %1149 = vmatpush1.msra.mxu0 %v995
        %1150 = vmatprep.subr.mxu0 0.0
        %1151 = vmatpush1.msra.mxu0 %v996
        %1152 = vmatprep.subr.mxu0 0.0
        %1153 = vmatpush1.msra.mxu0 %v997
        %1154 = vmatprep.subr.mxu0 0.0
        %1155 = vmatpush1.msra.mxu0 %v998
        %1156 = vmatprep.subr.mxu0 0.0
        %1157 = vmatpush1.msra.mxu0 %v999
        %1158 = vmatprep.subr.mxu0 0.0
        %1159 = vmatpush1.msra.mxu0 %v1000
        %1160 = vmatprep.subr.mxu0 0.0
        %1161 = vmatpush1.msra.mxu0 %v1001
        %1162 = vmatprep.subr.mxu0 0.0
        %1163 = vmatpush1.msra.mxu0 %v1002
        %1164 = vmatprep.subr.mxu0 0.0
        %1165 = vmatpush1.msra.mxu0 %v1003
        %1166 = vmatprep.subr.mxu0 0.0
        %1167 = vmatpush1.msra.mxu0 0.0
        %1168 = vmatprep.subr.mxu0 0.0
        %1169 = vmatpush1.msra.mxu0 0.0
        %1170 = vmatprep.subr.mxu0 0.0
        %1171 = vmatpush1.msra.mxu0 0.0
        %1172 = vmatprep.subr.mxu0 0.0
        %1173 = vmatpush1.msra.mxu0 0.0
        %1174 = vmatprep.subr.mxu0 0.0
        %1175 = vmatpush1.msra.mxu0 0.0
        %1176 = vmatprep.subr.mxu0 0.0
        %1177 = vmatpush1.msra.mxu0 0.0
        %1178 = vmatprep.subr.mxu0 0.0
        %1179 = vmatpush1.msra.mxu0 0.0
        %1180 = vmatprep.subr.mxu0 0.0
        %1181 = vmatpush1.msra.mxu0 0.0
        %1182 = vmatprep.subr.mxu0 0.0
        %1183 = vmatpush1.msra.mxu0 0.0
        %1184 = vmatprep.subr.mxu0 0.0
        %1185 = vmatpush1.msra.mxu0 0.0
        %1186 = vmatprep.subr.mxu0 0.0
        %1187 = vmatpush1.msra.mxu0 0.0
        %1188 = vmatprep.subr.mxu0 0.0
        %1189 = vmatpush1.msra.mxu0 0.0
        %1190 = vmatprep.subr.mxu0 0.0
        %1191 = vmatpush1.msra.mxu0 0.0
        %1192 = vmatprep.subr.mxu0 0.0
        %1193 = vmatpush1.msra.mxu0 0.0
        %1194 = vmatprep.subr.mxu0 0.0
        %1195 = vmatpush1.msra.mxu0 0.0
        %1196 = vmatprep.subr.mxu0 0.0
        %1197 = vmatpush1.msra.mxu0 0.0
        %1198 = vmatprep.mubr.f32.mxu0 0.0
        %1199 = vmatmul.mubr.f32.gmra.mrb[0].mxu0 %v599
        %v1200 = vpop.f32.mrb[0].mxu0
        %v1201 = vadd.f32 %v1051, %v1200
        %v1202 = vpop.f32.mrb[0].mxu0
        %1203 = vdwg.mxu0
        %1204 = vmatprep.subr.mxu0 0.0
        %1205 = vmatpush1.msra.mxu0 %v1004
        %1206 = vmatprep.subr.mxu0 0.0
        %1207 = vmatpush1.msra.mxu0 %v1005
        %1208 = vmatprep.subr.mxu0 0.0
        %1209 = vmatpush1.msra.mxu0 %v1006
        %1210 = vmatprep.subr.mxu0 0.0
        %1211 = vmatpush1.msra.mxu0 %v1007
        %1212 = vmatprep.subr.mxu0 0.0
        %1213 = vmatpush1.msra.mxu0 %v1008
        %1214 = vmatprep.subr.mxu0 0.0
        %1215 = vmatpush1.msra.mxu0 %v1009
        %1216 = vmatprep.subr.mxu0 0.0
        %1217 = vmatpush1.msra.mxu0 %v1010
        %1218 = vmatprep.subr.mxu0 0.0
        %1219 = vmatpush1.msra.mxu0 %v1011
        %1220 = vmatprep.subr.mxu0 0.0
        %1221 = vmatpush1.msra.mxu0 %v1012
        %1222 = vmatprep.subr.mxu0 0.0
        %1223 = vmatpush1.msra.mxu0 %v1013
        %1224 = vmatprep.subr.mxu0 0.0
        %1225 = vmatpush1.msra.mxu0 %v1014
        %1226 = vmatprep.subr.mxu0 0.0
        %1227 = vmatpush1.msra.mxu0 %v1015
        %1228 = vmatprep.subr.mxu0 0.0
        %1229 = vmatpush1.msra.mxu0 %v1016
        %1230 = vmatprep.subr.mxu0 0.0
        %1231 = vmatpush1.msra.mxu0 %v1017
        %1232 = vmatprep.subr.mxu0 0.0
        %1233 = vmatpush1.msra.mxu0 %v1018
        %1234 = vmatprep.subr.mxu0 0.0
        %1235 = vmatpush1.msra.mxu0 %v1019
        %1236 = vmatprep.subr.mxu0 0.0
        %1237 = vmatpush1.msra.mxu0 0.0
        %1238 = vmatprep.subr.mxu0 0.0
        %1239 = vmatpush1.msra.mxu0 0.0
        %1240 = vmatprep.subr.mxu0 0.0
        %1241 = vmatpush1.msra.mxu0 0.0
        %1242 = vmatprep.subr.mxu0 0.0
        %1243 = vmatpush1.msra.mxu0 0.0
        %1244 = vmatprep.subr.mxu0 0.0
        %1245 = vmatpush1.msra.mxu0 0.0
        %1246 = vmatprep.subr.mxu0 0.0
        %1247 = vmatpush1.msra.mxu0 0.0
        %1248 = vmatprep.subr.mxu0 0.0
        %1249 = vmatpush1.msra.mxu0 0.0
        %1250 = vmatprep.subr.mxu0 0.0
        %1251 = vmatpush1.msra.mxu0 0.0
        %1252 = vmatprep.subr.mxu0 0.0
        %1253 = vmatpush1.msra.mxu0 0.0
        %1254 = vmatprep.subr.mxu0 0.0
        %1255 = vmatpush1.msra.mxu0 0.0
        %1256 = vmatprep.subr.mxu0 0.0
        %1257 = vmatpush1.msra.mxu0 0.0
        %1258 = vmatprep.subr.mxu0 0.0
        %1259 = vmatpush1.msra.mxu0 0.0
        %1260 = vmatprep.subr.mxu0 0.0
        %1261 = vmatpush1.msra.mxu0 0.0
        %1262 = vmatprep.subr.mxu0 0.0
        %1263 = vmatpush1.msra.mxu0 0.0
        %1264 = vmatprep.subr.mxu0 0.0
        %1265 = vmatpush1.msra.mxu0 0.0
        %1266 = vmatprep.subr.mxu0 0.0
        %1267 = vmatpush1.msra.mxu0 0.0
        %1268 = vmatprep.mubr.f32.mxu0 0.0
        %1269 = vmatmul.mubr.f32.gmra.mrb[0].mxu0 %v599
        %v1270 = vpop.f32.mrb[0].mxu0
        %v1271 = vadd.f32 %v1055, %v1270
        %v1272 = vpop.f32.mrb[0].mxu0
        %1273 = vdwg.mxu0
        %1274 = vmatprep.subr.mxu0 0.0
        %1275 = vmatpush1.msra.mxu0 %v1020
        %1276 = vmatprep.subr.mxu0 0.0
        %1277 = vmatpush1.msra.mxu0 %v1021
        %1278 = vmatprep.subr.mxu0 0.0
        %1279 = vmatpush1.msra.mxu0 %v1022
        %1280 = vmatprep.subr.mxu0 0.0
        %1281 = vmatpush1.msra.mxu0 %v1023
        %1282 = vmatprep.subr.mxu0 0.0
        %1283 = vmatpush1.msra.mxu0 %v1024
        %1284 = vmatprep.subr.mxu0 0.0
        %1285 = vmatpush1.msra.mxu0 %v1025
        %1286 = vmatprep.subr.mxu0 0.0
        %1287 = vmatpush1.msra.mxu0 %v1026
        %1288 = vmatprep.subr.mxu0 0.0
        %1289 = vmatpush1.msra.mxu0 %v1027
        %1290 = vmatprep.subr.mxu0 0.0
        %1291 = vmatpush1.msra.mxu0 %v1028
        %1292 = vmatprep.subr.mxu0 0.0
        %1293 = vmatpush1.msra.mxu0 %v1029
        %1294 = vmatprep.subr.mxu0 0.0
        %1295 = vmatpush1.msra.mxu0 %v1030
        %1296 = vmatprep.subr.mxu0 0.0
        %1297 = vmatpush1.msra.mxu0 %v1031
        %1298 = vmatprep.subr.mxu0 0.0
        %1299 = vmatpush1.msra.mxu0 %v1032
        %1300 = vmatprep.subr.mxu0 0.0
        %1301 = vmatpush1.msra.mxu0 %v1033
        %1302 = vmatprep.subr.mxu0 0.0
        %1303 = vmatpush1.msra.mxu0 %v1034
        %1304 = vmatprep.subr.mxu0 0.0
        %1305 = vmatpush1.msra.mxu0 %v1035
        %1306 = vmatprep.subr.mxu0 0.0
        %1307 = vmatpush1.msra.mxu0 0.0
        %1308 = vmatprep.subr.mxu0 0.0
        %1309 = vmatpush1.msra.mxu0 0.0
        %1310 = vmatprep.subr.mxu0 0.0
        %1311 = vmatpush1.msra.mxu0 0.0
        %1312 = vmatprep.subr.mxu0 0.0
        %1313 = vmatpush1.msra.mxu0 0.0
        %1314 = vmatprep.subr.mxu0 0.0
        %1315 = vmatpush1.msra.mxu0 0.0
        %1316 = vmatprep.subr.mxu0 0.0
        %1317 = vmatpush1.msra.mxu0 0.0
        %1318 = vmatprep.subr.mxu0 0.0
        %1319 = vmatpush1.msra.mxu0 0.0
        %1320 = vmatprep.subr.mxu0 0.0
        %1321 = vmatpush1.msra.mxu0 0.0
        %1322 = vmatprep.subr.mxu0 0.0
        %1323 = vmatpush1.msra.mxu0 0.0
        %1324 = vmatprep.subr.mxu0 0.0
        %1325 = vmatpush1.msra.mxu0 0.0
        %1326 = vmatprep.subr.mxu0 0.0
        %1327 = vmatpush1.msra.mxu0 0.0
        %1328 = vmatprep.subr.mxu0 0.0
        %1329 = vmatpush1.msra.mxu0 0.0
        %1330 = vmatprep.subr.mxu0 0.0
        %1331 = vmatpush1.msra.mxu0 0.0
        %1332 = vmatprep.subr.mxu0 0.0
        %1333 = vmatpush1.msra.mxu0 0.0
        %1334 = vmatprep.subr.mxu0 0.0
        %1335 = vmatpush1.msra.mxu0 0.0
        %1336 = vmatprep.subr.mxu0 0.0
        %1337 = vmatpush1.msra.mxu0 0.0
        %1338 = vmatprep.mubr.f32.mxu0 0.0
        %1339 = vmatmul.mubr.f32.gmra.mrb[0].mxu0 %v599
        %v1340 = vpop.f32.mrb[0].mxu0
        %v1341 = vadd.f32 %v1059, %v1340
        %v1342 = vpop.f32.mrb[0].mxu0
        %1343 = vdwg.mxu0
        %v1344 = vld [vmem:[%s8] sm:$0xff]
        %v1345 = vld [vmem:[%s8 + $0x8] sm:$0xff]
        %v1346 = vld [vmem:[%s8 + $0x10] sm:$0xff]
        %v1347 = vld [vmem:[%s8 + $0x18] sm:$0xff]
        %v1348 = vld [vmem:[%s8 + $0x20] sm:$0xff]
        %v1349 = vld [vmem:[%s8 + $0x28] sm:$0xff]
        %v1350 = vld [vmem:[%s8 + $0x30] sm:$0xff]
        %v1351 = vld [vmem:[%s8 + $0x38] sm:$0xff]
        %v1352 = vld [vmem:[%s8 + $0x40] sm:$0xff]
        %v1353 = vld [vmem:[%s8 + $0x48] sm:$0xff]
        %v1354 = vld [vmem:[%s8 + $0x50] sm:$0xff]
        %v1355 = vld [vmem:[%s8 + $0x58] sm:$0xff]
        %v1356 = vld [vmem:[%s8 + $0x60] sm:$0xff]
        %v1357 = vld [vmem:[%s8 + $0x68] sm:$0xff]
        %v1358 = vld [vmem:[%s8 + $0x70] sm:$0xff]
        %v1359 = vld [vmem:[%s8 + $0x78] sm:$0xff]
        %v1360 = vld [vmem:[%s8 + $0x80] sm:$0xff]
        %v1361 = vld [vmem:[%s8 + $0x88] sm:$0xff]
        %v1362 = vld [vmem:[%s8 + $0x90] sm:$0xff]
        %v1363 = vld [vmem:[%s8 + $0x98] sm:$0xff]
        %v1364 = vld [vmem:[%s8 + $0xa0] sm:$0xff]
        %v1365 = vld [vmem:[%s8 + $0xa8] sm:$0xff]
        %v1366 = vld [vmem:[%s8 + $0xb0] sm:$0xff]
        %v1367 = vld [vmem:[%s8 + $0xb8] sm:$0xff]
        %v1368 = vld [vmem:[%s8 + $0xc0] sm:$0xff]
        %v1369 = vld [vmem:[%s8 + $0xc8] sm:$0xff]
        %v1370 = vld [vmem:[%s8 + $0xd0] sm:$0xff]
        %v1371 = vld [vmem:[%s8 + $0xd8] sm:$0xff]
        %v1372 = vld [vmem:[%s8 + $0xe0] sm:$0xff]
        %v1373 = vld [vmem:[%s8 + $0xe8] sm:$0xff]
        %v1374 = vld [vmem:[%s8 + $0xf0] sm:$0xff]
        %v1375 = vld [vmem:[%s8 + $0xf8] sm:$0xff]
        %v1376 = vld [vmem:[%s8 + $0x100] sm:$0xff]
        %v1377 = vld [vmem:[%s8 + $0x108] sm:$0xff]
        %v1378 = vld [vmem:[%s8 + $0x110] sm:$0xff]
        %v1379 = vld [vmem:[%s8 + $0x118] sm:$0xff]
        %v1380 = vld [vmem:[%s8 + $0x120] sm:$0xff]
        %v1381 = vld [vmem:[%s8 + $0x128] sm:$0xff]
        %v1382 = vld [vmem:[%s8 + $0x130] sm:$0xff]
        %v1383 = vld [vmem:[%s8 + $0x138] sm:$0xff]
        %v1384 = vld [vmem:[%s8 + $0x140] sm:$0xff]
        %v1385 = vld [vmem:[%s8 + $0x148] sm:$0xff]
        %v1386 = vld [vmem:[%s8 + $0x150] sm:$0xff]
        %v1387 = vld [vmem:[%s8 + $0x158] sm:$0xff]
        %v1388 = vld [vmem:[%s8 + $0x160] sm:$0xff]
        %v1389 = vld [vmem:[%s8 + $0x168] sm:$0xff]
        %v1390 = vld [vmem:[%s8 + $0x170] sm:$0xff]
        %v1391 = vld [vmem:[%s8 + $0x178] sm:$0xff]
        %v1392 = vld [vmem:[%s8 + $0x180] sm:$0xff]
        %v1393 = vld [vmem:[%s8 + $0x188] sm:$0xff]
        %v1394 = vld [vmem:[%s8 + $0x190] sm:$0xff]
        %v1395 = vld [vmem:[%s8 + $0x198] sm:$0xff]
        %v1396 = vld [vmem:[%s8 + $0x1a0] sm:$0xff]
        %v1397 = vld [vmem:[%s8 + $0x1a8] sm:$0xff]
        %v1398 = vld [vmem:[%s8 + $0x1b0] sm:$0xff]
        %v1399 = vld [vmem:[%s8 + $0x1b8] sm:$0xff]
        %v1400 = vld [vmem:[%s8 + $0x1c0] sm:$0xff]
        %v1401 = vld [vmem:[%s8 + $0x1c8] sm:$0xff]
        %v1402 = vld [vmem:[%s8 + $0x1d0] sm:$0xff]
        %v1403 = vld [vmem:[%s8 + $0x1d8] sm:$0xff]
        %v1404 = vld [vmem:[%s8 + $0x1e0] sm:$0xff]
        %v1405 = vld [vmem:[%s8 + $0x1e8] sm:$0xff]
        %v1406 = vld [vmem:[%s8 + $0x1f0] sm:$0xff]
        %v1407 = vld [vmem:[%s8 + $0x1f8] sm:$0xff]
        %v1408 = vld [vmem:[%s9] sm:$0x1]
        %v1409 = vld [vmem:[%s9 + $0x1] sm:$0x1]
        %v1410 = vld [vmem:[%s9 + $0x2] sm:$0x1]
        %v1411 = vld [vmem:[%s9 + $0x3] sm:$0x1]
        %v1416 = vlaneseq
        %v1417 = vshrl.u32 %v1416, 7
        %v1418 = vsub.s32 0, %v1417
        %v1419 = vrot.slane %v1408, %v1418
        %v1420 = vlaneseq
        %v1421 = vshrl.u32 %v1420, 7
        %v1422 = vsub.s32 0, %v1421
        %v1423 = vrot.slane %v1409, %v1422
        %v1424 = vlaneseq
        %v1425 = vshrl.u32 %v1424, 7
        %v1426 = vsub.s32 0, %v1425
        %v1427 = vrot.slane %v1410, %v1426
        %v1428 = vlaneseq
        %v1429 = vshrl.u32 %v1428, 7
        %v1430 = vsub.s32 0, %v1429
        %v1431 = vrot.slane %v1411, %v1430
        %1436 = vmatprep.subr.mxu0 0.0
        %1437 = vmatpush1.msra.mxu0 %v1344
        %1438 = vmatprep.subr.mxu0 0.0
        %1439 = vmatpush1.msra.mxu0 %v1345
        %1440 = vmatprep.subr.mxu0 0.0
        %1441 = vmatpush1.msra.mxu0 %v1346
        %1442 = vmatprep.subr.mxu0 0.0
        %1443 = vmatpush1.msra.mxu0 %v1347
        %1444 = vmatprep.subr.mxu0 0.0
        %1445 = vmatpush1.msra.mxu0 %v1348
        %1446 = vmatprep.subr.mxu0 0.0
        %1447 = vmatpush1.msra.mxu0 %v1349
        %1448 = vmatprep.subr.mxu0 0.0
        %1449 = vmatpush1.msra.mxu0 %v1350
        %1450 = vmatprep.subr.mxu0 0.0
        %1451 = vmatpush1.msra.mxu0 %v1351
        %1452 = vmatprep.subr.mxu0 0.0
        %1453 = vmatpush1.msra.mxu0 %v1352
        %1454 = vmatprep.subr.mxu0 0.0
        %1455 = vmatpush1.msra.mxu0 %v1353
        %1456 = vmatprep.subr.mxu0 0.0
        %1457 = vmatpush1.msra.mxu0 %v1354
        %1458 = vmatprep.subr.mxu0 0.0
        %1459 = vmatpush1.msra.mxu0 %v1355
        %1460 = vmatprep.subr.mxu0 0.0
        %1461 = vmatpush1.msra.mxu0 %v1356
        %1462 = vmatprep.subr.mxu0 0.0
        %1463 = vmatpush1.msra.mxu0 %v1357
        %1464 = vmatprep.subr.mxu0 0.0
        %1465 = vmatpush1.msra.mxu0 %v1358
        %1466 = vmatprep.subr.mxu0 0.0
        %1467 = vmatpush1.msra.mxu0 %v1359
        %1468 = vmatprep.subr.mxu0 0.0
        %1469 = vmatpush1.msra.mxu0 0.0
        %1470 = vmatprep.subr.mxu0 0.0
        %1471 = vmatpush1.msra.mxu0 0.0
        %1472 = vmatprep.subr.mxu0 0.0
        %1473 = vmatpush1.msra.mxu0 0.0
        %1474 = vmatprep.subr.mxu0 0.0
        %1475 = vmatpush1.msra.mxu0 0.0
        %1476 = vmatprep.subr.mxu0 0.0
        %1477 = vmatpush1.msra.mxu0 0.0
        %1478 = vmatprep.subr.mxu0 0.0
        %1479 = vmatpush1.msra.mxu0 0.0
        %1480 = vmatprep.subr.mxu0 0.0
        %1481 = vmatpush1.msra.mxu0 0.0
        %1482 = vmatprep.subr.mxu0 0.0
        %1483 = vmatpush1.msra.mxu0 0.0
        %1484 = vmatprep.subr.mxu0 0.0
        %1485 = vmatpush1.msra.mxu0 0.0
        %1486 = vmatprep.subr.mxu0 0.0
        %1487 = vmatpush1.msra.mxu0 0.0
        %1488 = vmatprep.subr.mxu0 0.0
        %1489 = vmatpush1.msra.mxu0 0.0
        %1490 = vmatprep.subr.mxu0 0.0
        %1491 = vmatpush1.msra.mxu0 0.0
        %1492 = vmatprep.subr.mxu0 0.0
        %1493 = vmatpush1.msra.mxu0 0.0
        %1494 = vmatprep.subr.mxu0 0.0
        %1495 = vmatpush1.msra.mxu0 0.0
        %1496 = vmatprep.subr.mxu0 0.0
        %1497 = vmatpush1.msra.mxu0 0.0
        %1498 = vmatprep.subr.mxu0 0.0
        %1499 = vmatpush1.msra.mxu0 0.0
        %1500 = vmatprep.mubr.f32.mxu0 0.0
        %1501 = vmatmul.mubr.f32.gmra.mrb[0].mxu0 %v599
        %v1502 = vpop.f32.mrb[0].mxu0
        %v1503 = vadd.f32 %v1419, %v1502
        %v1504 = vpop.f32.mrb[0].mxu0
        %1505 = vdwg.mxu0
        %1506 = vmatprep.subr.mxu0 0.0
        %1507 = vmatpush1.msra.mxu0 %v1360
        %1508 = vmatprep.subr.mxu0 0.0
        %1509 = vmatpush1.msra.mxu0 %v1361
        %1510 = vmatprep.subr.mxu0 0.0
        %1511 = vmatpush1.msra.mxu0 %v1362
        %1512 = vmatprep.subr.mxu0 0.0
        %1513 = vmatpush1.msra.mxu0 %v1363
        %1514 = vmatprep.subr.mxu0 0.0
        %1515 = vmatpush1.msra.mxu0 %v1364
        %1516 = vmatprep.subr.mxu0 0.0
        %1517 = vmatpush1.msra.mxu0 %v1365
        %1518 = vmatprep.subr.mxu0 0.0
        %1519 = vmatpush1.msra.mxu0 %v1366
        %1520 = vmatprep.subr.mxu0 0.0
        %1521 = vmatpush1.msra.mxu0 %v1367
        %1522 = vmatprep.subr.mxu0 0.0
        %1523 = vmatpush1.msra.mxu0 %v1368
        %1524 = vmatprep.subr.mxu0 0.0
        %1525 = vmatpush1.msra.mxu0 %v1369
        %1526 = vmatprep.subr.mxu0 0.0
        %1527 = vmatpush1.msra.mxu0 %v1370
        %1528 = vmatprep.subr.mxu0 0.0
        %1529 = vmatpush1.msra.mxu0 %v1371
        %1530 = vmatprep.subr.mxu0 0.0
        %1531 = vmatpush1.msra.mxu0 %v1372
        %1532 = vmatprep.subr.mxu0 0.0
        %1533 = vmatpush1.msra.mxu0 %v1373
        %1534 = vmatprep.subr.mxu0 0.0
        %1535 = vmatpush1.msra.mxu0 %v1374
        %1536 = vmatprep.subr.mxu0 0.0
        %1537 = vmatpush1.msra.mxu0 %v1375
        %1538 = vmatprep.subr.mxu0 0.0
        %1539 = vmatpush1.msra.mxu0 0.0
        %1540 = vmatprep.subr.mxu0 0.0
        %1541 = vmatpush1.msra.mxu0 0.0
        %1542 = vmatprep.subr.mxu0 0.0
        %1543 = vmatpush1.msra.mxu0 0.0
        %1544 = vmatprep.subr.mxu0 0.0
        %1545 = vmatpush1.msra.mxu0 0.0
        %1546 = vmatprep.subr.mxu0 0.0
        %1547 = vmatpush1.msra.mxu0 0.0
        %1548 = vmatprep.subr.mxu0 0.0
        %1549 = vmatpush1.msra.mxu0 0.0
        %1550 = vmatprep.subr.mxu0 0.0
        %1551 = vmatpush1.msra.mxu0 0.0
        %1552 = vmatprep.subr.mxu0 0.0
        %1553 = vmatpush1.msra.mxu0 0.0
        %1554 = vmatprep.subr.mxu0 0.0
        %1555 = vmatpush1.msra.mxu0 0.0
        %1556 = vmatprep.subr.mxu0 0.0
        %1557 = vmatpush1.msra.mxu0 0.0
        %1558 = vmatprep.subr.mxu0 0.0
        %1559 = vmatpush1.msra.mxu0 0.0
        %1560 = vmatprep.subr.mxu0 0.0
        %1561 = vmatpush1.msra.mxu0 0.0
        %1562 = vmatprep.subr.mxu0 0.0
        %1563 = vmatpush1.msra.mxu0 0.0
        %1564 = vmatprep.subr.mxu0 0.0
        %1565 = vmatpush1.msra.mxu0 0.0
        %1566 = vmatprep.subr.mxu0 0.0
        %1567 = vmatpush1.msra.mxu0 0.0
        %1568 = vmatprep.subr.mxu0 0.0
        %1569 = vmatpush1.msra.mxu0 0.0
        %1570 = vmatprep.mubr.f32.mxu0 0.0
        %1571 = vmatmul.mubr.f32.gmra.mrb[0].mxu0 %v599
        %v1572 = vpop.f32.mrb[0].mxu0
        %v1573 = vadd.f32 %v1423, %v1572
        %v1574 = vpop.f32.mrb[0].mxu0
        %1575 = vdwg.mxu0
        %1576 = vmatprep.subr.mxu0 0.0
        %1577 = vmatpush1.msra.mxu0 %v1376
        %1578 = vmatprep.subr.mxu0 0.0
        %1579 = vmatpush1.msra.mxu0 %v1377
        %1580 = vmatprep.subr.mxu0 0.0
        %1581 = vmatpush1.msra.mxu0 %v1378
        %1582 = vmatprep.subr.mxu0 0.0
        %1583 = vmatpush1.msra.mxu0 %v1379
        %1584 = vmatprep.subr.mxu0 0.0
        %1585 = vmatpush1.msra.mxu0 %v1380
        %1586 = vmatprep.subr.mxu0 0.0
        %1587 = vmatpush1.msra.mxu0 %v1381
        %1588 = vmatprep.subr.mxu0 0.0
        %1589 = vmatpush1.msra.mxu0 %v1382
        %1590 = vmatprep.subr.mxu0 0.0
        %1591 = vmatpush1.msra.mxu0 %v1383
        %1592 = vmatprep.subr.mxu0 0.0
        %1593 = vmatpush1.msra.mxu0 %v1384
        %1594 = vmatprep.subr.mxu0 0.0
        %1595 = vmatpush1.msra.mxu0 %v1385
        %1596 = vmatprep.subr.mxu0 0.0
        %1597 = vmatpush1.msra.mxu0 %v1386
        %1598 = vmatprep.subr.mxu0 0.0
        %1599 = vmatpush1.msra.mxu0 %v1387
        %1600 = vmatprep.subr.mxu0 0.0
        %1601 = vmatpush1.msra.mxu0 %v1388
        %1602 = vmatprep.subr.mxu0 0.0
        %1603 = vmatpush1.msra.mxu0 %v1389
        %1604 = vmatprep.subr.mxu0 0.0
        %1605 = vmatpush1.msra.mxu0 %v1390
        %1606 = vmatprep.subr.mxu0 0.0
        %1607 = vmatpush1.msra.mxu0 %v1391
        %1608 = vmatprep.subr.mxu0 0.0
        %1609 = vmatpush1.msra.mxu0 0.0
        %1610 = vmatprep.subr.mxu0 0.0
        %1611 = vmatpush1.msra.mxu0 0.0
        %1612 = vmatprep.subr.mxu0 0.0
        %1613 = vmatpush1.msra.mxu0 0.0
        %1614 = vmatprep.subr.mxu0 0.0
        %1615 = vmatpush1.msra.mxu0 0.0
        %1616 = vmatprep.subr.mxu0 0.0
        %1617 = vmatpush1.msra.mxu0 0.0
        %1618 = vmatprep.subr.mxu0 0.0
        %1619 = vmatpush1.msra.mxu0 0.0
        %1620 = vmatprep.subr.mxu0 0.0
        %1621 = vmatpush1.msra.mxu0 0.0
        %1622 = vmatprep.subr.mxu0 0.0
        %1623 = vmatpush1.msra.mxu0 0.0
        %1624 = vmatprep.subr.mxu0 0.0
        %1625 = vmatpush1.msra.mxu0 0.0
        %1626 = vmatprep.subr.mxu0 0.0
        %1627 = vmatpush1.msra.mxu0 0.0
        %1628 = vmatprep.subr.mxu0 0.0
        %1629 = vmatpush1.msra.mxu0 0.0
        %1630 = vmatprep.subr.mxu0 0.0
        %1631 = vmatpush1.msra.mxu0 0.0
        %1632 = vmatprep.subr.mxu0 0.0
        %1633 = vmatpush1.msra.mxu0 0.0
        %1634 = vmatprep.subr.mxu0 0.0
        %1635 = vmatpush1.msra.mxu0 0.0
        %1636 = vmatprep.subr.mxu0 0.0
        %1637 = vmatpush1.msra.mxu0 0.0
        %1638 = vmatprep.subr.mxu0 0.0
        %1639 = vmatpush1.msra.mxu0 0.0
        %1640 = vmatprep.mubr.f32.mxu0 0.0
        %1641 = vmatmul.mubr.f32.gmra.mrb[0].mxu0 %v599
        %v1642 = vpop.f32.mrb[0].mxu0
        %v1643 = vadd.f32 %v1427, %v1642
        %v1644 = vpop.f32.mrb[0].mxu0
        %1645 = vdwg.mxu0
        %1646 = vmatprep.subr.mxu0 0.0
        %1647 = vmatpush1.msra.mxu0 %v1392
        %1648 = vmatprep.subr.mxu0 0.0
        %1649 = vmatpush1.msra.mxu0 %v1393
        %1650 = vmatprep.subr.mxu0 0.0
        %1651 = vmatpush1.msra.mxu0 %v1394
        %1652 = vmatprep.subr.mxu0 0.0
        %1653 = vmatpush1.msra.mxu0 %v1395
        %1654 = vmatprep.subr.mxu0 0.0
        %1655 = vmatpush1.msra.mxu0 %v1396
        %1656 = vmatprep.subr.mxu0 0.0
        %1657 = vmatpush1.msra.mxu0 %v1397
        %1658 = vmatprep.subr.mxu0 0.0
        %1659 = vmatpush1.msra.mxu0 %v1398
        %1660 = vmatprep.subr.mxu0 0.0
        %1661 = vmatpush1.msra.mxu0 %v1399
        %1662 = vmatprep.subr.mxu0 0.0
        %1663 = vmatpush1.msra.mxu0 %v1400
        %1664 = vmatprep.subr.mxu0 0.0
        %1665 = vmatpush1.msra.mxu0 %v1401
        %1666 = vmatprep.subr.mxu0 0.0
        %1667 = vmatpush1.msra.mxu0 %v1402
        %1668 = vmatprep.subr.mxu0 0.0
        %1669 = vmatpush1.msra.mxu0 %v1403
        %1670 = vmatprep.subr.mxu0 0.0
        %1671 = vmatpush1.msra.mxu0 %v1404
        %1672 = vmatprep.subr.mxu0 0.0
        %1673 = vmatpush1.msra.mxu0 %v1405
        %1674 = vmatprep.subr.mxu0 0.0
        %1675 = vmatpush1.msra.mxu0 %v1406
        %1676 = vmatprep.subr.mxu0 0.0
        %1677 = vmatpush1.msra.mxu0 %v1407
        %1678 = vmatprep.subr.mxu0 0.0
        %1679 = vmatpush1.msra.mxu0 0.0
        %1680 = vmatprep.subr.mxu0 0.0
        %1681 = vmatpush1.msra.mxu0 0.0
        %1682 = vmatprep.subr.mxu0 0.0
        %1683 = vmatpush1.msra.mxu0 0.0
        %1684 = vmatprep.subr.mxu0 0.0
        %1685 = vmatpush1.msra.mxu0 0.0
        %1686 = vmatprep.subr.mxu0 0.0
        %1687 = vmatpush1.msra.mxu0 0.0
        %1688 = vmatprep.subr.mxu0 0.0
        %1689 = vmatpush1.msra.mxu0 0.0
        %1690 = vmatprep.subr.mxu0 0.0
        %1691 = vmatpush1.msra.mxu0 0.0
        %1692 = vmatprep.subr.mxu0 0.0
        %1693 = vmatpush1.msra.mxu0 0.0
        %1694 = vmatprep.subr.mxu0 0.0
        %1695 = vmatpush1.msra.mxu0 0.0
        %1696 = vmatprep.subr.mxu0 0.0
        %1697 = vmatpush1.msra.mxu0 0.0
        %1698 = vmatprep.subr.mxu0 0.0
        %1699 = vmatpush1.msra.mxu0 0.0
        %1700 = vmatprep.subr.mxu0 0.0
        %1701 = vmatpush1.msra.mxu0 0.0
        %1702 = vmatprep.subr.mxu0 0.0
        %1703 = vmatpush1.msra.mxu0 0.0
        %1704 = vmatprep.subr.mxu0 0.0
        %1705 = vmatpush1.msra.mxu0 0.0
        %1706 = vmatprep.subr.mxu0 0.0
        %1707 = vmatpush1.msra.mxu0 0.0
        %1708 = vmatprep.subr.mxu0 0.0
        %1709 = vmatpush1.msra.mxu0 0.0
        %1710 = vmatprep.mubr.f32.mxu0 0.0
        %1711 = vmatmul.mubr.f32.gmra.mrb[0].mxu0 %v599
        %v1712 = vpop.f32.mrb[0].mxu0
        %v1713 = vadd.f32 %v1431, %v1712
        %v1714 = vpop.f32.mrb[0].mxu0
        %1715 = vdwg.mxu0
        %vm1716 = vcmask 261120
        %v1718 = vsel %vm1716, %v759, 0
        %v1721 = vsel %vm1716, %v1131, 0
        %1723 = vmatprep.subr.mxu0 0.0
        %1724 = vmatpush1.xpose.msra.mxu0 %v1721
        %1725 = vmatprep.subr.mxu0 0.0
        %1726 = vmatpush1.xpose.msra.mxu0 0.0
        %1727 = vmatprep.subr.mxu0 0.0
        %1728 = vmatpush1.xpose.msra.mxu0 0.0
        %1729 = vmatprep.subr.mxu0 0.0
        %1730 = vmatpush1.xpose.msra.mxu0 0.0
        %1731 = vmatprep.subr.mxu0 0.0
        %1732 = vmatpush1.xpose.msra.mxu0 0.0
        %1733 = vmatprep.subr.mxu0 0.0
        %1734 = vmatpush1.xpose.msra.mxu0 0.0
        %1735 = vmatprep.subr.mxu0 0.0
        %1736 = vmatpush1.xpose.msra.mxu0 0.0
        %1737 = vmatprep.subr.mxu0 0.0
        %1738 = vmatpush1.xpose.msra.mxu0 0.0
        %1739 = vmatprep.subr.mxu0 0.0
        %1740 = vmatpush1.xpose.msra.mxu0 0.0
        %1741 = vmatprep.subr.mxu0 0.0
        %1742 = vmatpush1.xpose.msra.mxu0 0.0
        %1743 = vmatprep.subr.mxu0 0.0
        %1744 = vmatpush1.xpose.msra.mxu0 0.0
        %1745 = vmatprep.subr.mxu0 0.0
        %1746 = vmatpush1.xpose.msra.mxu0 0.0
        %1747 = vmatprep.subr.mxu0 0.0
        %1748 = vmatpush1.xpose.msra.mxu0 0.0
        %1749 = vmatprep.subr.mxu0 0.0
        %1750 = vmatpush1.xpose.msra.mxu0 0.0
        %1751 = vmatprep.subr.mxu0 0.0
        %1752 = vmatpush1.xpose.msra.mxu0 0.0
        %1753 = vmatprep.subr.mxu0 0.0
        %1754 = vmatpush1.xpose.msra.mxu0 0.0
        %1755 = vmatprep.subr.mxu0 0.0
        %1756 = vmatpush1.xpose.msra.mxu0 0.0
        %1757 = vmatprep.subr.mxu0 0.0
        %1758 = vmatpush1.xpose.msra.mxu0 0.0
        %1759 = vmatprep.subr.mxu0 0.0
        %1760 = vmatpush1.xpose.msra.mxu0 0.0
        %1761 = vmatprep.subr.mxu0 0.0
        %1762 = vmatpush1.xpose.msra.mxu0 0.0
        %1763 = vmatprep.subr.mxu0 0.0
        %1764 = vmatpush1.xpose.msra.mxu0 0.0
        %1765 = vmatprep.subr.mxu0 0.0
        %1766 = vmatpush1.xpose.msra.mxu0 0.0
        %1767 = vmatprep.subr.mxu0 0.0
        %1768 = vmatpush1.xpose.msra.mxu0 0.0
        %1769 = vmatprep.subr.mxu0 0.0
        %1770 = vmatpush1.xpose.msra.mxu0 0.0
        %1771 = vmatprep.subr.mxu0 0.0
        %1772 = vmatpush1.xpose.msra.mxu0 0.0
        %1773 = vmatprep.subr.mxu0 0.0
        %1774 = vmatpush1.xpose.msra.mxu0 0.0
        %1775 = vmatprep.subr.mxu0 0.0
        %1776 = vmatpush1.xpose.msra.mxu0 0.0
        %1777 = vmatprep.subr.mxu0 0.0
        %1778 = vmatpush1.xpose.msra.mxu0 0.0
        %1779 = vmatprep.subr.mxu0 0.0
        %1780 = vmatpush1.xpose.msra.mxu0 0.0
        %1781 = vmatprep.subr.mxu0 0.0
        %1782 = vmatpush1.xpose.msra.mxu0 0.0
        %1783 = vmatprep.subr.mxu0 0.0
        %1784 = vmatpush1.xpose.msra.mxu0 0.0
        %1785 = vmatprep.subr.mxu0 0.0
        %1786 = vmatpush1.xpose.msra.mxu0 0.0
        %1787 = vmatprep.mubr.f32.mxu0 0.0
        %1788 = vmatmul.mubr.f32.gmra.mrb[0].mxu0 %v1718
        %v1789 = vpop.f32.mrb[0].mxu0
        %v1790 = vadd.f32 0.0, %v1789
        %v1791 = vpop.f32.mrb[0].mxu0
        %1792 = vdwg.mxu0
        %v1794 = vsel %vm1716, %v829, 0
        %v1797 = vsel %vm1716, %v1201, 0
        %1799 = vmatprep.subr.mxu0 0.0
        %1800 = vmatpush1.xpose.msra.mxu0 %v1797
        %1801 = vmatprep.subr.mxu0 0.0
        %1802 = vmatpush1.xpose.msra.mxu0 0.0
        %1803 = vmatprep.subr.mxu0 0.0
        %1804 = vmatpush1.xpose.msra.mxu0 0.0
        %1805 = vmatprep.subr.mxu0 0.0
        %1806 = vmatpush1.xpose.msra.mxu0 0.0
        %1807 = vmatprep.subr.mxu0 0.0
        %1808 = vmatpush1.xpose.msra.mxu0 0.0
        %1809 = vmatprep.subr.mxu0 0.0
        %1810 = vmatpush1.xpose.msra.mxu0 0.0
        %1811 = vmatprep.subr.mxu0 0.0
        %1812 = vmatpush1.xpose.msra.mxu0 0.0
        %1813 = vmatprep.subr.mxu0 0.0
        %1814 = vmatpush1.xpose.msra.mxu0 0.0
        %1815 = vmatprep.subr.mxu0 0.0
        %1816 = vmatpush1.xpose.msra.mxu0 0.0
        %1817 = vmatprep.subr.mxu0 0.0
        %1818 = vmatpush1.xpose.msra.mxu0 0.0
        %1819 = vmatprep.subr.mxu0 0.0
        %1820 = vmatpush1.xpose.msra.mxu0 0.0
        %1821 = vmatprep.subr.mxu0 0.0
        %1822 = vmatpush1.xpose.msra.mxu0 0.0
        %1823 = vmatprep.subr.mxu0 0.0
        %1824 = vmatpush1.xpose.msra.mxu0 0.0
        %1825 = vmatprep.subr.mxu0 0.0
        %1826 = vmatpush1.xpose.msra.mxu0 0.0
        %1827 = vmatprep.subr.mxu0 0.0
        %1828 = vmatpush1.xpose.msra.mxu0 0.0
        %1829 = vmatprep.subr.mxu0 0.0
        %1830 = vmatpush1.xpose.msra.mxu0 0.0
        %1831 = vmatprep.subr.mxu0 0.0
        %1832 = vmatpush1.xpose.msra.mxu0 0.0
        %1833 = vmatprep.subr.mxu0 0.0
        %1834 = vmatpush1.xpose.msra.mxu0 0.0
        %1835 = vmatprep.subr.mxu0 0.0
        %1836 = vmatpush1.xpose.msra.mxu0 0.0
        %1837 = vmatprep.subr.mxu0 0.0
        %1838 = vmatpush1.xpose.msra.mxu0 0.0
        %1839 = vmatprep.subr.mxu0 0.0
        %1840 = vmatpush1.xpose.msra.mxu0 0.0
        %1841 = vmatprep.subr.mxu0 0.0
        %1842 = vmatpush1.xpose.msra.mxu0 0.0
        %1843 = vmatprep.subr.mxu0 0.0
        %1844 = vmatpush1.xpose.msra.mxu0 0.0
        %1845 = vmatprep.subr.mxu0 0.0
        %1846 = vmatpush1.xpose.msra.mxu0 0.0
        %1847 = vmatprep.subr.mxu0 0.0
        %1848 = vmatpush1.xpose.msra.mxu0 0.0
        %1849 = vmatprep.subr.mxu0 0.0
        %1850 = vmatpush1.xpose.msra.mxu0 0.0
        %1851 = vmatprep.subr.mxu0 0.0
        %1852 = vmatpush1.xpose.msra.mxu0 0.0
        %1853 = vmatprep.subr.mxu0 0.0
        %1854 = vmatpush1.xpose.msra.mxu0 0.0
        %1855 = vmatprep.subr.mxu0 0.0
        %1856 = vmatpush1.xpose.msra.mxu0 0.0
        %1857 = vmatprep.subr.mxu0 0.0
        %1858 = vmatpush1.xpose.msra.mxu0 0.0
        %1859 = vmatprep.subr.mxu0 0.0
        %1860 = vmatpush1.xpose.msra.mxu0 0.0
        %1861 = vmatprep.subr.mxu0 0.0
        %1862 = vmatpush1.xpose.msra.mxu0 0.0
        %1863 = vmatprep.mubr.f32.mxu0 0.0
        %1864 = vmatmul.mubr.f32.gmra.mrb[0].mxu0 %v1794
        %v1865 = vpop.f32.mrb[0].mxu0
        %v1866 = vadd.f32 0.0, %v1865
        %v1867 = vpop.f32.mrb[0].mxu0
        %1868 = vdwg.mxu0
        %v1870 = vsel %vm1716, %v899, 0
        %v1873 = vsel %vm1716, %v1271, 0
        %1875 = vmatprep.subr.mxu0 0.0
        %1876 = vmatpush1.xpose.msra.mxu0 %v1873
        %1877 = vmatprep.subr.mxu0 0.0
        %1878 = vmatpush1.xpose.msra.mxu0 0.0
        %1879 = vmatprep.subr.mxu0 0.0
        %1880 = vmatpush1.xpose.msra.mxu0 0.0
        %1881 = vmatprep.subr.mxu0 0.0
        %1882 = vmatpush1.xpose.msra.mxu0 0.0
        %1883 = vmatprep.subr.mxu0 0.0
        %1884 = vmatpush1.xpose.msra.mxu0 0.0
        %1885 = vmatprep.subr.mxu0 0.0
        %1886 = vmatpush1.xpose.msra.mxu0 0.0
        %1887 = vmatprep.subr.mxu0 0.0
        %1888 = vmatpush1.xpose.msra.mxu0 0.0
        %1889 = vmatprep.subr.mxu0 0.0
        %1890 = vmatpush1.xpose.msra.mxu0 0.0
        %1891 = vmatprep.subr.mxu0 0.0
        %1892 = vmatpush1.xpose.msra.mxu0 0.0
        %1893 = vmatprep.subr.mxu0 0.0
        %1894 = vmatpush1.xpose.msra.mxu0 0.0
        %1895 = vmatprep.subr.mxu0 0.0
        %1896 = vmatpush1.xpose.msra.mxu0 0.0
        %1897 = vmatprep.subr.mxu0 0.0
        %1898 = vmatpush1.xpose.msra.mxu0 0.0
        %1899 = vmatprep.subr.mxu0 0.0
        %1900 = vmatpush1.xpose.msra.mxu0 0.0
        %1901 = vmatprep.subr.mxu0 0.0
        %1902 = vmatpush1.xpose.msra.mxu0 0.0
        %1903 = vmatprep.subr.mxu0 0.0
        %1904 = vmatpush1.xpose.msra.mxu0 0.0
        %1905 = vmatprep.subr.mxu0 0.0
        %1906 = vmatpush1.xpose.msra.mxu0 0.0
        %1907 = vmatprep.subr.mxu0 0.0
        %1908 = vmatpush1.xpose.msra.mxu0 0.0
        %1909 = vmatprep.subr.mxu0 0.0
        %1910 = vmatpush1.xpose.msra.mxu0 0.0
        %1911 = vmatprep.subr.mxu0 0.0
        %1912 = vmatpush1.xpose.msra.mxu0 0.0
        %1913 = vmatprep.subr.mxu0 0.0
        %1914 = vmatpush1.xpose.msra.mxu0 0.0
        %1915 = vmatprep.subr.mxu0 0.0
        %1916 = vmatpush1.xpose.msra.mxu0 0.0
        %1917 = vmatprep.subr.mxu0 0.0
        %1918 = vmatpush1.xpose.msra.mxu0 0.0
        %1919 = vmatprep.subr.mxu0 0.0
        %1920 = vmatpush1.xpose.msra.mxu0 0.0
        %1921 = vmatprep.subr.mxu0 0.0
        %1922 = vmatpush1.xpose.msra.mxu0 0.0
        %1923 = vmatprep.subr.mxu0 0.0
        %1924 = vmatpush1.xpose.msra.mxu0 0.0
        %1925 = vmatprep.subr.mxu0 0.0
        %1926 = vmatpush1.xpose.msra.mxu0 0.0
        %1927 = vmatprep.subr.mxu0 0.0
        %1928 = vmatpush1.xpose.msra.mxu0 0.0
        %1929 = vmatprep.subr.mxu0 0.0
        %1930 = vmatpush1.xpose.msra.mxu0 0.0
        %1931 = vmatprep.subr.mxu0 0.0
        %1932 = vmatpush1.xpose.msra.mxu0 0.0
        %1933 = vmatprep.subr.mxu0 0.0
        %1934 = vmatpush1.xpose.msra.mxu0 0.0
        %1935 = vmatprep.subr.mxu0 0.0
        %1936 = vmatpush1.xpose.msra.mxu0 0.0
        %1937 = vmatprep.subr.mxu0 0.0
        %1938 = vmatpush1.xpose.msra.mxu0 0.0
        %1939 = vmatprep.mubr.f32.mxu0 0.0
        %1940 = vmatmul.mubr.f32.gmra.mrb[0].mxu0 %v1870
        %v1941 = vpop.f32.mrb[0].mxu0
        %v1942 = vadd.f32 0.0, %v1941
        %v1943 = vpop.f32.mrb[0].mxu0
        %1944 = vdwg.mxu0
        %v1946 = vsel %vm1716, %v969, 0
        %v1949 = vsel %vm1716, %v1341, 0
        %1951 = vmatprep.subr.mxu0 0.0
        %1952 = vmatpush1.xpose.msra.mxu0 %v1949
        %1953 = vmatprep.subr.mxu0 0.0
        %1954 = vmatpush1.xpose.msra.mxu0 0.0
        %1955 = vmatprep.subr.mxu0 0.0
        %1956 = vmatpush1.xpose.msra.mxu0 0.0
        %1957 = vmatprep.subr.mxu0 0.0
        %1958 = vmatpush1.xpose.msra.mxu0 0.0
        %1959 = vmatprep.subr.mxu0 0.0
        %1960 = vmatpush1.xpose.msra.mxu0 0.0
        %1961 = vmatprep.subr.mxu0 0.0
        %1962 = vmatpush1.xpose.msra.mxu0 0.0
        %1963 = vmatprep.subr.mxu0 0.0
        %1964 = vmatpush1.xpose.msra.mxu0 0.0
        %1965 = vmatprep.subr.mxu0 0.0
        %1966 = vmatpush1.xpose.msra.mxu0 0.0
        %1967 = vmatprep.subr.mxu0 0.0
        %1968 = vmatpush1.xpose.msra.mxu0 0.0
        %1969 = vmatprep.subr.mxu0 0.0
        %1970 = vmatpush1.xpose.msra.mxu0 0.0
        %1971 = vmatprep.subr.mxu0 0.0
        %1972 = vmatpush1.xpose.msra.mxu0 0.0
        %1973 = vmatprep.subr.mxu0 0.0
        %1974 = vmatpush1.xpose.msra.mxu0 0.0
        %1975 = vmatprep.subr.mxu0 0.0
        %1976 = vmatpush1.xpose.msra.mxu0 0.0
        %1977 = vmatprep.subr.mxu0 0.0
        %1978 = vmatpush1.xpose.msra.mxu0 0.0
        %1979 = vmatprep.subr.mxu0 0.0
        %1980 = vmatpush1.xpose.msra.mxu0 0.0
        %1981 = vmatprep.subr.mxu0 0.0
        %1982 = vmatpush1.xpose.msra.mxu0 0.0
        %1983 = vmatprep.subr.mxu0 0.0
        %1984 = vmatpush1.xpose.msra.mxu0 0.0
        %1985 = vmatprep.subr.mxu0 0.0
        %1986 = vmatpush1.xpose.msra.mxu0 0.0
        %1987 = vmatprep.subr.mxu0 0.0
        %1988 = vmatpush1.xpose.msra.mxu0 0.0
        %1989 = vmatprep.subr.mxu0 0.0
        %1990 = vmatpush1.xpose.msra.mxu0 0.0
        %1991 = vmatprep.subr.mxu0 0.0
        %1992 = vmatpush1.xpose.msra.mxu0 0.0
        %1993 = vmatprep.subr.mxu0 0.0
        %1994 = vmatpush1.xpose.msra.mxu0 0.0
        %1995 = vmatprep.subr.mxu0 0.0
        %1996 = vmatpush1.xpose.msra.mxu0 0.0
        %1997 = vmatprep.subr.mxu0 0.0
        %1998 = vmatpush1.xpose.msra.mxu0 0.0
        %1999 = vmatprep.subr.mxu0 0.0
        %2000 = vmatpush1.xpose.msra.mxu0 0.0
        %2001 = vmatprep.subr.mxu0 0.0
        %2002 = vmatpush1.xpose.msra.mxu0 0.0
        %2003 = vmatprep.subr.mxu0 0.0
        %2004 = vmatpush1.xpose.msra.mxu0 0.0
        %2005 = vmatprep.subr.mxu0 0.0
        %2006 = vmatpush1.xpose.msra.mxu0 0.0
        %2007 = vmatprep.subr.mxu0 0.0
        %2008 = vmatpush1.xpose.msra.mxu0 0.0
        %2009 = vmatprep.subr.mxu0 0.0
        %2010 = vmatpush1.xpose.msra.mxu0 0.0
        %2011 = vmatprep.subr.mxu0 0.0
        %2012 = vmatpush1.xpose.msra.mxu0 0.0
        %2013 = vmatprep.subr.mxu0 0.0
        %2014 = vmatpush1.xpose.msra.mxu0 0.0
        %2015 = vmatprep.mubr.f32.mxu0 0.0
        %2016 = vmatmul.mubr.f32.gmra.mrb[0].mxu0 %v1946
        %v2017 = vpop.f32.mrb[0].mxu0
        %v2018 = vadd.f32 0.0, %v2017
        %v2019 = vpop.f32.mrb[0].mxu0
        %2020 = vdwg.mxu0
        %v2021 = vmul.f32 %v1790, 0.17677669
        %v2022 = vmul.f32 %v1866, 0.17677669
        %v2023 = vmul.f32 %v1942, 0.17677669
        %v2024 = vmul.f32 %v2018, 0.17677669
        %v2025 = vld [vmem:[%s1] sm:$0xff]
        %v2026 = vadd.f32 %v2021, %v2025
        %v2027 = vadd.f32 %v2022, %v2025
        %v2028 = vadd.f32 %v2023, %v2025
        %v2029 = vadd.f32 %v2024, %v2025
        %vm2030 = vcmask 64512
        %v2031 = vsel %vm2030, %v2026, -inf
        %2032 = vmax.xlane.f32.xlu0 %v2031
        %v2033 = vpop.xlane.xlu0 %2032
        %v2034 = vsel %vm2030, %v2027, -inf
        %2035 = vmax.xlane.f32.xlu0 %v2034
        %v2036 = vpop.xlane.xlu0 %2035
        %v2037 = vsel %vm2030, %v2028, -inf
        %2038 = vmax.xlane.f32.xlu0 %v2037
        %v2039 = vpop.xlane.xlu0 %2038
        %v2040 = vsel %vm2030, %v2029, -inf
        %2041 = vmax.xlane.f32.xlu0 %v2040
        %v2042 = vpop.xlane.xlu0 %2041
        %v2043 = vsub.f32 %v2026, %v2033
        %v2044 = vsub.f32 %v2027, %v2036
        %v2045 = vsub.f32 %v2028, %v2039
        %v2046 = vsub.f32 %v2029, %v2042
        %v2047 = vmul.f32 %v2043, 1.442695
        %v2048 = vpow.pop %v2047
        %v2049 = vmul.f32 %v2044, 1.442695
        %v2050 = vpow.pop %v2049
        %v2051 = vmul.f32 %v2045, 1.442695
        %v2052 = vpow.pop %v2051
        %v2053 = vmul.f32 %v2046, 1.442695
        %v2054 = vpow.pop %v2053
        %v2055 = vsel %vm2030, %v2048, 0.0
        %2056 = vadd.xlane.f32.xlu0 %v2055
        %v2057 = vpop.xlane.xlu0 %2056
        %v2058 = vsel %vm2030, %v2050, 0.0
        %2059 = vadd.xlane.f32.xlu0 %v2058
        %v2060 = vpop.xlane.xlu0 %2059
        %v2061 = vsel %vm2030, %v2052, 0.0
        %2062 = vadd.xlane.f32.xlu0 %v2061
        %v2063 = vpop.xlane.xlu0 %2062
        %v2064 = vsel %vm2030, %v2054, 0.0
        %2065 = vadd.xlane.f32.xlu0 %v2064
        %v2066 = vpop.xlane.xlu0 %2065
        %v2067 = vrcp.pop %v2057
        %v2068 = vrcp.pop %v2060
        %v2069 = vrcp.pop %v2063
        %v2070 = vrcp.pop %v2066
        %v2071 = vmul.f32 %v2048, %v2067
        %v2072 = vmul.f32 %v2050, %v2068
        %v2073 = vmul.f32 %v2052, %v2069
        %v2074 = vmul.f32 %v2054, %v2070
        %v2076 = vsel %vm2030, %v2071, 0
        %2078 = vmatprep.subr.mxu0 0.0
        %2079 = vmatpush1.msra.mxu0 %v1503
        %2080 = vmatprep.subr.mxu0 0.0
        %2081 = vmatpush1.msra.mxu0 0.0
        %2082 = vmatprep.subr.mxu0 0.0
        %2083 = vmatpush1.msra.mxu0 0.0
        %2084 = vmatprep.subr.mxu0 0.0
        %2085 = vmatpush1.msra.mxu0 0.0
        %2086 = vmatprep.subr.mxu0 0.0
        %2087 = vmatpush1.msra.mxu0 0.0
        %2088 = vmatprep.subr.mxu0 0.0
        %2089 = vmatpush1.msra.mxu0 0.0
        %2090 = vmatprep.subr.mxu0 0.0
        %2091 = vmatpush1.msra.mxu0 0.0
        %2092 = vmatprep.subr.mxu0 0.0
        %2093 = vmatpush1.msra.mxu0 0.0
        %2094 = vmatprep.subr.mxu0 0.0
        %2095 = vmatpush1.msra.mxu0 0.0
        %2096 = vmatprep.subr.mxu0 0.0
        %2097 = vmatpush1.msra.mxu0 0.0
        %2098 = vmatprep.subr.mxu0 0.0
        %2099 = vmatpush1.msra.mxu0 0.0
        %2100 = vmatprep.subr.mxu0 0.0
        %2101 = vmatpush1.msra.mxu0 0.0
        %2102 = vmatprep.subr.mxu0 0.0
        %2103 = vmatpush1.msra.mxu0 0.0
        %2104 = vmatprep.subr.mxu0 0.0
        %2105 = vmatpush1.msra.mxu0 0.0
        %2106 = vmatprep.subr.mxu0 0.0
        %2107 = vmatpush1.msra.mxu0 0.0
        %2108 = vmatprep.subr.mxu0 0.0
        %2109 = vmatpush1.msra.mxu0 0.0
        %2110 = vmatprep.subr.mxu0 0.0
        %2111 = vmatpush1.msra.mxu0 0.0
        %2112 = vmatprep.subr.mxu0 0.0
        %2113 = vmatpush1.msra.mxu0 0.0
        %2114 = vmatprep.subr.mxu0 0.0
        %2115 = vmatpush1.msra.mxu0 0.0
        %2116 = vmatprep.subr.mxu0 0.0
        %2117 = vmatpush1.msra.mxu0 0.0
        %2118 = vmatprep.subr.mxu0 0.0
        %2119 = vmatpush1.msra.mxu0 0.0
        %2120 = vmatprep.subr.mxu0 0.0
        %2121 = vmatpush1.msra.mxu0 0.0
        %2122 = vmatprep.subr.mxu0 0.0
        %2123 = vmatpush1.msra.mxu0 0.0
        %2124 = vmatprep.subr.mxu0 0.0
        %2125 = vmatpush1.msra.mxu0 0.0
        %2126 = vmatprep.subr.mxu0 0.0
        %2127 = vmatpush1.msra.mxu0 0.0
        %2128 = vmatprep.subr.mxu0 0.0
        %2129 = vmatpush1.msra.mxu0 0.0
        %2130 = vmatprep.subr.mxu0 0.0
        %2131 = vmatpush1.msra.mxu0 0.0
        %2132 = vmatprep.subr.mxu0 0.0
        %2133 = vmatpush1.msra.mxu0 0.0
        %2134 = vmatprep.subr.mxu0 0.0
        %2135 = vmatpush1.msra.mxu0 0.0
        %2136 = vmatprep.subr.mxu0 0.0
        %2137 = vmatpush1.msra.mxu0 0.0
        %2138 = vmatprep.subr.mxu0 0.0
        %2139 = vmatpush1.msra.mxu0 0.0
        %2140 = vmatprep.subr.mxu0 0.0
        %2141 = vmatpush1.msra.mxu0 0.0
        %2142 = vmatprep.mubr.f32.mxu0 0.0
        %2143 = vmatmul.mubr.f32.gmra.mrb[0].mxu0 %v2076
        %v2144 = vpop.f32.mrb[0].mxu0
        %v2145 = vadd.f32 0.0, %v2144
        %v2146 = vpop.f32.mrb[0].mxu0
        %2147 = vdwg.mxu0
        %v2149 = vsel %vm2030, %v2072, 0
        %2151 = vmatprep.subr.mxu0 0.0
        %2152 = vmatpush1.msra.mxu0 %v1573
        %2153 = vmatprep.subr.mxu0 0.0
        %2154 = vmatpush1.msra.mxu0 0.0
        %2155 = vmatprep.subr.mxu0 0.0
        %2156 = vmatpush1.msra.mxu0 0.0
        %2157 = vmatprep.subr.mxu0 0.0
        %2158 = vmatpush1.msra.mxu0 0.0
        %2159 = vmatprep.subr.mxu0 0.0
        %2160 = vmatpush1.msra.mxu0 0.0
        %2161 = vmatprep.subr.mxu0 0.0
        %2162 = vmatpush1.msra.mxu0 0.0
        %2163 = vmatprep.subr.mxu0 0.0
        %2164 = vmatpush1.msra.mxu0 0.0
        %2165 = vmatprep.subr.mxu0 0.0
        %2166 = vmatpush1.msra.mxu0 0.0
        %2167 = vmatprep.subr.mxu0 0.0
        %2168 = vmatpush1.msra.mxu0 0.0
        %2169 = vmatprep.subr.mxu0 0.0
        %2170 = vmatpush1.msra.mxu0 0.0
        %2171 = vmatprep.subr.mxu0 0.0
        %2172 = vmatpush1.msra.mxu0 0.0
        %2173 = vmatprep.subr.mxu0 0.0
        %2174 = vmatpush1.msra.mxu0 0.0
        %2175 = vmatprep.subr.mxu0 0.0
        %2176 = vmatpush1.msra.mxu0 0.0
        %2177 = vmatprep.subr.mxu0 0.0
        %2178 = vmatpush1.msra.mxu0 0.0
        %2179 = vmatprep.subr.mxu0 0.0
        %2180 = vmatpush1.msra.mxu0 0.0
        %2181 = vmatprep.subr.mxu0 0.0
        %2182 = vmatpush1.msra.mxu0 0.0
        %2183 = vmatprep.subr.mxu0 0.0
        %2184 = vmatpush1.msra.mxu0 0.0
        %2185 = vmatprep.subr.mxu0 0.0
        %2186 = vmatpush1.msra.mxu0 0.0
        %2187 = vmatprep.subr.mxu0 0.0
        %2188 = vmatpush1.msra.mxu0 0.0
        %2189 = vmatprep.subr.mxu0 0.0
        %2190 = vmatpush1.msra.mxu0 0.0
        %2191 = vmatprep.subr.mxu0 0.0
        %2192 = vmatpush1.msra.mxu0 0.0
        %2193 = vmatprep.subr.mxu0 0.0
        %2194 = vmatpush1.msra.mxu0 0.0
        %2195 = vmatprep.subr.mxu0 0.0
        %2196 = vmatpush1.msra.mxu0 0.0
        %2197 = vmatprep.subr.mxu0 0.0
        %2198 = vmatpush1.msra.mxu0 0.0
        %2199 = vmatprep.subr.mxu0 0.0
        %2200 = vmatpush1.msra.mxu0 0.0
        %2201 = vmatprep.subr.mxu0 0.0
        %2202 = vmatpush1.msra.mxu0 0.0
        %2203 = vmatprep.subr.mxu0 0.0
        %2204 = vmatpush1.msra.mxu0 0.0
        %2205 = vmatprep.subr.mxu0 0.0
        %2206 = vmatpush1.msra.mxu0 0.0
        %2207 = vmatprep.subr.mxu0 0.0
        %2208 = vmatpush1.msra.mxu0 0.0
        %2209 = vmatprep.subr.mxu0 0.0
        %2210 = vmatpush1.msra.mxu0 0.0
        %2211 = vmatprep.subr.mxu0 0.0
        %2212 = vmatpush1.msra.mxu0 0.0
        %2213 = vmatprep.subr.mxu0 0.0
        %2214 = vmatpush1.msra.mxu0 0.0
        %2215 = vmatprep.mubr.f32.mxu0 0.0
        %2216 = vmatmul.mubr.f32.gmra.mrb[0].mxu0 %v2149
        %v2217 = vpop.f32.mrb[0].mxu0
        %v2218 = vadd.f32 0.0, %v2217
        %v2219 = vpop.f32.mrb[0].mxu0
        %2220 = vdwg.mxu0
        %v2222 = vsel %vm2030, %v2073, 0
        %2224 = vmatprep.subr.mxu0 0.0
        %2225 = vmatpush1.msra.mxu0 %v1643
        %2226 = vmatprep.subr.mxu0 0.0
        %2227 = vmatpush1.msra.mxu0 0.0
        %2228 = vmatprep.subr.mxu0 0.0
        %2229 = vmatpush1.msra.mxu0 0.0
        %2230 = vmatprep.subr.mxu0 0.0
        %2231 = vmatpush1.msra.mxu0 0.0
        %2232 = vmatprep.subr.mxu0 0.0
        %2233 = vmatpush1.msra.mxu0 0.0
        %2234 = vmatprep.subr.mxu0 0.0
        %2235 = vmatpush1.msra.mxu0 0.0
        %2236 = vmatprep.subr.mxu0 0.0
        %2237 = vmatpush1.msra.mxu0 0.0
        %2238 = vmatprep.subr.mxu0 0.0
        %2239 = vmatpush1.msra.mxu0 0.0
        %2240 = vmatprep.subr.mxu0 0.0
        %2241 = vmatpush1.msra.mxu0 0.0
        %2242 = vmatprep.subr.mxu0 0.0
        %2243 = vmatpush1.msra.mxu0 0.0
        %2244 = vmatprep.subr.mxu0 0.0
        %2245 = vmatpush1.msra.mxu0 0.0
        %2246 = vmatprep.subr.mxu0 0.0
        %2247 = vmatpush1.msra.mxu0 0.0
        %2248 = vmatprep.subr.mxu0 0.0
        %2249 = vmatpush1.msra.mxu0 0.0
        %2250 = vmatprep.subr.mxu0 0.0
        %2251 = vmatpush1.msra.mxu0 0.0
        %2252 = vmatprep.subr.mxu0 0.0
        %2253 = vmatpush1.msra.mxu0 0.0
        %2254 = vmatprep.subr.mxu0 0.0
        %2255 = vmatpush1.msra.mxu0 0.0
        %2256 = vmatprep.subr.mxu0 0.0
        %2257 = vmatpush1.msra.mxu0 0.0
        %2258 = vmatprep.subr.mxu0 0.0
        %2259 = vmatpush1.msra.mxu0 0.0
        %2260 = vmatprep.subr.mxu0 0.0
        %2261 = vmatpush1.msra.mxu0 0.0
        %2262 = vmatprep.subr.mxu0 0.0
        %2263 = vmatpush1.msra.mxu0 0.0
        %2264 = vmatprep.subr.mxu0 0.0
        %2265 = vmatpush1.msra.mxu0 0.0
        %2266 = vmatprep.subr.mxu0 0.0
        %2267 = vmatpush1.msra.mxu0 0.0
        %2268 = vmatprep.subr.mxu0 0.0
        %2269 = vmatpush1.msra.mxu0 0.0
        %2270 = vmatprep.subr.mxu0 0.0
        %2271 = vmatpush1.msra.mxu0 0.0
        %2272 = vmatprep.subr.mxu0 0.0
        %2273 = vmatpush1.msra.mxu0 0.0
        %2274 = vmatprep.subr.mxu0 0.0
        %2275 = vmatpush1.msra.mxu0 0.0
        %2276 = vmatprep.subr.mxu0 0.0
        %2277 = vmatpush1.msra.mxu0 0.0
        %2278 = vmatprep.subr.mxu0 0.0
        %2279 = vmatpush1.msra.mxu0 0.0
        %2280 = vmatprep.subr.mxu0 0.0
        %2281 = vmatpush1.msra.mxu0 0.0
        %2282 = vmatprep.subr.mxu0 0.0
        %2283 = vmatpush1.msra.mxu0 0.0
        %2284 = vmatprep.subr.mxu0 0.0
        %2285 = vmatpush1.msra.mxu0 0.0
        %2286 = vmatprep.subr.mxu0 0.0
        %2287 = vmatpush1.msra.mxu0 0.0
        %2288 = vmatprep.mubr.f32.mxu0 0.0
        %2289 = vmatmul.mubr.f32.gmra.mrb[0].mxu0 %v2222
        %v2290 = vpop.f32.mrb[0].mxu0
        %v2291 = vadd.f32 0.0, %v2290
        %v2292 = vpop.f32.mrb[0].mxu0
        %2293 = vdwg.mxu0
        %v2295 = vsel %vm2030, %v2074, 0
        %2297 = vmatprep.subr.mxu0 0.0
        %2298 = vmatpush1.msra.mxu0 %v1713
        %2299 = vmatprep.subr.mxu0 0.0
        %2300 = vmatpush1.msra.mxu0 0.0
        %2301 = vmatprep.subr.mxu0 0.0
        %2302 = vmatpush1.msra.mxu0 0.0
        %2303 = vmatprep.subr.mxu0 0.0
        %2304 = vmatpush1.msra.mxu0 0.0
        %2305 = vmatprep.subr.mxu0 0.0
        %2306 = vmatpush1.msra.mxu0 0.0
        %2307 = vmatprep.subr.mxu0 0.0
        %2308 = vmatpush1.msra.mxu0 0.0
        %2309 = vmatprep.subr.mxu0 0.0
        %2310 = vmatpush1.msra.mxu0 0.0
        %2311 = vmatprep.subr.mxu0 0.0
        %2312 = vmatpush1.msra.mxu0 0.0
        %2313 = vmatprep.subr.mxu0 0.0
        %2314 = vmatpush1.msra.mxu0 0.0
        %2315 = vmatprep.subr.mxu0 0.0
        %2316 = vmatpush1.msra.mxu0 0.0
        %2317 = vmatprep.subr.mxu0 0.0
        %2318 = vmatpush1.msra.mxu0 0.0
        %2319 = vmatprep.subr.mxu0 0.0
        %2320 = vmatpush1.msra.mxu0 0.0
        %2321 = vmatprep.subr.mxu0 0.0
        %2322 = vmatpush1.msra.mxu0 0.0
        %2323 = vmatprep.subr.mxu0 0.0
        %2324 = vmatpush1.msra.mxu0 0.0
        %2325 = vmatprep.subr.mxu0 0.0
        %2326 = vmatpush1.msra.mxu0 0.0
        %2327 = vmatprep.subr.mxu0 0.0
        %2328 = vmatpush1.msra.mxu0 0.0
        %2329 = vmatprep.subr.mxu0 0.0
        %2330 = vmatpush1.msra.mxu0 0.0
        %2331 = vmatprep.subr.mxu0 0.0
        %2332 = vmatpush1.msra.mxu0 0.0
        %2333 = vmatprep.subr.mxu0 0.0
        %2334 = vmatpush1.msra.mxu0 0.0
        %2335 = vmatprep.subr.mxu0 0.0
        %2336 = vmatpush1.msra.mxu0 0.0
        %2337 = vmatprep.subr.mxu0 0.0
        %2338 = vmatpush1.msra.mxu0 0.0
        %2339 = vmatprep.subr.mxu0 0.0
        %2340 = vmatpush1.msra.mxu0 0.0
        %2341 = vmatprep.subr.mxu0 0.0
        %2342 = vmatpush1.msra.mxu0 0.0
        %2343 = vmatprep.subr.mxu0 0.0
        %2344 = vmatpush1.msra.mxu0 0.0
        %2345 = vmatprep.subr.mxu0 0.0
        %2346 = vmatpush1.msra.mxu0 0.0
        %2347 = vmatprep.subr.mxu0 0.0
        %2348 = vmatpush1.msra.mxu0 0.0
        %2349 = vmatprep.subr.mxu0 0.0
        %2350 = vmatpush1.msra.mxu0 0.0
        %2351 = vmatprep.subr.mxu0 0.0
        %2352 = vmatpush1.msra.mxu0 0.0
        %2353 = vmatprep.subr.mxu0 0.0
        %2354 = vmatpush1.msra.mxu0 0.0
        %2355 = vmatprep.subr.mxu0 0.0
        %2356 = vmatpush1.msra.mxu0 0.0
        %2357 = vmatprep.subr.mxu0 0.0
        %2358 = vmatpush1.msra.mxu0 0.0
        %2359 = vmatprep.subr.mxu0 0.0
        %2360 = vmatpush1.msra.mxu0 0.0
        %2361 = vmatprep.mubr.f32.mxu0 0.0
        %2362 = vmatmul.mubr.f32.gmra.mrb[0].mxu0 %v2295
        %v2363 = vpop.f32.mrb[0].mxu0
        %v2364 = vadd.f32 0.0, %v2363
        %v2365 = vpop.f32.mrb[0].mxu0
        %2366 = vdwg.mxu0
        %v2367 = vld [vmem:[%s10] sm:$0xff]
        %v2368 = vld [vmem:[%s10 + $0x8] sm:$0xff]
        %v2369 = vld [vmem:[%s10 + $0x10] sm:$0xff]
        %v2370 = vld [vmem:[%s10 + $0x18] sm:$0xff]
        %v2371 = vld [vmem:[%s10 + $0x20] sm:$0xff]
        %v2372 = vld [vmem:[%s10 + $0x28] sm:$0xff]
        %v2373 = vld [vmem:[%s10 + $0x30] sm:$0xff]
        %v2374 = vld [vmem:[%s10 + $0x38] sm:$0xff]
        %v2375 = vld [vmem:[%s10 + $0x40] sm:$0xff]
        %v2376 = vld [vmem:[%s10 + $0x48] sm:$0xff]
        %v2377 = vld [vmem:[%s10 + $0x50] sm:$0xff]
        %v2378 = vld [vmem:[%s10 + $0x58] sm:$0xff]
        %v2379 = vld [vmem:[%s10 + $0x60] sm:$0xff]
        %v2380 = vld [vmem:[%s10 + $0x68] sm:$0xff]
        %v2381 = vld [vmem:[%s10 + $0x70] sm:$0xff]
        %v2382 = vld [vmem:[%s10 + $0x78] sm:$0xff]
        %v2384 = vsel %vm1716, %v2145, 0
        %2386 = vmatprep.subr.mxu0 0.0
        %2387 = vmatpush1.msra.mxu0 %v2367
        %2388 = vmatprep.subr.mxu0 0.0
        %2389 = vmatpush1.msra.mxu0 %v2368
        %2390 = vmatprep.subr.mxu0 0.0
        %2391 = vmatpush1.msra.mxu0 %v2369
        %2392 = vmatprep.subr.mxu0 0.0
        %2393 = vmatpush1.msra.mxu0 %v2370
        %2394 = vmatprep.subr.mxu0 0.0
        %2395 = vmatpush1.msra.mxu0 0.0
        %2396 = vmatprep.subr.mxu0 0.0
        %2397 = vmatpush1.msra.mxu0 0.0
        %2398 = vmatprep.subr.mxu0 0.0
        %2399 = vmatpush1.msra.mxu0 0.0
        %2400 = vmatprep.subr.mxu0 0.0
        %2401 = vmatpush1.msra.mxu0 0.0
        %2402 = vmatprep.subr.mxu0 0.0
        %2403 = vmatpush1.msra.mxu0 0.0
        %2404 = vmatprep.subr.mxu0 0.0
        %2405 = vmatpush1.msra.mxu0 0.0
        %2406 = vmatprep.subr.mxu0 0.0
        %2407 = vmatpush1.msra.mxu0 0.0
        %2408 = vmatprep.subr.mxu0 0.0
        %2409 = vmatpush1.msra.mxu0 0.0
        %2410 = vmatprep.subr.mxu0 0.0
        %2411 = vmatpush1.msra.mxu0 0.0
        %2412 = vmatprep.subr.mxu0 0.0
        %2413 = vmatpush1.msra.mxu0 0.0
        %2414 = vmatprep.subr.mxu0 0.0
        %2415 = vmatpush1.msra.mxu0 0.0
        %2416 = vmatprep.subr.mxu0 0.0
        %2417 = vmatpush1.msra.mxu0 0.0
        %2418 = vmatprep.subr.mxu0 0.0
        %2419 = vmatpush1.msra.mxu0 0.0
        %2420 = vmatprep.subr.mxu0 0.0
        %2421 = vmatpush1.msra.mxu0 0.0
        %2422 = vmatprep.subr.mxu0 0.0
        %2423 = vmatpush1.msra.mxu0 0.0
        %2424 = vmatprep.subr.mxu0 0.0
        %2425 = vmatpush1.msra.mxu0 0.0
        %2426 = vmatprep.subr.mxu0 0.0
        %2427 = vmatpush1.msra.mxu0 0.0
        %2428 = vmatprep.subr.mxu0 0.0
        %2429 = vmatpush1.msra.mxu0 0.0
        %2430 = vmatprep.subr.mxu0 0.0
        %2431 = vmatpush1.msra.mxu0 0.0
        %2432 = vmatprep.subr.mxu0 0.0
        %2433 = vmatpush1.msra.mxu0 0.0
        %2434 = vmatprep.subr.mxu0 0.0
        %2435 = vmatpush1.msra.mxu0 0.0
        %2436 = vmatprep.subr.mxu0 0.0
        %2437 = vmatpush1.msra.mxu0 0.0
        %2438 = vmatprep.subr.mxu0 0.0
        %2439 = vmatpush1.msra.mxu0 0.0
        %2440 = vmatprep.subr.mxu0 0.0
        %2441 = vmatpush1.msra.mxu0 0.0
        %2442 = vmatprep.subr.mxu0 0.0
        %2443 = vmatpush1.msra.mxu0 0.0
        %2444 = vmatprep.subr.mxu0 0.0
        %2445 = vmatpush1.msra.mxu0 0.0
        %2446 = vmatprep.subr.mxu0 0.0
        %2447 = vmatpush1.msra.mxu0 0.0
        %2448 = vmatprep.subr.mxu0 0.0
        %2449 = vmatpush1.msra.mxu0 0.0
        %2450 = vmatprep.mubr.f32.mxu0 0.0
        %2451 = vmatmul.mubr.f32.gmra.mrb[0].mxu0 %v2384
        %v2452 = vpop.f32.mrb[0].mxu0
        %v2453 = vadd.f32 0.0, %v2452
        %v2454 = vpop.f32.mrb[0].mxu0
        %2455 = vdwg.mxu0
        %v2457 = vsel %vm1716, %v2218, 0
        %2459 = vmatprep.subr.mxu0 0.0
        %2460 = vmatpush1.msra.mxu0 %v2371
        %2461 = vmatprep.subr.mxu0 0.0
        %2462 = vmatpush1.msra.mxu0 %v2372
        %2463 = vmatprep.subr.mxu0 0.0
        %2464 = vmatpush1.msra.mxu0 %v2373
        %2465 = vmatprep.subr.mxu0 0.0
        %2466 = vmatpush1.msra.mxu0 %v2374
        %2467 = vmatprep.subr.mxu0 0.0
        %2468 = vmatpush1.msra.mxu0 0.0
        %2469 = vmatprep.subr.mxu0 0.0
        %2470 = vmatpush1.msra.mxu0 0.0
        %2471 = vmatprep.subr.mxu0 0.0
        %2472 = vmatpush1.msra.mxu0 0.0
        %2473 = vmatprep.subr.mxu0 0.0
        %2474 = vmatpush1.msra.mxu0 0.0
        %2475 = vmatprep.subr.mxu0 0.0
        %2476 = vmatpush1.msra.mxu0 0.0
        %2477 = vmatprep.subr.mxu0 0.0
        %2478 = vmatpush1.msra.mxu0 0.0
        %2479 = vmatprep.subr.mxu0 0.0
        %2480 = vmatpush1.msra.mxu0 0.0
        %2481 = vmatprep.subr.mxu0 0.0
        %2482 = vmatpush1.msra.mxu0 0.0
        %2483 = vmatprep.subr.mxu0 0.0
        %2484 = vmatpush1.msra.mxu0 0.0
        %2485 = vmatprep.subr.mxu0 0.0
        %2486 = vmatpush1.msra.mxu0 0.0
        %2487 = vmatprep.subr.mxu0 0.0
        %2488 = vmatpush1.msra.mxu0 0.0
        %2489 = vmatprep.subr.mxu0 0.0
        %2490 = vmatpush1.msra.mxu0 0.0
        %2491 = vmatprep.subr.mxu0 0.0
        %2492 = vmatpush1.msra.mxu0 0.0
        %2493 = vmatprep.subr.mxu0 0.0
        %2494 = vmatpush1.msra.mxu0 0.0
        %2495 = vmatprep.subr.mxu0 0.0
        %2496 = vmatpush1.msra.mxu0 0.0
        %2497 = vmatprep.subr.mxu0 0.0
        %2498 = vmatpush1.msra.mxu0 0.0
        %2499 = vmatprep.subr.mxu0 0.0
        %2500 = vmatpush1.msra.mxu0 0.0
        %2501 = vmatprep.subr.mxu0 0.0
        %2502 = vmatpush1.msra.mxu0 0.0
        %2503 = vmatprep.subr.mxu0 0.0
        %2504 = vmatpush1.msra.mxu0 0.0
        %2505 = vmatprep.subr.mxu0 0.0
        %2506 = vmatpush1.msra.mxu0 0.0
        %2507 = vmatprep.subr.mxu0 0.0
        %2508 = vmatpush1.msra.mxu0 0.0
        %2509 = vmatprep.subr.mxu0 0.0
        %2510 = vmatpush1.msra.mxu0 0.0
        %2511 = vmatprep.subr.mxu0 0.0
        %2512 = vmatpush1.msra.mxu0 0.0
        %2513 = vmatprep.subr.mxu0 0.0
        %2514 = vmatpush1.msra.mxu0 0.0
        %2515 = vmatprep.subr.mxu0 0.0
        %2516 = vmatpush1.msra.mxu0 0.0
        %2517 = vmatprep.subr.mxu0 0.0
        %2518 = vmatpush1.msra.mxu0 0.0
        %2519 = vmatprep.subr.mxu0 0.0
        %2520 = vmatpush1.msra.mxu0 0.0
        %2521 = vmatprep.subr.mxu0 0.0
        %2522 = vmatpush1.msra.mxu0 0.0
        %2523 = vmatprep.mubr.f32.mxu0 0.0
        %2524 = vmatmul.mubr.f32.gmra.mrb[0].mxu0 %v2457
        %v2525 = vpop.f32.mrb[0].mxu0
        %v2526 = vadd.f32 0.0, %v2525
        %v2527 = vpop.f32.mrb[0].mxu0
        %2528 = vdwg.mxu0
        %v2530 = vsel %vm1716, %v2291, 0
        %2532 = vmatprep.subr.mxu0 0.0
        %2533 = vmatpush1.msra.mxu0 %v2375
        %2534 = vmatprep.subr.mxu0 0.0
        %2535 = vmatpush1.msra.mxu0 %v2376
        %2536 = vmatprep.subr.mxu0 0.0
        %2537 = vmatpush1.msra.mxu0 %v2377
        %2538 = vmatprep.subr.mxu0 0.0
        %2539 = vmatpush1.msra.mxu0 %v2378
        %2540 = vmatprep.subr.mxu0 0.0
        %2541 = vmatpush1.msra.mxu0 0.0
        %2542 = vmatprep.subr.mxu0 0.0
        %2543 = vmatpush1.msra.mxu0 0.0
        %2544 = vmatprep.subr.mxu0 0.0
        %2545 = vmatpush1.msra.mxu0 0.0
        %2546 = vmatprep.subr.mxu0 0.0
        %2547 = vmatpush1.msra.mxu0 0.0
        %2548 = vmatprep.subr.mxu0 0.0
        %2549 = vmatpush1.msra.mxu0 0.0
        %2550 = vmatprep.subr.mxu0 0.0
        %2551 = vmatpush1.msra.mxu0 0.0
        %2552 = vmatprep.subr.mxu0 0.0
        %2553 = vmatpush1.msra.mxu0 0.0
        %2554 = vmatprep.subr.mxu0 0.0
        %2555 = vmatpush1.msra.mxu0 0.0
        %2556 = vmatprep.subr.mxu0 0.0
        %2557 = vmatpush1.msra.mxu0 0.0
        %2558 = vmatprep.subr.mxu0 0.0
        %2559 = vmatpush1.msra.mxu0 0.0
        %2560 = vmatprep.subr.mxu0 0.0
        %2561 = vmatpush1.msra.mxu0 0.0
        %2562 = vmatprep.subr.mxu0 0.0
        %2563 = vmatpush1.msra.mxu0 0.0
        %2564 = vmatprep.subr.mxu0 0.0
        %2565 = vmatpush1.msra.mxu0 0.0
        %2566 = vmatprep.subr.mxu0 0.0
        %2567 = vmatpush1.msra.mxu0 0.0
        %2568 = vmatprep.subr.mxu0 0.0
        %2569 = vmatpush1.msra.mxu0 0.0
        %2570 = vmatprep.subr.mxu0 0.0
        %2571 = vmatpush1.msra.mxu0 0.0
        %2572 = vmatprep.subr.mxu0 0.0
        %2573 = vmatpush1.msra.mxu0 0.0
        %2574 = vmatprep.subr.mxu0 0.0
        %2575 = vmatpush1.msra.mxu0 0.0
        %2576 = vmatprep.subr.mxu0 0.0
        %2577 = vmatpush1.msra.mxu0 0.0
        %2578 = vmatprep.subr.mxu0 0.0
        %2579 = vmatpush1.msra.mxu0 0.0
        %2580 = vmatprep.subr.mxu0 0.0
        %2581 = vmatpush1.msra.mxu0 0.0
        %2582 = vmatprep.subr.mxu0 0.0
        %2583 = vmatpush1.msra.mxu0 0.0
        %2584 = vmatprep.subr.mxu0 0.0
        %2585 = vmatpush1.msra.mxu0 0.0
        %2586 = vmatprep.subr.mxu0 0.0
        %2587 = vmatpush1.msra.mxu0 0.0
        %2588 = vmatprep.subr.mxu0 0.0
        %2589 = vmatpush1.msra.mxu0 0.0
        %2590 = vmatprep.subr.mxu0 0.0
        %2591 = vmatpush1.msra.mxu0 0.0
        %2592 = vmatprep.subr.mxu0 0.0
        %2593 = vmatpush1.msra.mxu0 0.0
        %2594 = vmatprep.subr.mxu0 0.0
        %2595 = vmatpush1.msra.mxu0 0.0
        %2596 = vmatprep.mubr.f32.mxu0 0.0
        %2597 = vmatmul.mubr.f32.gmra.mrb[0].mxu0 %v2530
        %v2598 = vpop.f32.mrb[0].mxu0
        %v2599 = vadd.f32 0.0, %v2598
        %v2600 = vpop.f32.mrb[0].mxu0
        %2601 = vdwg.mxu0
        %v2603 = vsel %vm1716, %v2364, 0
        %2605 = vmatprep.subr.mxu0 0.0
        %2606 = vmatpush1.msra.mxu0 %v2379
        %2607 = vmatprep.subr.mxu0 0.0
        %2608 = vmatpush1.msra.mxu0 %v2380
        %2609 = vmatprep.subr.mxu0 0.0
        %2610 = vmatpush1.msra.mxu0 %v2381
        %2611 = vmatprep.subr.mxu0 0.0
        %2612 = vmatpush1.msra.mxu0 %v2382
        %2613 = vmatprep.subr.mxu0 0.0
        %2614 = vmatpush1.msra.mxu0 0.0
        %2615 = vmatprep.subr.mxu0 0.0
        %2616 = vmatpush1.msra.mxu0 0.0
        %2617 = vmatprep.subr.mxu0 0.0
        %2618 = vmatpush1.msra.mxu0 0.0
        %2619 = vmatprep.subr.mxu0 0.0
        %2620 = vmatpush1.msra.mxu0 0.0
        %2621 = vmatprep.subr.mxu0 0.0
        %2622 = vmatpush1.msra.mxu0 0.0
        %2623 = vmatprep.subr.mxu0 0.0
        %2624 = vmatpush1.msra.mxu0 0.0
        %2625 = vmatprep.subr.mxu0 0.0
        %2626 = vmatpush1.msra.mxu0 0.0
        %2627 = vmatprep.subr.mxu0 0.0
        %2628 = vmatpush1.msra.mxu0 0.0
        %2629 = vmatprep.subr.mxu0 0.0
        %2630 = vmatpush1.msra.mxu0 0.0
        %2631 = vmatprep.subr.mxu0 0.0
        %2632 = vmatpush1.msra.mxu0 0.0
        %2633 = vmatprep.subr.mxu0 0.0
        %2634 = vmatpush1.msra.mxu0 0.0
        %2635 = vmatprep.subr.mxu0 0.0
        %2636 = vmatpush1.msra.mxu0 0.0
        %2637 = vmatprep.subr.mxu0 0.0
        %2638 = vmatpush1.msra.mxu0 0.0
        %2639 = vmatprep.subr.mxu0 0.0
        %2640 = vmatpush1.msra.mxu0 0.0
        %2641 = vmatprep.subr.mxu0 0.0
        %2642 = vmatpush1.msra.mxu0 0.0
        %2643 = vmatprep.subr.mxu0 0.0
        %2644 = vmatpush1.msra.mxu0 0.0
        %2645 = vmatprep.subr.mxu0 0.0
        %2646 = vmatpush1.msra.mxu0 0.0
        %2647 = vmatprep.subr.mxu0 0.0
        %2648 = vmatpush1.msra.mxu0 0.0
        %2649 = vmatprep.subr.mxu0 0.0
        %2650 = vmatpush1.msra.mxu0 0.0
        %2651 = vmatprep.subr.mxu0 0.0
        %2652 = vmatpush1.msra.mxu0 0.0
        %2653 = vmatprep.subr.mxu0 0.0
        %2654 = vmatpush1.msra.mxu0 0.0
        %2655 = vmatprep.subr.mxu0 0.0
        %2656 = vmatpush1.msra.mxu0 0.0
        %2657 = vmatprep.subr.mxu0 0.0
        %2658 = vmatpush1.msra.mxu0 0.0
        %2659 = vmatprep.subr.mxu0 0.0
        %2660 = vmatpush1.msra.mxu0 0.0
        %2661 = vmatprep.subr.mxu0 0.0
        %2662 = vmatpush1.msra.mxu0 0.0
        %2663 = vmatprep.subr.mxu0 0.0
        %2664 = vmatpush1.msra.mxu0 0.0
        %2665 = vmatprep.subr.mxu0 0.0
        %2666 = vmatpush1.msra.mxu0 0.0
        %2667 = vmatprep.subr.mxu0 0.0
        %2668 = vmatpush1.msra.mxu0 0.0
        %2669 = vmatprep.mubr.f32.mxu0 0.0
        %2670 = vmatmul.mubr.f32.gmra.mrb[0].mxu0 %v2603
        %v2671 = vpop.f32.mrb[0].mxu0
        %v2672 = vadd.f32 0.0, %v2671
        %v2673 = vpop.f32.mrb[0].mxu0
        %2674 = vdwg.mxu0
        %v2675 = vadd.f32 %v2453, %v2526
        %v2676 = vadd.f32 %v2675, %v2599
        %v2677 = vadd.f32 %v2676, %v2672
        %v2678 = vld [vmem:[%s11] sm:$0x1]
        %v2680 = vlaneseq
        %v2681 = vshrl.u32 %v2680, 7
        %v2682 = vsub.s32 0, %v2681
        %v2683 = vrot.slane %v2678, %v2682
        %v2685 = vadd.f32 %v2677, %v2683
        %v2686 = vadd.f32 %v571, %v2685
        %v2687 = vld [vmem:[%s12] sm:$0x1]
        %v2688 = vld [vmem:[%s13] sm:$0x1]
        %2689 = vadd.xlane.f32.xlu0 %v2686
        %v2690 = vpop.xlane.xlu0 %2689
        %v2691 = vmul.f32 %v2690, %v576
        %v2692 = vsub.f32 %v2686, %v2691
        %v2693 = vmul.f32 %v2692, %v2692
        %2694 = vadd.xlane.f32.xlu0 %v2693
        %v2695 = vpop.xlane.xlu0 %2694
        %v2696 = vmul.f32 %v2695, %v576
        %v2697 = vadd.f32 %v2696, 1e-05
        %v2698 = vrsqrt.pop %v2697
        %v2699 = vmul.f32 %v2692, %v2698
        %v2701 = vlaneseq
        %v2702 = vshrl.u32 %v2701, 7
        %v2703 = vsub.s32 0, %v2702
        %v2704 = vrot.slane %v2687, %v2703
        %v2706 = vmul.f32 %v2699, %v2704
        %v2708 = vlaneseq
        %v2709 = vshrl.u32 %v2708, 7
        %v2710 = vsub.s32 0, %v2709
        %v2711 = vrot.slane %v2688, %v2710
        %v2713 = vadd.f32 %v2706, %v2711
        %v2714 = vld [vmem:[%s14] sm:$0xff]
        %v2715 = vld [vmem:[%s14 + $0x8] sm:$0xff]
        %v2716 = vld [vmem:[%s14 + $0x10] sm:$0xff]
        %v2717 = vld [vmem:[%s14 + $0x18] sm:$0xff]
        %v2718 = vld [vmem:[%s14 + $0x20] sm:$0xff]
        %v2719 = vld [vmem:[%s14 + $0x28] sm:$0xff]
        %v2720 = vld [vmem:[%s14 + $0x30] sm:$0xff]
        %v2721 = vld [vmem:[%s14 + $0x38] sm:$0xff]
        %v2722 = vld [vmem:[%s14 + $0x40] sm:$0xff]
        %v2723 = vld [vmem:[%s14 + $0x48] sm:$0xff]
        %v2724 = vld [vmem:[%s14 + $0x50] sm:$0xff]
        %v2725 = vld [vmem:[%s14 + $0x58] sm:$0xff]
        %v2726 = vld [vmem:[%s14 + $0x60] sm:$0xff]
        %v2727 = vld [vmem:[%s14 + $0x68] sm:$0xff]
        %v2728 = vld [vmem:[%s14 + $0x70] sm:$0xff]
        %v2729 = vld [vmem:[%s14 + $0x78] sm:$0xff]
        %v2730 = vld [vmem:[%s14 + $0x80] sm:$0xff]
        %v2731 = vld [vmem:[%s14 + $0x88] sm:$0xff]
        %v2732 = vld [vmem:[%s14 + $0x90] sm:$0xff]
        %v2733 = vld [vmem:[%s14 + $0x98] sm:$0xff]
        %v2734 = vld [vmem:[%s14 + $0xa0] sm:$0xff]
        %v2735 = vld [vmem:[%s14 + $0xa8] sm:$0xff]
        %v2736 = vld [vmem:[%s14 + $0xb0] sm:$0xff]
        %v2737 = vld [vmem:[%s14 + $0xb8] sm:$0xff]
        %v2738 = vld [vmem:[%s14 + $0xc0] sm:$0xff]
        %v2739 = vld [vmem:[%s14 + $0xc8] sm:$0xff]
        %v2740 = vld [vmem:[%s14 + $0xd0] sm:$0xff]
        %v2741 = vld [vmem:[%s14 + $0xd8] sm:$0xff]
        %v2742 = vld [vmem:[%s14 + $0xe0] sm:$0xff]
        %v2743 = vld [vmem:[%s14 + $0xe8] sm:$0xff]
        %v2744 = vld [vmem:[%s14 + $0xf0] sm:$0xff]
        %v2745 = vld [vmem:[%s14 + $0xf8] sm:$0xff]
        %v2746 = vld [vmem:[%s14 + $0x100] sm:$0xff]
        %v2747 = vld [vmem:[%s14 + $0x108] sm:$0xff]
        %v2748 = vld [vmem:[%s14 + $0x110] sm:$0xff]
        %v2749 = vld [vmem:[%s14 + $0x118] sm:$0xff]
        %v2750 = vld [vmem:[%s14 + $0x120] sm:$0xff]
        %v2751 = vld [vmem:[%s14 + $0x128] sm:$0xff]
        %v2752 = vld [vmem:[%s14 + $0x130] sm:$0xff]
        %v2753 = vld [vmem:[%s14 + $0x138] sm:$0xff]
        %v2754 = vld [vmem:[%s14 + $0x140] sm:$0xff]
        %v2755 = vld [vmem:[%s14 + $0x148] sm:$0xff]
        %v2756 = vld [vmem:[%s14 + $0x150] sm:$0xff]
        %v2757 = vld [vmem:[%s14 + $0x158] sm:$0xff]
        %v2758 = vld [vmem:[%s14 + $0x160] sm:$0xff]
        %v2759 = vld [vmem:[%s14 + $0x168] sm:$0xff]
        %v2760 = vld [vmem:[%s14 + $0x170] sm:$0xff]
        %v2761 = vld [vmem:[%s14 + $0x178] sm:$0xff]
        %v2762 = vld [vmem:[%s14 + $0x180] sm:$0xff]
        %v2763 = vld [vmem:[%s14 + $0x188] sm:$0xff]
        %v2764 = vld [vmem:[%s14 + $0x190] sm:$0xff]
        %v2765 = vld [vmem:[%s14 + $0x198] sm:$0xff]
        %v2766 = vld [vmem:[%s14 + $0x1a0] sm:$0xff]
        %v2767 = vld [vmem:[%s14 + $0x1a8] sm:$0xff]
        %v2768 = vld [vmem:[%s14 + $0x1b0] sm:$0xff]
        %v2769 = vld [vmem:[%s14 + $0x1b8] sm:$0xff]
        %v2770 = vld [vmem:[%s14 + $0x1c0] sm:$0xff]
        %v2771 = vld [vmem:[%s14 + $0x1c8] sm:$0xff]
        %v2772 = vld [vmem:[%s14 + $0x1d0] sm:$0xff]
        %v2773 = vld [vmem:[%s14 + $0x1d8] sm:$0xff]
        %v2774 = vld [vmem:[%s14 + $0x1e0] sm:$0xff]
        %v2775 = vld [vmem:[%s14 + $0x1e8] sm:$0xff]
        %v2776 = vld [vmem:[%s14 + $0x1f0] sm:$0xff]
        %v2777 = vld [vmem:[%s14 + $0x1f8] sm:$0xff]
        %v2778 = vld [vmem:[%s15] sm:$0xf]
        %v2780 = vlaneseq
        %v2781 = vshrl.u32 %v2780, 7
        %v2782 = vsub.s32 0, %v2781
        %v2783 = vrot.slane %v2778, %v2782
        %v2784 = vlaneseq
        %v2785 = vshrl.u32 %v2784, 7
        %v2786 = vsub.s32 1, %v2785
        %v2787 = vrot.slane %v2778, %v2786
        %v2788 = vlaneseq
        %v2789 = vshrl.u32 %v2788, 7
        %v2790 = vsub.s32 2, %v2789
        %v2791 = vrot.slane %v2778, %v2790
        %v2792 = vlaneseq
        %v2793 = vshrl.u32 %v2792, 7
        %v2794 = vsub.s32 3, %v2793
        %v2795 = vrot.slane %v2778, %v2794
        %2800 = vmatprep.subr.mxu0 %v2715
        %2801 = vmatpush1.msra.mxu0 %v2714
        %2802 = vmatprep.subr.mxu0 %v2719
        %2803 = vmatpush1.msra.mxu0 %v2718
        %2804 = vmatprep.subr.mxu0 %v2723
        %2805 = vmatpush1.msra.mxu0 %v2722
        %2806 = vmatprep.subr.mxu0 %v2727
        %2807 = vmatpush1.msra.mxu0 %v2726
        %2808 = vmatprep.subr.mxu0 %v2731
        %2809 = vmatpush1.msra.mxu0 %v2730
        %2810 = vmatprep.subr.mxu0 %v2735
        %2811 = vmatpush1.msra.mxu0 %v2734
        %2812 = vmatprep.subr.mxu0 %v2739
        %2813 = vmatpush1.msra.mxu0 %v2738
        %2814 = vmatprep.subr.mxu0 %v2743
        %2815 = vmatpush1.msra.mxu0 %v2742
        %2816 = vmatprep.subr.mxu0 %v2747
        %2817 = vmatpush1.msra.mxu0 %v2746
        %2818 = vmatprep.subr.mxu0 %v2751
        %2819 = vmatpush1.msra.mxu0 %v2750
        %2820 = vmatprep.subr.mxu0 %v2755
        %2821 = vmatpush1.msra.mxu0 %v2754
        %2822 = vmatprep.subr.mxu0 %v2759
        %2823 = vmatpush1.msra.mxu0 %v2758
        %2824 = vmatprep.subr.mxu0 %v2763
        %2825 = vmatpush1.msra.mxu0 %v2762
        %2826 = vmatprep.subr.mxu0 %v2767
        %2827 = vmatpush1.msra.mxu0 %v2766
        %2828 = vmatprep.subr.mxu0 %v2771
        %2829 = vmatpush1.msra.mxu0 %v2770
        %2830 = vmatprep.subr.mxu0 %v2775
        %2831 = vmatpush1.msra.mxu0 %v2774
        %2832 = vmatprep.subr.mxu0 0.0
        %2833 = vmatpush1.msra.mxu0 0.0
        %2834 = vmatprep.subr.mxu0 0.0
        %2835 = vmatpush1.msra.mxu0 0.0
        %2836 = vmatprep.subr.mxu0 0.0
        %2837 = vmatpush1.msra.mxu0 0.0
        %2838 = vmatprep.subr.mxu0 0.0
        %2839 = vmatpush1.msra.mxu0 0.0
        %2840 = vmatprep.subr.mxu0 0.0
        %2841 = vmatpush1.msra.mxu0 0.0
        %2842 = vmatprep.subr.mxu0 0.0
        %2843 = vmatpush1.msra.mxu0 0.0
        %2844 = vmatprep.subr.mxu0 0.0
        %2845 = vmatpush1.msra.mxu0 0.0
        %2846 = vmatprep.subr.mxu0 0.0
        %2847 = vmatpush1.msra.mxu0 0.0
        %2848 = vmatprep.subr.mxu0 0.0
        %2849 = vmatpush1.msra.mxu0 0.0
        %2850 = vmatprep.subr.mxu0 0.0
        %2851 = vmatpush1.msra.mxu0 0.0
        %2852 = vmatprep.subr.mxu0 0.0
        %2853 = vmatpush1.msra.mxu0 0.0
        %2854 = vmatprep.subr.mxu0 0.0
        %2855 = vmatpush1.msra.mxu0 0.0
        %2856 = vmatprep.subr.mxu0 0.0
        %2857 = vmatpush1.msra.mxu0 0.0
        %2858 = vmatprep.subr.mxu0 0.0
        %2859 = vmatpush1.msra.mxu0 0.0
        %2860 = vmatprep.subr.mxu0 0.0
        %2861 = vmatpush1.msra.mxu0 0.0
        %2862 = vmatprep.subr.mxu0 0.0
        %2863 = vmatpush1.msra.mxu0 0.0
        %2864 = vmatprep.mubr.f32.mxu0 0.0
        %2865 = vmatmul.mubr.f32.gmra.mrb[0].mxu0 %v2713
        %v2866 = vpop.f32.mrb[0].mxu0
        %v2867 = vadd.f32 %v2783, %v2866
        %v2868 = vpop.f32.mrb[0].mxu0
        %v2869 = vadd.f32 %v2787, %v2868
        %2870 = vdwg.mxu0
        %2871 = vmatprep.subr.mxu0 %v2717
        %2872 = vmatpush1.msra.mxu0 %v2716
        %2873 = vmatprep.subr.mxu0 %v2721
        %2874 = vmatpush1.msra.mxu0 %v2720
        %2875 = vmatprep.subr.mxu0 %v2725
        %2876 = vmatpush1.msra.mxu0 %v2724
        %2877 = vmatprep.subr.mxu0 %v2729
        %2878 = vmatpush1.msra.mxu0 %v2728
        %2879 = vmatprep.subr.mxu0 %v2733
        %2880 = vmatpush1.msra.mxu0 %v2732
        %2881 = vmatprep.subr.mxu0 %v2737
        %2882 = vmatpush1.msra.mxu0 %v2736
        %2883 = vmatprep.subr.mxu0 %v2741
        %2884 = vmatpush1.msra.mxu0 %v2740
        %2885 = vmatprep.subr.mxu0 %v2745
        %2886 = vmatpush1.msra.mxu0 %v2744
        %2887 = vmatprep.subr.mxu0 %v2749
        %2888 = vmatpush1.msra.mxu0 %v2748
        %2889 = vmatprep.subr.mxu0 %v2753
        %2890 = vmatpush1.msra.mxu0 %v2752
        %2891 = vmatprep.subr.mxu0 %v2757
        %2892 = vmatpush1.msra.mxu0 %v2756
        %2893 = vmatprep.subr.mxu0 %v2761
        %2894 = vmatpush1.msra.mxu0 %v2760
        %2895 = vmatprep.subr.mxu0 %v2765
        %2896 = vmatpush1.msra.mxu0 %v2764
        %2897 = vmatprep.subr.mxu0 %v2769
        %2898 = vmatpush1.msra.mxu0 %v2768
        %2899 = vmatprep.subr.mxu0 %v2773
        %2900 = vmatpush1.msra.mxu0 %v2772
        %2901 = vmatprep.subr.mxu0 %v2777
        %2902 = vmatpush1.msra.mxu0 %v2776
        %2903 = vmatprep.subr.mxu0 0.0
        %2904 = vmatpush1.msra.mxu0 0.0
        %2905 = vmatprep.subr.mxu0 0.0
        %2906 = vmatpush1.msra.mxu0 0.0
        %2907 = vmatprep.subr.mxu0 0.0
        %2908 = vmatpush1.msra.mxu0 0.0
        %2909 = vmatprep.subr.mxu0 0.0
        %2910 = vmatpush1.msra.mxu0 0.0
        %2911 = vmatprep.subr.mxu0 0.0
        %2912 = vmatpush1.msra.mxu0 0.0
        %2913 = vmatprep.subr.mxu0 0.0
        %2914 = vmatpush1.msra.mxu0 0.0
        %2915 = vmatprep.subr.mxu0 0.0
        %2916 = vmatpush1.msra.mxu0 0.0
        %2917 = vmatprep.subr.mxu0 0.0
        %2918 = vmatpush1.msra.mxu0 0.0
        %2919 = vmatprep.subr.mxu0 0.0
        %2920 = vmatpush1.msra.mxu0 0.0
        %2921 = vmatprep.subr.mxu0 0.0
        %2922 = vmatpush1.msra.mxu0 0.0
        %2923 = vmatprep.subr.mxu0 0.0
        %2924 = vmatpush1.msra.mxu0 0.0
        %2925 = vmatprep.subr.mxu0 0.0
        %2926 = vmatpush1.msra.mxu0 0.0
        %2927 = vmatprep.subr.mxu0 0.0
        %2928 = vmatpush1.msra.mxu0 0.0
        %2929 = vmatprep.subr.mxu0 0.0
        %2930 = vmatpush1.msra.mxu0 0.0
        %2931 = vmatprep.subr.mxu0 0.0
        %2932 = vmatpush1.msra.mxu0 0.0
        %2933 = vmatprep.subr.mxu0 0.0
        %2934 = vmatpush1.msra.mxu0 0.0
        %2935 = vmatprep.mubr.f32.mxu0 0.0
        %2936 = vmatmul.mubr.f32.gmra.mrb[0].mxu0 %v2713
        %v2937 = vpop.f32.mrb[0].mxu0
        %v2938 = vadd.f32 %v2791, %v2937
        %v2939 = vpop.f32.mrb[0].mxu0
        %v2940 = vadd.f32 %v2795, %v2939
        %2941 = vdwg.mxu0
        %v2942 = vmul.f32 %v2867, 0.5
        %v2943 = vmul.f32 %v2869, 0.5
        %v2944 = vmul.f32 %v2938, 0.5
        %v2945 = vmul.f32 %v2940, 0.5
        %v2946 = vmul.f32 %v2867, 0.044715
        %v2947 = vmul.f32 %v2869, 0.044715
        %v2948 = vmul.f32 %v2938, 0.044715
        %v2949 = vmul.f32 %v2940, 0.044715
        %v2950 = vmul.f32 %v2946, %v2867
        %v2951 = vmul.f32 %v2947, %v2869
        %v2952 = vmul.f32 %v2948, %v2938
        %v2953 = vmul.f32 %v2949, %v2940
        %v2954 = vmul.f32 %v2950, %v2867
        %v2955 = vmul.f32 %v2951, %v2869
        %v2956 = vmul.f32 %v2952, %v2938
        %v2957 = vmul.f32 %v2953, %v2940
        %v2958 = vadd.f32 %v2867, %v2954
        %v2959 = vadd.f32 %v2869, %v2955
        %v2960 = vadd.f32 %v2938, %v2956
        %v2961 = vadd.f32 %v2940, %v2957
        %v2962 = vmul.f32 %v2958, 0.7978846
        %v2963 = vmul.f32 %v2959, 0.7978846
        %v2964 = vmul.f32 %v2960, 0.7978846
        %v2965 = vmul.f32 %v2961, 0.7978846
        %v2966 = vtanh.pop %v2962
        %v2967 = vtanh.pop %v2963
        %v2968 = vtanh.pop %v2964
        %v2969 = vtanh.pop %v2965
        %v2970 = vadd.f32 %v2966, 1.0
        %v2971 = vadd.f32 %v2967, 1.0
        %v2972 = vadd.f32 %v2968, 1.0
        %v2973 = vadd.f32 %v2969, 1.0
        %v2974 = vmul.f32 %v2942, %v2970
        %v2975 = vmul.f32 %v2943, %v2971
        %v2976 = vmul.f32 %v2944, %v2972
        %v2977 = vmul.f32 %v2945, %v2973
        %v2978 = vld [vmem:[%s16] sm:$0xff]
        %v2979 = vld [vmem:[%s16 + $0x8] sm:$0xff]
        %v2980 = vld [vmem:[%s16 + $0x10] sm:$0xff]
        %v2981 = vld [vmem:[%s16 + $0x18] sm:$0xff]
        %v2982 = vld [vmem:[%s16 + $0x20] sm:$0xff]
        %v2983 = vld [vmem:[%s16 + $0x28] sm:$0xff]
        %v2984 = vld [vmem:[%s16 + $0x30] sm:$0xff]
        %v2985 = vld [vmem:[%s16 + $0x38] sm:$0xff]
        %v2986 = vld [vmem:[%s16 + $0x40] sm:$0xff]
        %v2987 = vld [vmem:[%s16 + $0x48] sm:$0xff]
        %v2988 = vld [vmem:[%s16 + $0x50] sm:$0xff]
        %v2989 = vld [vmem:[%s16 + $0x58] sm:$0xff]
        %v2990 = vld [vmem:[%s16 + $0x60] sm:$0xff]
        %v2991 = vld [vmem:[%s16 + $0x68] sm:$0xff]
        %v2992 = vld [vmem:[%s16 + $0x70] sm:$0xff]
        %v2993 = vld [vmem:[%s16 + $0x78] sm:$0xff]
        %v2994 = vld [vmem:[%s16 + $0x80] sm:$0xff]
        %v2995 = vld [vmem:[%s16 + $0x88] sm:$0xff]
        %v2996 = vld [vmem:[%s16 + $0x90] sm:$0xff]
        %v2997 = vld [vmem:[%s16 + $0x98] sm:$0xff]
        %v2998 = vld [vmem:[%s16 + $0xa0] sm:$0xff]
        %v2999 = vld [vmem:[%s16 + $0xa8] sm:$0xff]
        %v3000 = vld [vmem:[%s16 + $0xb0] sm:$0xff]
        %v3001 = vld [vmem:[%s16 + $0xb8] sm:$0xff]
        %v3002 = vld [vmem:[%s16 + $0xc0] sm:$0xff]
        %v3003 = vld [vmem:[%s16 + $0xc8] sm:$0xff]
        %v3004 = vld [vmem:[%s16 + $0xd0] sm:$0xff]
        %v3005 = vld [vmem:[%s16 + $0xd8] sm:$0xff]
        %v3006 = vld [vmem:[%s16 + $0xe0] sm:$0xff]
        %v3007 = vld [vmem:[%s16 + $0xe8] sm:$0xff]
        %v3008 = vld [vmem:[%s16 + $0xf0] sm:$0xff]
        %v3009 = vld [vmem:[%s16 + $0xf8] sm:$0xff]
        %v3010 = vld [vmem:[%s16 + $0x100] sm:$0xff]
        %v3011 = vld [vmem:[%s16 + $0x108] sm:$0xff]
        %v3012 = vld [vmem:[%s16 + $0x110] sm:$0xff]
        %v3013 = vld [vmem:[%s16 + $0x118] sm:$0xff]
        %v3014 = vld [vmem:[%s16 + $0x120] sm:$0xff]
        %v3015 = vld [vmem:[%s16 + $0x128] sm:$0xff]
        %v3016 = vld [vmem:[%s16 + $0x130] sm:$0xff]
        %v3017 = vld [vmem:[%s16 + $0x138] sm:$0xff]
        %v3018 = vld [vmem:[%s16 + $0x140] sm:$0xff]
        %v3019 = vld [vmem:[%s16 + $0x148] sm:$0xff]
        %v3020 = vld [vmem:[%s16 + $0x150] sm:$0xff]
        %v3021 = vld [vmem:[%s16 + $0x158] sm:$0xff]
        %v3022 = vld [vmem:[%s16 + $0x160] sm:$0xff]
        %v3023 = vld [vmem:[%s16 + $0x168] sm:$0xff]
        %v3024 = vld [vmem:[%s16 + $0x170] sm:$0xff]
        %v3025 = vld [vmem:[%s16 + $0x178] sm:$0xff]
        %v3026 = vld [vmem:[%s16 + $0x180] sm:$0xff]
        %v3027 = vld [vmem:[%s16 + $0x188] sm:$0xff]
        %v3028 = vld [vmem:[%s16 + $0x190] sm:$0xff]
        %v3029 = vld [vmem:[%s16 + $0x198] sm:$0xff]
        %v3030 = vld [vmem:[%s16 + $0x1a0] sm:$0xff]
        %v3031 = vld [vmem:[%s16 + $0x1a8] sm:$0xff]
        %v3032 = vld [vmem:[%s16 + $0x1b0] sm:$0xff]
        %v3033 = vld [vmem:[%s16 + $0x1b8] sm:$0xff]
        %v3034 = vld [vmem:[%s16 + $0x1c0] sm:$0xff]
        %v3035 = vld [vmem:[%s16 + $0x1c8] sm:$0xff]
        %v3036 = vld [vmem:[%s16 + $0x1d0] sm:$0xff]
        %v3037 = vld [vmem:[%s16 + $0x1d8] sm:$0xff]
        %v3038 = vld [vmem:[%s16 + $0x1e0] sm:$0xff]
        %v3039 = vld [vmem:[%s16 + $0x1e8] sm:$0xff]
        %v3040 = vld [vmem:[%s16 + $0x1f0] sm:$0xff]
        %v3041 = vld [vmem:[%s16 + $0x1f8] sm:$0xff]
        %v3042 = vld [vmem:[%s17] sm:$0x1]
        %v3044 = vlaneseq
        %v3045 = vshrl.u32 %v3044, 7
        %v3046 = vsub.s32 0, %v3045
        %v3047 = vrot.slane %v3042, %v3046
        %3049 = vmatprep.subr.mxu0 0.0
        %3050 = vmatpush1.msra.mxu0 %v2978
        %3051 = vmatprep.subr.mxu0 0.0
        %3052 = vmatpush1.msra.mxu0 %v2979
        %3053 = vmatprep.subr.mxu0 0.0
        %3054 = vmatpush1.msra.mxu0 %v2980
        %3055 = vmatprep.subr.mxu0 0.0
        %3056 = vmatpush1.msra.mxu0 %v2981
        %3057 = vmatprep.subr.mxu0 0.0
        %3058 = vmatpush1.msra.mxu0 %v2982
        %3059 = vmatprep.subr.mxu0 0.0
        %3060 = vmatpush1.msra.mxu0 %v2983
        %3061 = vmatprep.subr.mxu0 0.0
        %3062 = vmatpush1.msra.mxu0 %v2984
        %3063 = vmatprep.subr.mxu0 0.0
        %3064 = vmatpush1.msra.mxu0 %v2985
        %3065 = vmatprep.subr.mxu0 0.0
        %3066 = vmatpush1.msra.mxu0 %v2986
        %3067 = vmatprep.subr.mxu0 0.0
        %3068 = vmatpush1.msra.mxu0 %v2987
        %3069 = vmatprep.subr.mxu0 0.0
        %3070 = vmatpush1.msra.mxu0 %v2988
        %3071 = vmatprep.subr.mxu0 0.0
        %3072 = vmatpush1.msra.mxu0 %v2989
        %3073 = vmatprep.subr.mxu0 0.0
        %3074 = vmatpush1.msra.mxu0 %v2990
        %3075 = vmatprep.subr.mxu0 0.0
        %3076 = vmatpush1.msra.mxu0 %v2991
        %3077 = vmatprep.subr.mxu0 0.0
        %3078 = vmatpush1.msra.mxu0 %v2992
        %3079 = vmatprep.subr.mxu0 0.0
        %3080 = vmatpush1.msra.mxu0 %v2993
        %3081 = vmatprep.subr.mxu0 0.0
        %3082 = vmatpush1.msra.mxu0 %v2994
        %3083 = vmatprep.subr.mxu0 0.0
        %3084 = vmatpush1.msra.mxu0 %v2995
        %3085 = vmatprep.subr.mxu0 0.0
        %3086 = vmatpush1.msra.mxu0 %v2996
        %3087 = vmatprep.subr.mxu0 0.0
        %3088 = vmatpush1.msra.mxu0 %v2997
        %3089 = vmatprep.subr.mxu0 0.0
        %3090 = vmatpush1.msra.mxu0 %v2998
        %3091 = vmatprep.subr.mxu0 0.0
        %3092 = vmatpush1.msra.mxu0 %v2999
        %3093 = vmatprep.subr.mxu0 0.0
        %3094 = vmatpush1.msra.mxu0 %v3000
        %3095 = vmatprep.subr.mxu0 0.0
        %3096 = vmatpush1.msra.mxu0 %v3001
        %3097 = vmatprep.subr.mxu0 0.0
        %3098 = vmatpush1.msra.mxu0 %v3002
        %3099 = vmatprep.subr.mxu0 0.0
        %3100 = vmatpush1.msra.mxu0 %v3003
        %3101 = vmatprep.subr.mxu0 0.0
        %3102 = vmatpush1.msra.mxu0 %v3004
        %3103 = vmatprep.subr.mxu0 0.0
        %3104 = vmatpush1.msra.mxu0 %v3005
        %3105 = vmatprep.subr.mxu0 0.0
        %3106 = vmatpush1.msra.mxu0 %v3006
        %3107 = vmatprep.subr.mxu0 0.0
        %3108 = vmatpush1.msra.mxu0 %v3007
        %3109 = vmatprep.subr.mxu0 0.0
        %3110 = vmatpush1.msra.mxu0 %v3008
        %3111 = vmatprep.subr.mxu0 0.0
        %3112 = vmatpush1.msra.mxu0 %v3009
        %3113 = vmatprep.mubr.f32.mxu0 %v2975
        %3114 = vmatmul.mubr.f32.gmra.mrb[0].mxu0 %v2974
        %v3115 = vpop.f32.mrb[0].mxu0
        %v3116 = vadd.f32 %v3047, %v3115
        %v3117 = vpop.f32.mrb[0].mxu0
        %3118 = vdwg.mxu0
        %3119 = vmatprep.subr.mxu0 0.0
        %3120 = vmatpush1.msra.mxu0 %v3010
        %3121 = vmatprep.subr.mxu0 0.0
        %3122 = vmatpush1.msra.mxu0 %v3011
        %3123 = vmatprep.subr.mxu0 0.0
        %3124 = vmatpush1.msra.mxu0 %v3012
        %3125 = vmatprep.subr.mxu0 0.0
        %3126 = vmatpush1.msra.mxu0 %v3013
        %3127 = vmatprep.subr.mxu0 0.0
        %3128 = vmatpush1.msra.mxu0 %v3014
        %3129 = vmatprep.subr.mxu0 0.0
        %3130 = vmatpush1.msra.mxu0 %v3015
        %3131 = vmatprep.subr.mxu0 0.0
        %3132 = vmatpush1.msra.mxu0 %v3016
        %3133 = vmatprep.subr.mxu0 0.0
        %3134 = vmatpush1.msra.mxu0 %v3017
        %3135 = vmatprep.subr.mxu0 0.0
        %3136 = vmatpush1.msra.mxu0 %v3018
        %3137 = vmatprep.subr.mxu0 0.0
        %3138 = vmatpush1.msra.mxu0 %v3019
        %3139 = vmatprep.subr.mxu0 0.0
        %3140 = vmatpush1.msra.mxu0 %v3020
        %3141 = vmatprep.subr.mxu0 0.0
        %3142 = vmatpush1.msra.mxu0 %v3021
        %3143 = vmatprep.subr.mxu0 0.0
        %3144 = vmatpush1.msra.mxu0 %v3022
        %3145 = vmatprep.subr.mxu0 0.0
        %3146 = vmatpush1.msra.mxu0 %v3023
        %3147 = vmatprep.subr.mxu0 0.0
        %3148 = vmatpush1.msra.mxu0 %v3024
        %3149 = vmatprep.subr.mxu0 0.0
        %3150 = vmatpush1.msra.mxu0 %v3025
        %3151 = vmatprep.subr.mxu0 0.0
        %3152 = vmatpush1.msra.mxu0 %v3026
        %3153 = vmatprep.subr.mxu0 0.0
        %3154 = vmatpush1.msra.mxu0 %v3027
        %3155 = vmatprep.subr.mxu0 0.0
        %3156 = vmatpush1.msra.mxu0 %v3028
        %3157 = vmatprep.subr.mxu0 0.0
        %3158 = vmatpush1.msra.mxu0 %v3029
        %3159 = vmatprep.subr.mxu0 0.0
        %3160 = vmatpush1.msra.mxu0 %v3030
        %3161 = vmatprep.subr.mxu0 0.0
        %3162 = vmatpush1.msra.mxu0 %v3031
        %3163 = vmatprep.subr.mxu0 0.0
        %3164 = vmatpush1.msra.mxu0 %v3032
        %3165 = vmatprep.subr.mxu0 0.0
        %3166 = vmatpush1.msra.mxu0 %v3033
        %3167 = vmatprep.subr.mxu0 0.0
        %3168 = vmatpush1.msra.mxu0 %v3034
        %3169 = vmatprep.subr.mxu0 0.0
        %3170 = vmatpush1.msra.mxu0 %v3035
        %3171 = vmatprep.subr.mxu0 0.0
        %3172 = vmatpush1.msra.mxu0 %v3036
        %3173 = vmatprep.subr.mxu0 0.0
        %3174 = vmatpush1.msra.mxu0 %v3037
        %3175 = vmatprep.subr.mxu0 0.0
        %3176 = vmatpush1.msra.mxu0 %v3038
        %3177 = vmatprep.subr.mxu0 0.0
        %3178 = vmatpush1.msra.mxu0 %v3039
        %3179 = vmatprep.subr.mxu0 0.0
        %3180 = vmatpush1.msra.mxu0 %v3040
        %3181 = vmatprep.subr.mxu0 0.0
        %3182 = vmatpush1.msra.mxu0 %v3041
        %3183 = vmatprep.mubr.f32.mxu0 %v2977
        %3184 = vmatmul.mubr.f32.gmra.mrb[0].mxu0 %v2976
        %v3185 = vpop.f32.mrb[0].mxu0
        %v3186 = vadd.f32 %v3116, %v3185
        %v3187 = vpop.f32.mrb[0].mxu0
        %3188 = vdwg.mxu0
        %v3189 = vadd.f32 %v2686, %v3186
        %3190 = vst [vmem:[%s566] sm:$0xff] %v3189
        %s3191 = sand.u32 %s423, 1
        %s3192 = scalar_lea.sflag [#allocation3], %s3191
        %s3193 = sand.u32 %s423, 1
        %s3194 = smul.addr %s3193, 8
        %s3195 = scalar_lea.vmem [#allocation2], %s3194
        // Predicated region
        $region93: #{tpu_custom_call.1} parent=91 // pred_check
          %p3196 = pneg %p433
        $region94: #{tpu_custom_call.1} parent=91 // pred_check_branch
          %3198 = sbr.rel (%p3196) target = $region96
        $region95: #{tpu_custom_call.1} parent=91 // pred_region
          %s3200 = ssub.s32 128, 128
          %3201 = vsyncadd %s3192, %s3200
          %s3202 = smul.addr %s32, 128
          %s3203 = scalar_lea.hbm %s18, %s3202
          %s3205 = sshll.u32 %s3195, 4
          %s3206 = int_to_ptr.vmem [resolvable:$true] %s3205
          %3208 = dma.vmem_to_hbm [thread:$0]  %s3206, 128, %s3203, %s3192
        $region96: #{tpu_custom_call.1} parent=91 // pred_fallthru
          _
      $region92: #{tpu_custom_call.1} parent=5 // pred_fallthru
        _
      %p3209 = scmp.le.s32.totalorder 2, %s27
      // Predicated region
      $region97: #{tpu_custom_call.1} parent=5 // pred_check
        %p3210 = pneg %p3209
      $region98: #{tpu_custom_call.1} parent=5 // pred_check_branch
        %3212 = sbr.rel (%p3210) target = $region100
      $region99: #{tpu_custom_call.1} parent=5 // pred_region
        %s3213 = ssub.s32 %s27, 2
        // Predicated region
        $region101: #{tpu_custom_call.1} parent=99 // pred_check
          %p3214 = pneg %p439
        $region102: #{tpu_custom_call.1} parent=99 // pred_check_branch
          %3216 = sbr.rel (%p3214) target = $region104
        $region103: #{tpu_custom_call.1} parent=99 // pred_region
          %s3217 = sand.u32 %s424, 1
          %s3218 = scalar_lea.sflag [#allocation3], %s3217
          %s3219 = sand.u32 %s424, 1
          %s3220 = smul.addr %s3219, 8
          %s3221 = scalar_lea.vmem [#allocation2], %s3220
          %3222 = dma.done %s3218, 128
        $region104: #{tpu_custom_call.1} parent=99 // pred_fallthru
          _
      $region100: #{tpu_custom_call.1} parent=5 // pred_fallthru
        _
    $region6: #{tpu_custom_call.1} parent=1 // loop_footer
      %s31 = sadd.s32 1, %s27
    $region7: #{tpu_custom_call.1} parent=1 // loop_footer_branch
      %26 = sbr.rel target = $region3
    $region8: #{tpu_custom_call.1} parent=1 // loop_exit
      _
    %3223 = vsyncpa [#allocation3], 1
    %s3224 = scalar_lea.sflag [#allocation3], 1
    %3225 = vsyncpa %s3224, 1

</llo_original>
